<compile_context>
chip_gen: v6e
topology: v6e:2x2x1
jax: 0.10.0
libtpu: 0.0.40
codegen_flags: <defaults>
</compile_context>

<pallas_src>
import functools

import jax
import jax.numpy as jnp
from jax import lax
from jax.experimental import pallas as pl
from jax.experimental.pallas import tpu as pltpu

EPS = 1e-5  # nn.BatchNorm3d default


# ----------------------------------------------------------------------------
# In-kernel helpers (folded (R, W*C) layout, lane index = w*C + c).
# These operate on (1, W*C) vectors only — negligible cost at these sizes;
# only relevant to revisit if the W-folding were retained at scale.
# ----------------------------------------------------------------------------
def _fold_w_sum(row, W, C):
    # (1, W*C) -> (1, C): sum the W lane-groups.
    acc = row[:, 0:C]
    for w in range(1, W):
        acc = acc + row[:, w * C:(w + 1) * C]
    return acc


def _tile_w(v, W):
    # (1, C) -> (1, W*C), lane i maps to channel i % C.
    return jnp.concatenate([v] * W, axis=1)


def _bn_act(yf, gamma, beta, *, W, C, M, eps, residual=None):
    """Training-mode BatchNorm (batch stats, biased var) [+ residual] + ReLU.

    All statistics and the affine apply are f32 (v5e has no bf16 VPU/EUP)."""
    lane_sum = jnp.sum(yf, axis=0, keepdims=True)            # (1, W*C)
    mean_c = _fold_w_sum(lane_sum, W, C) / M                 # (1, C)
    mean_f = _tile_w(mean_c, W)                              # (1, W*C)
    d = yf - mean_f
    lane_ss = jnp.sum(d * d, axis=0, keepdims=True)          # (1, W*C)
    var_c = _fold_w_sum(lane_ss, W, C) / M                   # (1, C), biased
    scale_c = gamma * lax.rsqrt(var_c + eps)                 # (1, C)
    shift_c = beta - mean_c * scale_c                        # (1, C)
    out = yf * _tile_w(scale_c, W) + _tile_w(shift_c, W)
    if residual is not None:
        out = out + residual
    return jnp.maximum(out, 0.0)


# ----------------------------------------------------------------------------
# Fused bottleneck kernel (single invocation, everything VMEM-resident)
# ----------------------------------------------------------------------------
def _bottleneck_kernel(x_ref, w1_ref, w2_ref, w3_ref,
                       g1_ref, b1_ref, g2_ref, b2_ref, g3_ref, b3_ref,
                       o_ref, pad_ref,
                       *, N, D, H, W, P, C, eps):
    R = N * D * H
    M = R * W
    WP = W * P

    # ---- conv1 (1x1x1) as block-diagonal matmul, bf16 MXU / f32 acc ----
    x_bf = x_ref[...].astype(jnp.bfloat16)                   # (R, W*C)
    y1 = jnp.dot(x_bf, w1_ref[...], preferred_element_type=jnp.float32)
    h1 = _bn_act(y1, g1_ref[...], b1_ref[...], W=W, C=P, M=M, eps=eps)

    # ---- conv2 (3x3x3, stride 1, pad 1) ----
    # Zero only the D/H halo slabs (the w halo / kw taps are folded into the
    # banded weight built on the host), store the interior, then accumulate
    # 9 tap matmuls read directly from the padded scratch — no im2col buffer.
    dz = jnp.zeros((N, 1, H + 2, WP), jnp.float32)
    pad_ref[:, pl.ds(0, 1), :, :] = dz
    pad_ref[:, pl.ds(D + 1, 1), :, :] = dz
    hz = jnp.zeros((N, D + 2, 1, WP), jnp.float32)
    pad_ref[:, :, pl.ds(0, 1), :] = hz
    pad_ref[:, :, pl.ds(H + 1, 1), :] = hz
    pad_ref[:, pl.ds(1, D), pl.ds(1, H), :] = h1.reshape(N, D, H, WP)

    y2 = jnp.zeros((R, WP), jnp.float32)
    for t in range(9):
        kd, kh = divmod(t, 3)
        patch = pad_ref[:, pl.ds(kd, D), pl.ds(kh, H), :].reshape(R, WP)
        y2 = y2 + jnp.dot(patch.astype(jnp.bfloat16),
                          w2_ref[pl.ds(t * WP, WP), :],
                          preferred_element_type=jnp.float32)
    h2 = _bn_act(y2, g2_ref[...], b2_ref[...], W=W, C=P, M=M, eps=eps)

    # ---- conv3 (1x1x1, expansion) + bn3 + residual add + relu ----
    y3 = jnp.dot(h2.astype(jnp.bfloat16), w3_ref[...],
                 preferred_element_type=jnp.float32)         # (R, W*C)
    # residual re-read at point of use (x_ref already sits in VMEM).
    o_ref[...] = _bn_act(y3, g3_ref[...], b3_ref[...], W=W, C=C, M=M,
                         eps=eps, residual=x_ref[...])


# ----------------------------------------------------------------------------
# Host-side weight folding (done ONCE, outside the per-call jitted path)
# ----------------------------------------------------------------------------
def _fold_conv2_weight(w2, W):
    """(3,3,3,Ci,Co) -> (9*W*Ci, W*Co).

    kw taps become a block-banded matrix over the folded W axis (which also
    realizes the zero padding along w), so each (kd,kh) tap is one matmul."""
    Kd, Kh, Kw, Ci, Co = w2.shape
    wi = jnp.arange(W)[:, None, None]                 # input w position
    wo = jnp.arange(W)[None, :, None]                 # output w position
    kw = jnp.arange(Kw)[None, None, :]
    band = (wi == wo + kw - (Kw // 2)).astype(w2.dtype)       # (W, W, Kw)
    b = jnp.einsum("pwk,dhkio->dhpiwo", band, w2)             # (Kd,Kh,W,Ci,W,Co)
    return b.reshape(Kd * Kh * W * Ci, W * Co)


def fold_params(params, W):
    """Pre-fold weights to bf16 once per model (not per forward call)."""
    eye_w = jnp.eye(W, dtype=jnp.float32)
    return dict(
        w1f=jnp.kron(eye_w, params["w1"]).astype(jnp.bfloat16),   # (W*C, W*P)
        w2f=_fold_conv2_weight(params["w2"], W).astype(jnp.bfloat16),  # (9*W*P, W*P)
        w3f=jnp.kron(eye_w, params["w3"]).astype(jnp.bfloat16),   # (W*P, W*C)
        g1=params["g1"], b1=params["b1"],
        g2=params["g2"], b2=params["b2"],
        g3=params["g3"], b3=params["b3"],
    )


@jax.jit
def bottleneck_forward(x, folded):
    """x: (N, D, H, W, Cin) float32, Cin == planes*4 (downsample=None, stride=1)."""
    N, D, H, W, C = x.shape
    P = folded["w1f"].shape[1] // W
    R = N * D * H

    xf = x.reshape(R, W * C)                                   # lane-dense (256 lanes)
    kernel = functools.partial(_bottleneck_kernel,
                               N=N, D=D, H=H, W=W, P=P, C=C, eps=EPS)
    out = pl.pallas_call(
        kernel,
        out_shape=jax.ShapeDtypeStruct((R, W * C), jnp.float32),
        scratch_shapes=[
            pltpu.VMEM((N, D + 2, H + 2, W * P), jnp.float32),  # D/H-padded h1
        ],
        compiler_params=pltpu.CompilerParams(
            vmem_limit_bytes=32 * 1024 * 1024),
    )(xf, folded["w1f"], folded["w2f"], folded["w3f"],
      folded["g1"], folded["b1"], folded["g2"], folded["b2"],
      folded["g3"], folded["b3"])
    return out.reshape(N, D, H, W, C)


# ----------------------------------------------------------------------------
# Pure-JAX reference (mirrors the bf16 MXU input quantization, f32 accumulate
# and f32 BatchNorm — i.e. the same precision policy the kernel uses).
# ----------------------------------------------------------------------------
def bottleneck_reference(x, params, eps=EPS):
    bf = jnp.bfloat16

    def bn(y, g, b):
        mean = jnp.mean(y, axis=(0, 1, 2, 3), keepdims=True)
        var = jnp.var(y, axis=(0, 1, 2, 3), keepdims=True)  # biased
        return (y - mean) / jnp.sqrt(var + eps) * g.reshape(1, 1, 1, 1, -1) \
               + b.reshape(1, 1, 1, 1, -1)

    y1 = jnp.einsum("ndhwc,co->ndhwo", x.astype(bf), params["w1"].astype(bf),
                    preferred_element_type=jnp.float32)
    h1 = jax.nn.relu(bn(y1, params["g1"], params["b1"]))
    y2 = lax.conv_general_dilated(
        h1.astype(bf), params["w2"].astype(bf), window_strides=(1, 1, 1),
        padding=((1, 1), (1, 1), (1, 1)),
        dimension_numbers=("NDHWC", "DHWIO", "NDHWC"),
        preferred_element_type=jnp.float32)
    h2 = jax.nn.relu(bn(y2, params["g2"], params["b2"]))
    y3 = jnp.einsum("ndhwc,co->ndhwo", h2.astype(bf), params["w3"].astype(bf),
                    preferred_element_type=jnp.float32)
    return jax.nn.relu(bn(y3, params["g3"], params["b3"]) + x)


# ----------------------------------------------------------------------------
# Main
# ----------------------------------------------------------------------------
if __name__ == "__main__":
    N, D, H, W = 2, 8, 8, 8
    planes = 8
    expansion = 4
    in_planes = planes * expansion  # 32: residual add valid (downsample=None)

    key = jax.random.PRNGKey(0)
    keys = jax.random.split(key, 10)

    params = {
        # conv1x1x1: (Cin, planes)
        "w1": 0.1 * jax.random.normal(keys[0], (in_planes, planes), jnp.float32),
        # conv3x3x3: (kD, kH, kW, Cin, Cout)
        "w2": 0.1 * jax.random.normal(keys[1], (3, 3, 3, planes, planes), jnp.float32),
        # conv1x1x1: (planes, planes * expansion)
        "w3": 0.1 * jax.random.normal(keys[2], (planes, in_planes), jnp.float32),
        # BN affine params (gamma, beta), shaped (1, C)
        "g1": 1.0 + 0.1 * jax.random.normal(keys[3], (1, planes), jnp.float32),
        "b1": 0.1 * jax.random.normal(keys[4], (1, planes), jnp.float32),
        "g2": 1.0 + 0.1 * jax.random.normal(keys[5], (1, planes), jnp.float32),
        "b2": 0.1 * jax.random.normal(keys[6], (1, planes), jnp.float32),
        "g3": 1.0 + 0.1 * jax.random.normal(keys[7], (1, in_planes), jnp.float32),
        "b3": 0.1 * jax.random.normal(keys[8], (1, in_planes), jnp.float32),
    }

    # layout: NDHWC (equivalent to PyTorch NCDHW [N, 32, 8, 8, 8] transposed)
    x = jax.random.normal(keys[9], (N, D, H, W, in_planes), jnp.float32)

    folded = fold_params(params, W)   # one-time weight folding, outside jit path

    out = jax.block_until_ready(bottleneck_forward(x, folded))
    ref = jax.block_until_ready(bottleneck_reference(x, params))

    assert out.shape == ref.shape and out.dtype == ref.dtype
    # Tolerance accounts for bf16 MXU input quantization + f32 summation-order
    # differences between the folded tap-matmul path and the XLA conv path.
    assert jnp.allclose(out, ref, atol=5e-3, rtol=5e-3), \
        f"max abs err {jnp.max(jnp.abs(out - ref))}"

    print("KERNEL_OK")
</pallas_src>

<mosaic_0001>
module attributes {stable_mosaic.version = 11 : i64} {
  func.func @_bottleneck_kernel(%arg0: memref<128x256xf32, #tpu.memory_space<vmem>>, %arg1: memref<256x64xbf16, #tpu.memory_space<vmem>>, %arg2: memref<576x64xbf16, #tpu.memory_space<vmem>>, %arg3: memref<64x256xbf16, #tpu.memory_space<vmem>>, %arg4: memref<1x8xf32, #tpu.memory_space<vmem>>, %arg5: memref<1x8xf32, #tpu.memory_space<vmem>>, %arg6: memref<1x8xf32, #tpu.memory_space<vmem>>, %arg7: memref<1x8xf32, #tpu.memory_space<vmem>>, %arg8: memref<1x32xf32, #tpu.memory_space<vmem>>, %arg9: memref<1x32xf32, #tpu.memory_space<vmem>>, %arg10: memref<128x256xf32, #tpu.memory_space<vmem>>, %arg11: memref<2x10x10x64xf32, #tpu.memory_space<vmem>>) attributes {dimension_semantics = [], scalar_prefetch = 0 : i64, scratch_operands = 1 : i64, tpu.core_type = #tpu.core_type<tc>} {
    %c0 = arith.constant 0 : index
    %c0_0 = arith.constant 0 : index
    %0 = vector.load %arg0[%c0, %c0_0] : memref<128x256xf32, #tpu.memory_space<vmem>>, vector<128x256xf32>
    %1 = arith.truncf %0 : vector<128x256xf32> to vector<128x256xbf16>
    %c0_1 = arith.constant 0 : index
    %c0_2 = arith.constant 0 : index
    %2 = vector.load %arg1[%c0_1, %c0_2] : memref<256x64xbf16, #tpu.memory_space<vmem>>, vector<256x64xbf16>
    %cst = arith.constant dense<0.000000e+00> : vector<128x64xf32>
    %3 = tpu.matmul %1, %2, %cst {dimension_numbers = #tpu.dot_dimension_numbers<[1], [0], [0], [1], [0, 0, 1, 1], [], []>} : vector<128x256xbf16>, vector<256x64xbf16>, vector<128x64xf32> -> vector<128x64xf32>
    %c0_3 = arith.constant 0 : index
    %c0_4 = arith.constant 0 : index
    %4 = vector.load %arg4[%c0_3, %c0_4] : memref<1x8xf32, #tpu.memory_space<vmem>>, vector<1x8xf32>
    %c0_5 = arith.constant 0 : index
    %c0_6 = arith.constant 0 : index
    %5 = vector.load %arg5[%c0_5, %c0_6] : memref<1x8xf32, #tpu.memory_space<vmem>>, vector<1x8xf32>
    %cst_7 = arith.constant dense<0.000000e+00> : vector<64xf32>
    %6 = vector.multi_reduction <add>, %3, %cst_7 [0] : vector<128x64xf32> to vector<64xf32>
    %7 = vector.shape_cast %6 : vector<64xf32> to vector<1x64xf32>
    %8 = vector.extract_strided_slice %7 {offsets = [0, 0], sizes = [1, 8], strides = [1, 1]} : vector<1x64xf32> to vector<1x8xf32>
    %9 = vector.extract_strided_slice %7 {offsets = [0, 8], sizes = [1, 8], strides = [1, 1]} : vector<1x64xf32> to vector<1x8xf32>
    %10 = arith.addf %8, %9 : vector<1x8xf32>
    %11 = vector.extract_strided_slice %7 {offsets = [0, 16], sizes = [1, 8], strides = [1, 1]} : vector<1x64xf32> to vector<1x8xf32>
    %12 = arith.addf %10, %11 : vector<1x8xf32>
    %13 = vector.extract_strided_slice %7 {offsets = [0, 24], sizes = [1, 8], strides = [1, 1]} : vector<1x64xf32> to vector<1x8xf32>
    %14 = arith.addf %12, %13 : vector<1x8xf32>
    %15 = vector.extract_strided_slice %7 {offsets = [0, 32], sizes = [1, 8], strides = [1, 1]} : vector<1x64xf32> to vector<1x8xf32>
    %16 = arith.addf %14, %15 : vector<1x8xf32>
    %17 = vector.extract_strided_slice %7 {offsets = [0, 40], sizes = [1, 8], strides = [1, 1]} : vector<1x64xf32> to vector<1x8xf32>
    %18 = arith.addf %16, %17 : vector<1x8xf32>
    %19 = vector.extract_strided_slice %7 {offsets = [0, 48], sizes = [1, 8], strides = [1, 1]} : vector<1x64xf32> to vector<1x8xf32>
    %20 = arith.addf %18, %19 : vector<1x8xf32>
    %21 = vector.extract_strided_slice %7 {offsets = [0, 56], sizes = [1, 8], strides = [1, 1]} : vector<1x64xf32> to vector<1x8xf32>
    %22 = arith.addf %20, %21 : vector<1x8xf32>
    %cst_8 = arith.constant 1.024000e+03 : f32
    %23 = vector.broadcast %cst_8 : f32 to vector<1x8xf32>
    %24 = arith.divf %22, %23 : vector<1x8xf32>
    %25 = tpu.concatenate %24, %24, %24, %24, %24, %24, %24, %24 in 1 : vector<1x8xf32>, vector<1x8xf32>, vector<1x8xf32>, vector<1x8xf32>, vector<1x8xf32>, vector<1x8xf32>, vector<1x8xf32>, vector<1x8xf32> -> vector<1x64xf32>
    %26 = vector.broadcast %25 : vector<1x64xf32> to vector<128x64xf32>
    %27 = arith.subf %3, %26 : vector<128x64xf32>
    %28 = arith.mulf %27, %27 : vector<128x64xf32>
    %cst_9 = arith.constant dense<0.000000e+00> : vector<64xf32>
    %29 = vector.multi_reduction <add>, %28, %cst_9 [0] : vector<128x64xf32> to vector<64xf32>
    %30 = vector.shape_cast %29 : vector<64xf32> to vector<1x64xf32>
    %31 = vector.extract_strided_slice %30 {offsets = [0, 0], sizes = [1, 8], strides = [1, 1]} : vector<1x64xf32> to vector<1x8xf32>
    %32 = vector.extract_strided_slice %30 {offsets = [0, 8], sizes = [1, 8], strides = [1, 1]} : vector<1x64xf32> to vector<1x8xf32>
    %33 = arith.addf %31, %32 : vector<1x8xf32>
    %34 = vector.extract_strided_slice %30 {offsets = [0, 16], sizes = [1, 8], strides = [1, 1]} : vector<1x64xf32> to vector<1x8xf32>
    %35 = arith.addf %33, %34 : vector<1x8xf32>
    %36 = vector.extract_strided_slice %30 {offsets = [0, 24], sizes = [1, 8], strides = [1, 1]} : vector<1x64xf32> to vector<1x8xf32>
    %37 = arith.addf %35, %36 : vector<1x8xf32>
    %38 = vector.extract_strided_slice %30 {offsets = [0, 32], sizes = [1, 8], strides = [1, 1]} : vector<1x64xf32> to vector<1x8xf32>
    %39 = arith.addf %37, %38 : vector<1x8xf32>
    %40 = vector.extract_strided_slice %30 {offsets = [0, 40], sizes = [1, 8], strides = [1, 1]} : vector<1x64xf32> to vector<1x8xf32>
    %41 = arith.addf %39, %40 : vector<1x8xf32>
    %42 = vector.extract_strided_slice %30 {offsets = [0, 48], sizes = [1, 8], strides = [1, 1]} : vector<1x64xf32> to vector<1x8xf32>
    %43 = arith.addf %41, %42 : vector<1x8xf32>
    %44 = vector.extract_strided_slice %30 {offsets = [0, 56], sizes = [1, 8], strides = [1, 1]} : vector<1x64xf32> to vector<1x8xf32>
    %45 = arith.addf %43, %44 : vector<1x8xf32>
    %cst_10 = arith.constant 1.024000e+03 : f32
    %46 = vector.broadcast %cst_10 : f32 to vector<1x8xf32>
    %47 = arith.divf %45, %46 : vector<1x8xf32>
    %cst_11 = arith.constant 9.99999974E-6 : f32
    %48 = vector.broadcast %cst_11 : f32 to vector<1x8xf32>
    %49 = arith.addf %47, %48 : vector<1x8xf32>
    %50 = math.rsqrt %49 : vector<1x8xf32>
    %51 = arith.mulf %4, %50 : vector<1x8xf32>
    %52 = arith.mulf %24, %51 : vector<1x8xf32>
    %53 = arith.subf %5, %52 : vector<1x8xf32>
    %54 = tpu.concatenate %51, %51, %51, %51, %51, %51, %51, %51 in 1 : vector<1x8xf32>, vector<1x8xf32>, vector<1x8xf32>, vector<1x8xf32>, vector<1x8xf32>, vector<1x8xf32>, vector<1x8xf32>, vector<1x8xf32> -> vector<1x64xf32>
    %55 = vector.broadcast %54 : vector<1x64xf32> to vector<128x64xf32>
    %56 = arith.mulf %3, %55 : vector<128x64xf32>
    %57 = tpu.concatenate %53, %53, %53, %53, %53, %53, %53, %53 in 1 : vector<1x8xf32>, vector<1x8xf32>, vector<1x8xf32>, vector<1x8xf32>, vector<1x8xf32>, vector<1x8xf32>, vector<1x8xf32>, vector<1x8xf32> -> vector<1x64xf32>
    %58 = vector.broadcast %57 : vector<1x64xf32> to vector<128x64xf32>
    %59 = arith.addf %56, %58 : vector<128x64xf32>
    %cst_12 = arith.constant 0.000000e+00 : f32
    %60 = vector.broadcast %cst_12 : f32 to vector<128x64xf32>
    %61 = arith.maximumf %59, %60 : vector<128x64xf32>
    %cst_13 = arith.constant 0.000000e+00 : f32
    %62 = vector.broadcast %cst_13 : f32 to vector<2x1x10x64xf32>
    %c0_14 = arith.constant 0 : index
    %c0_15 = arith.constant 0 : index
    %c0_16 = arith.constant 0 : index
    %c0_17 = arith.constant 0 : index
    %63 = vector.load %arg11[%c0_14, %c0_15, %c0_16, %c0_17] : memref<2x10x10x64xf32, #tpu.memory_space<vmem>>, vector<2x1x10x64xf32>
    tpu.vector_store %arg11[%c0_14, %c0_15, %c0_16, %c0_17], %62 {strides = array<i32>} : memref<2x10x10x64xf32, #tpu.memory_space<vmem>>, vector<2x1x10x64xf32>,
    %c0_18 = arith.constant 0 : index
    %c9 = arith.constant 9 : index
    %c0_19 = arith.constant 0 : index
    %c0_20 = arith.constant 0 : index
    %64 = vector.load %arg11[%c0_18, %c9, %c0_19, %c0_20] : memref<2x10x10x64xf32, #tpu.memory_space<vmem>>, vector<2x1x10x64xf32>
    tpu.vector_store %arg11[%c0_18, %c9, %c0_19, %c0_20], %62 {strides = array<i32>} : memref<2x10x10x64xf32, #tpu.memory_space<vmem>>, vector<2x1x10x64xf32>,
    %cst_21 = arith.constant 0.000000e+00 : f32
    %65 = vector.broadcast %cst_21 : f32 to vector<2x10x1x64xf32>
    %c0_22 = arith.constant 0 : index
    %c0_23 = arith.constant 0 : index
    %c0_24 = arith.constant 0 : index
    %c0_25 = arith.constant 0 : index
    %66 = vector.load %arg11[%c0_22, %c0_23, %c0_24, %c0_25] : memref<2x10x10x64xf32, #tpu.memory_space<vmem>>, vector<2x10x1x64xf32>
    tpu.vector_store %arg11[%c0_22, %c0_23, %c0_24, %c0_25], %65 {strides = array<i32>} : memref<2x10x10x64xf32, #tpu.memory_space<vmem>>, vector<2x10x1x64xf32>,
    %c0_26 = arith.constant 0 : index
    %c0_27 = arith.constant 0 : index
    %c9_28 = arith.constant 9 : index
    %c0_29 = arith.constant 0 : index
    %67 = vector.load %arg11[%c0_26, %c0_27, %c9_28, %c0_29] : memref<2x10x10x64xf32, #tpu.memory_space<vmem>>, vector<2x10x1x64xf32>
    tpu.vector_store %arg11[%c0_26, %c0_27, %c9_28, %c0_29], %65 {strides = array<i32>} : memref<2x10x10x64xf32, #tpu.memory_space<vmem>>, vector<2x10x1x64xf32>,
    %68 = vector.shape_cast %61 : vector<128x64xf32> to vector<2x8x8x64xf32>
    %c0_30 = arith.constant 0 : index
    %c1 = arith.constant 1 : index
    %c1_31 = arith.constant 1 : index
    %c0_32 = arith.constant 0 : index
    %69 = vector.load %arg11[%c0_30, %c1, %c1_31, %c0_32] : memref<2x10x10x64xf32, #tpu.memory_space<vmem>>, vector<2x8x8x64xf32>
    tpu.vector_store %arg11[%c0_30, %c1, %c1_31, %c0_32], %68 {strides = array<i32>} : memref<2x10x10x64xf32, #tpu.memory_space<vmem>>, vector<2x8x8x64xf32>,
    %cst_33 = arith.constant 0.000000e+00 : f32
    %70 = vector.broadcast %cst_33 : f32 to vector<128x64xf32>
    %c0_34 = arith.constant 0 : index
    %c0_35 = arith.constant 0 : index
    %c0_36 = arith.constant 0 : index
    %c0_37 = arith.constant 0 : index
    %71 = vector.load %arg11[%c0_34, %c0_35, %c0_36, %c0_37] : memref<2x10x10x64xf32, #tpu.memory_space<vmem>>, vector<2x8x8x64xf32>
    %72 = vector.shape_cast %71 : vector<2x8x8x64xf32> to vector<128x64xf32>
    %73 = arith.truncf %72 : vector<128x64xf32> to vector<128x64xbf16>
    %c0_38 = arith.constant 0 : index
    %c0_39 = arith.constant 0 : index
    %74 = vector.load %arg2[%c0_38, %c0_39] : memref<576x64xbf16, #tpu.memory_space<vmem>>, vector<64x64xbf16>
    %cst_40 = arith.constant dense<0.000000e+00> : vector<128x64xf32>
    %75 = tpu.matmul %73, %74, %cst_40 {dimension_numbers = #tpu.dot_dimension_numbers<[1], [0], [0], [1], [0, 0, 1, 1], [], []>} : vector<128x64xbf16>, vector<64x64xbf16>, vector<128x64xf32> -> vector<128x64xf32>
    %76 = arith.addf %70, %75 : vector<128x64xf32>
    %c0_41 = arith.constant 0 : index
    %c0_42 = arith.constant 0 : index
    %c1_43 = arith.constant 1 : index
    %c0_44 = arith.constant 0 : index
    %77 = vector.load %arg11[%c0_41, %c0_42, %c1_43, %c0_44] : memref<2x10x10x64xf32, #tpu.memory_space<vmem>>, vector<2x8x8x64xf32>
    %78 = vector.shape_cast %77 : vector<2x8x8x64xf32> to vector<128x64xf32>
    %79 = arith.truncf %78 : vector<128x64xf32> to vector<128x64xbf16>
    %c64 = arith.constant 64 : index
    %c0_45 = arith.constant 0 : index
    %80 = vector.load %arg2[%c64, %c0_45] : memref<576x64xbf16, #tpu.memory_space<vmem>>, vector<64x64xbf16>
    %cst_46 = arith.constant dense<0.000000e+00> : vector<128x64xf32>
    %81 = tpu.matmul %79, %80, %cst_46 {dimension_numbers = #tpu.dot_dimension_numbers<[1], [0], [0], [1], [0, 0, 1, 1], [], []>} : vector<128x64xbf16>, vector<64x64xbf16>, vector<128x64xf32> -> vector<128x64xf32>
    %82 = arith.addf %76, %81 : vector<128x64xf32>
    %c0_47 = arith.constant 0 : index
    %c0_48 = arith.constant 0 : index
    %c2 = arith.constant 2 : index
    %c0_49 = arith.constant 0 : index
    %83 = vector.load %arg11[%c0_47, %c0_48, %c2, %c0_49] : memref<2x10x10x64xf32, #tpu.memory_space<vmem>>, vector<2x8x8x64xf32>
    %84 = vector.shape_cast %83 : vector<2x8x8x64xf32> to vector<128x64xf32>
    %85 = arith.truncf %84 : vector<128x64xf32> to vector<128x64xbf16>
    %c128 = arith.constant 128 : index
    %c0_50 = arith.constant 0 : index
    %86 = vector.load %arg2[%c128, %c0_50] : memref<576x64xbf16, #tpu.memory_space<vmem>>, vector<64x64xbf16>
    %cst_51 = arith.constant dense<0.000000e+00> : vector<128x64xf32>
    %87 = tpu.matmul %85, %86, %cst_51 {dimension_numbers = #tpu.dot_dimension_numbers<[1], [0], [0], [1], [0, 0, 1, 1], [], []>} : vector<128x64xbf16>, vector<64x64xbf16>, vector<128x64xf32> -> vector<128x64xf32>
    %88 = arith.addf %82, %87 : vector<128x64xf32>
    %c0_52 = arith.constant 0 : index
    %c1_53 = arith.constant 1 : index
    %c0_54 = arith.constant 0 : index
    %c0_55 = arith.constant 0 : index
    %89 = vector.load %arg11[%c0_52, %c1_53, %c0_54, %c0_55] : memref<2x10x10x64xf32, #tpu.memory_space<vmem>>, vector<2x8x8x64xf32>
    %90 = vector.shape_cast %89 : vector<2x8x8x64xf32> to vector<128x64xf32>
    %91 = arith.truncf %90 : vector<128x64xf32> to vector<128x64xbf16>
    %c192 = arith.constant 192 : index
    %c0_56 = arith.constant 0 : index
    %92 = vector.load %arg2[%c192, %c0_56] : memref<576x64xbf16, #tpu.memory_space<vmem>>, vector<64x64xbf16>
    %cst_57 = arith.constant dense<0.000000e+00> : vector<128x64xf32>
    %93 = tpu.matmul %91, %92, %cst_57 {dimension_numbers = #tpu.dot_dimension_numbers<[1], [0], [0], [1], [0, 0, 1, 1], [], []>} : vector<128x64xbf16>, vector<64x64xbf16>, vector<128x64xf32> -> vector<128x64xf32>
    %94 = arith.addf %88, %93 : vector<128x64xf32>
    %c0_58 = arith.constant 0 : index
    %c1_59 = arith.constant 1 : index
    %c1_60 = arith.constant 1 : index
    %c0_61 = arith.constant 0 : index
    %95 = vector.load %arg11[%c0_58, %c1_59, %c1_60, %c0_61] : memref<2x10x10x64xf32, #tpu.memory_space<vmem>>, vector<2x8x8x64xf32>
    %96 = vector.shape_cast %95 : vector<2x8x8x64xf32> to vector<128x64xf32>
    %97 = arith.truncf %96 : vector<128x64xf32> to vector<128x64xbf16>
    %c256 = arith.constant 256 : index
    %c0_62 = arith.constant 0 : index
    %98 = vector.load %arg2[%c256, %c0_62] : memref<576x64xbf16, #tpu.memory_space<vmem>>, vector<64x64xbf16>
    %cst_63 = arith.constant dense<0.000000e+00> : vector<128x64xf32>
    %99 = tpu.matmul %97, %98, %cst_63 {dimension_numbers = #tpu.dot_dimension_numbers<[1], [0], [0], [1], [0, 0, 1, 1], [], []>} : vector<128x64xbf16>, vector<64x64xbf16>, vector<128x64xf32> -> vector<128x64xf32>
    %100 = arith.addf %94, %99 : vector<128x64xf32>
    %c0_64 = arith.constant 0 : index
    %c1_65 = arith.constant 1 : index
    %c2_66 = arith.constant 2 : index
    %c0_67 = arith.constant 0 : index
    %101 = vector.load %arg11[%c0_64, %c1_65, %c2_66, %c0_67] : memref<2x10x10x64xf32, #tpu.memory_space<vmem>>, vector<2x8x8x64xf32>
    %102 = vector.shape_cast %101 : vector<2x8x8x64xf32> to vector<128x64xf32>
    %103 = arith.truncf %102 : vector<128x64xf32> to vector<128x64xbf16>
    %c320 = arith.constant 320 : index
    %c0_68 = arith.constant 0 : index
    %104 = vector.load %arg2[%c320, %c0_68] : memref<576x64xbf16, #tpu.memory_space<vmem>>, vector<64x64xbf16>
    %cst_69 = arith.constant dense<0.000000e+00> : vector<128x64xf32>
    %105 = tpu.matmul %103, %104, %cst_69 {dimension_numbers = #tpu.dot_dimension_numbers<[1], [0], [0], [1], [0, 0, 1, 1], [], []>} : vector<128x64xbf16>, vector<64x64xbf16>, vector<128x64xf32> -> vector<128x64xf32>
    %106 = arith.addf %100, %105 : vector<128x64xf32>
    %c0_70 = arith.constant 0 : index
    %c2_71 = arith.constant 2 : index
    %c0_72 = arith.constant 0 : index
    %c0_73 = arith.constant 0 : index
    %107 = vector.load %arg11[%c0_70, %c2_71, %c0_72, %c0_73] : memref<2x10x10x64xf32, #tpu.memory_space<vmem>>, vector<2x8x8x64xf32>
    %108 = vector.shape_cast %107 : vector<2x8x8x64xf32> to vector<128x64xf32>
    %109 = arith.truncf %108 : vector<128x64xf32> to vector<128x64xbf16>
    %c384 = arith.constant 384 : index
    %c0_74 = arith.constant 0 : index
    %110 = vector.load %arg2[%c384, %c0_74] : memref<576x64xbf16, #tpu.memory_space<vmem>>, vector<64x64xbf16>
    %cst_75 = arith.constant dense<0.000000e+00> : vector<128x64xf32>
    %111 = tpu.matmul %109, %110, %cst_75 {dimension_numbers = #tpu.dot_dimension_numbers<[1], [0], [0], [1], [0, 0, 1, 1], [], []>} : vector<128x64xbf16>, vector<64x64xbf16>, vector<128x64xf32> -> vector<128x64xf32>
    %112 = arith.addf %106, %111 : vector<128x64xf32>
    %c0_76 = arith.constant 0 : index
    %c2_77 = arith.constant 2 : index
    %c1_78 = arith.constant 1 : index
    %c0_79 = arith.constant 0 : index
    %113 = vector.load %arg11[%c0_76, %c2_77, %c1_78, %c0_79] : memref<2x10x10x64xf32, #tpu.memory_space<vmem>>, vector<2x8x8x64xf32>
    %114 = vector.shape_cast %113 : vector<2x8x8x64xf32> to vector<128x64xf32>
    %115 = arith.truncf %114 : vector<128x64xf32> to vector<128x64xbf16>
    %c448 = arith.constant 448 : index
    %c0_80 = arith.constant 0 : index
    %116 = vector.load %arg2[%c448, %c0_80] : memref<576x64xbf16, #tpu.memory_space<vmem>>, vector<64x64xbf16>
    %cst_81 = arith.constant dense<0.000000e+00> : vector<128x64xf32>
    %117 = tpu.matmul %115, %116, %cst_81 {dimension_numbers = #tpu.dot_dimension_numbers<[1], [0], [0], [1], [0, 0, 1, 1], [], []>} : vector<128x64xbf16>, vector<64x64xbf16>, vector<128x64xf32> -> vector<128x64xf32>
    %118 = arith.addf %112, %117 : vector<128x64xf32>
    %c0_82 = arith.constant 0 : index
    %c2_83 = arith.constant 2 : index
    %c2_84 = arith.constant 2 : index
    %c0_85 = arith.constant 0 : index
    %119 = vector.load %arg11[%c0_82, %c2_83, %c2_84, %c0_85] : memref<2x10x10x64xf32, #tpu.memory_space<vmem>>, vector<2x8x8x64xf32>
    %120 = vector.shape_cast %119 : vector<2x8x8x64xf32> to vector<128x64xf32>
    %121 = arith.truncf %120 : vector<128x64xf32> to vector<128x64xbf16>
    %c512 = arith.constant 512 : index
    %c0_86 = arith.constant 0 : index
    %122 = vector.load %arg2[%c512, %c0_86] : memref<576x64xbf16, #tpu.memory_space<vmem>>, vector<64x64xbf16>
    %cst_87 = arith.constant dense<0.000000e+00> : vector<128x64xf32>
    %123 = tpu.matmul %121, %122, %cst_87 {dimension_numbers = #tpu.dot_dimension_numbers<[1], [0], [0], [1], [0, 0, 1, 1], [], []>} : vector<128x64xbf16>, vector<64x64xbf16>, vector<128x64xf32> -> vector<128x64xf32>
    %124 = arith.addf %118, %123 : vector<128x64xf32>
    %c0_88 = arith.constant 0 : index
    %c0_89 = arith.constant 0 : index
    %125 = vector.load %arg6[%c0_88, %c0_89] : memref<1x8xf32, #tpu.memory_space<vmem>>, vector<1x8xf32>
    %c0_90 = arith.constant 0 : index
    %c0_91 = arith.constant 0 : index
    %126 = vector.load %arg7[%c0_90, %c0_91] : memref<1x8xf32, #tpu.memory_space<vmem>>, vector<1x8xf32>
    %cst_92 = arith.constant dense<0.000000e+00> : vector<64xf32>
    %127 = vector.multi_reduction <add>, %124, %cst_92 [0] : vector<128x64xf32> to vector<64xf32>
    %128 = vector.shape_cast %127 : vector<64xf32> to vector<1x64xf32>
    %129 = vector.extract_strided_slice %128 {offsets = [0, 0], sizes = [1, 8], strides = [1, 1]} : vector<1x64xf32> to vector<1x8xf32>
    %130 = vector.extract_strided_slice %128 {offsets = [0, 8], sizes = [1, 8], strides = [1, 1]} : vector<1x64xf32> to vector<1x8xf32>
    %131 = arith.addf %129, %130 : vector<1x8xf32>
    %132 = vector.extract_strided_slice %128 {offsets = [0, 16], sizes = [1, 8], strides = [1, 1]} : vector<1x64xf32> to vector<1x8xf32>
    %133 = arith.addf %131, %132 : vector<1x8xf32>
    %134 = vector.extract_strided_slice %128 {offsets = [0, 24], sizes = [1, 8], strides = [1, 1]} : vector<1x64xf32> to vector<1x8xf32>
    %135 = arith.addf %133, %134 : vector<1x8xf32>
    %136 = vector.extract_strided_slice %128 {offsets = [0, 32], sizes = [1, 8], strides = [1, 1]} : vector<1x64xf32> to vector<1x8xf32>
    %137 = arith.addf %135, %136 : vector<1x8xf32>
    %138 = vector.extract_strided_slice %128 {offsets = [0, 40], sizes = [1, 8], strides = [1, 1]} : vector<1x64xf32> to vector<1x8xf32>
    %139 = arith.addf %137, %138 : vector<1x8xf32>
    %140 = vector.extract_strided_slice %128 {offsets = [0, 48], sizes = [1, 8], strides = [1, 1]} : vector<1x64xf32> to vector<1x8xf32>
    %141 = arith.addf %139, %140 : vector<1x8xf32>
    %142 = vector.extract_strided_slice %128 {offsets = [0, 56], sizes = [1, 8], strides = [1, 1]} : vector<1x64xf32> to vector<1x8xf32>
    %143 = arith.addf %141, %142 : vector<1x8xf32>
    %cst_93 = arith.constant 1.024000e+03 : f32
    %144 = vector.broadcast %cst_93 : f32 to vector<1x8xf32>
    %145 = arith.divf %143, %144 : vector<1x8xf32>
    %146 = tpu.concatenate %145, %145, %145, %145, %145, %145, %145, %145 in 1 : vector<1x8xf32>, vector<1x8xf32>, vector<1x8xf32>, vector<1x8xf32>, vector<1x8xf32>, vector<1x8xf32>, vector<1x8xf32>, vector<1x8xf32> -> vector<1x64xf32>
    %147 = vector.broadcast %146 : vector<1x64xf32> to vector<128x64xf32>
    %148 = arith.subf %124, %147 : vector<128x64xf32>
    %149 = arith.mulf %148, %148 : vector<128x64xf32>
    %cst_94 = arith.constant dense<0.000000e+00> : vector<64xf32>
    %150 = vector.multi_reduction <add>, %149, %cst_94 [0] : vector<128x64xf32> to vector<64xf32>
    %151 = vector.shape_cast %150 : vector<64xf32> to vector<1x64xf32>
    %152 = vector.extract_strided_slice %151 {offsets = [0, 0], sizes = [1, 8], strides = [1, 1]} : vector<1x64xf32> to vector<1x8xf32>
    %153 = vector.extract_strided_slice %151 {offsets = [0, 8], sizes = [1, 8], strides = [1, 1]} : vector<1x64xf32> to vector<1x8xf32>
    %154 = arith.addf %152, %153 : vector<1x8xf32>
    %155 = vector.extract_strided_slice %151 {offsets = [0, 16], sizes = [1, 8], strides = [1, 1]} : vector<1x64xf32> to vector<1x8xf32>
    %156 = arith.addf %154, %155 : vector<1x8xf32>
    %157 = vector.extract_strided_slice %151 {offsets = [0, 24], sizes = [1, 8], strides = [1, 1]} : vector<1x64xf32> to vector<1x8xf32>
    %158 = arith.addf %156, %157 : vector<1x8xf32>
    %159 = vector.extract_strided_slice %151 {offsets = [0, 32], sizes = [1, 8], strides = [1, 1]} : vector<1x64xf32> to vector<1x8xf32>
    %160 = arith.addf %158, %159 : vector<1x8xf32>
    %161 = vector.extract_strided_slice %151 {offsets = [0, 40], sizes = [1, 8], strides = [1, 1]} : vector<1x64xf32> to vector<1x8xf32>
    %162 = arith.addf %160, %161 : vector<1x8xf32>
    %163 = vector.extract_strided_slice %151 {offsets = [0, 48], sizes = [1, 8], strides = [1, 1]} : vector<1x64xf32> to vector<1x8xf32>
    %164 = arith.addf %162, %163 : vector<1x8xf32>
    %165 = vector.extract_strided_slice %151 {offsets = [0, 56], sizes = [1, 8], strides = [1, 1]} : vector<1x64xf32> to vector<1x8xf32>
    %166 = arith.addf %164, %165 : vector<1x8xf32>
    %cst_95 = arith.constant 1.024000e+03 : f32
    %167 = vector.broadcast %cst_95 : f32 to vector<1x8xf32>
    %168 = arith.divf %166, %167 : vector<1x8xf32>
    %cst_96 = arith.constant 9.99999974E-6 : f32
    %169 = vector.broadcast %cst_96 : f32 to vector<1x8xf32>
    %170 = arith.addf %168, %169 : vector<1x8xf32>
    %171 = math.rsqrt %170 : vector<1x8xf32>
    %172 = arith.mulf %125, %171 : vector<1x8xf32>
    %173 = arith.mulf %145, %172 : vector<1x8xf32>
    %174 = arith.subf %126, %173 : vector<1x8xf32>
    %175 = tpu.concatenate %172, %172, %172, %172, %172, %172, %172, %172 in 1 : vector<1x8xf32>, vector<1x8xf32>, vector<1x8xf32>, vector<1x8xf32>, vector<1x8xf32>, vector<1x8xf32>, vector<1x8xf32>, vector<1x8xf32> -> vector<1x64xf32>
    %176 = vector.broadcast %175 : vector<1x64xf32> to vector<128x64xf32>
    %177 = arith.mulf %124, %176 : vector<128x64xf32>
    %178 = tpu.concatenate %174, %174, %174, %174, %174, %174, %174, %174 in 1 : vector<1x8xf32>, vector<1x8xf32>, vector<1x8xf32>, vector<1x8xf32>, vector<1x8xf32>, vector<1x8xf32>, vector<1x8xf32>, vector<1x8xf32> -> vector<1x64xf32>
    %179 = vector.broadcast %178 : vector<1x64xf32> to vector<128x64xf32>
    %180 = arith.addf %177, %179 : vector<128x64xf32>
    %cst_97 = arith.constant 0.000000e+00 : f32
    %181 = vector.broadcast %cst_97 : f32 to vector<128x64xf32>
    %182 = arith.maximumf %180, %181 : vector<128x64xf32>
    %183 = arith.truncf %182 : vector<128x64xf32> to vector<128x64xbf16>
    %c0_98 = arith.constant 0 : index
    %c0_99 = arith.constant 0 : index
    %184 = vector.load %arg3[%c0_98, %c0_99] : memref<64x256xbf16, #tpu.memory_space<vmem>>, vector<64x256xbf16>
    %cst_100 = arith.constant dense<0.000000e+00> : vector<128x256xf32>
    %185 = tpu.matmul %183, %184, %cst_100 {dimension_numbers = #tpu.dot_dimension_numbers<[1], [0], [0], [1], [0, 0, 1, 1], [], []>} : vector<128x64xbf16>, vector<64x256xbf16>, vector<128x256xf32> -> vector<128x256xf32>
    %c0_101 = arith.constant 0 : index
    %c0_102 = arith.constant 0 : index
    %186 = vector.load %arg8[%c0_101, %c0_102] : memref<1x32xf32, #tpu.memory_space<vmem>>, vector<1x32xf32>
    %c0_103 = arith.constant 0 : index
    %c0_104 = arith.constant 0 : index
    %187 = vector.load %arg9[%c0_103, %c0_104] : memref<1x32xf32, #tpu.memory_space<vmem>>, vector<1x32xf32>
    %c0_105 = arith.constant 0 : index
    %c0_106 = arith.constant 0 : index
    %188 = vector.load %arg0[%c0_105, %c0_106] : memref<128x256xf32, #tpu.memory_space<vmem>>, vector<128x256xf32>
    %cst_107 = arith.constant dense<0.000000e+00> : vector<256xf32>
    %189 = vector.multi_reduction <add>, %185, %cst_107 [0] : vector<128x256xf32> to vector<256xf32>
    %190 = vector.shape_cast %189 : vector<256xf32> to vector<1x256xf32>
    %191 = vector.extract_strided_slice %190 {offsets = [0, 0], sizes = [1, 32], strides = [1, 1]} : vector<1x256xf32> to vector<1x32xf32>
    %192 = vector.extract_strided_slice %190 {offsets = [0, 32], sizes = [1, 32], strides = [1, 1]} : vector<1x256xf32> to vector<1x32xf32>
    %193 = arith.addf %191, %192 : vector<1x32xf32>
    %194 = vector.extract_strided_slice %190 {offsets = [0, 64], sizes = [1, 32], strides = [1, 1]} : vector<1x256xf32> to vector<1x32xf32>
    %195 = arith.addf %193, %194 : vector<1x32xf32>
    %196 = vector.extract_strided_slice %190 {offsets = [0, 96], sizes = [1, 32], strides = [1, 1]} : vector<1x256xf32> to vector<1x32xf32>
    %197 = arith.addf %195, %196 : vector<1x32xf32>
    %198 = vector.extract_strided_slice %190 {offsets = [0, 128], sizes = [1, 32], strides = [1, 1]} : vector<1x256xf32> to vector<1x32xf32>
    %199 = arith.addf %197, %198 : vector<1x32xf32>
    %200 = vector.extract_strided_slice %190 {offsets = [0, 160], sizes = [1, 32], strides = [1, 1]} : vector<1x256xf32> to vector<1x32xf32>
    %201 = arith.addf %199, %200 : vector<1x32xf32>
    %202 = vector.extract_strided_slice %190 {offsets = [0, 192], sizes = [1, 32], strides = [1, 1]} : vector<1x256xf32> to vector<1x32xf32>
    %203 = arith.addf %201, %202 : vector<1x32xf32>
    %204 = vector.extract_strided_slice %190 {offsets = [0, 224], sizes = [1, 32], strides = [1, 1]} : vector<1x256xf32> to vector<1x32xf32>
    %205 = arith.addf %203, %204 : vector<1x32xf32>
    %cst_108 = arith.constant 1.024000e+03 : f32
    %206 = vector.broadcast %cst_108 : f32 to vector<1x32xf32>
    %207 = arith.divf %205, %206 : vector<1x32xf32>
    %208 = tpu.concatenate %207, %207, %207, %207, %207, %207, %207, %207 in 1 : vector<1x32xf32>, vector<1x32xf32>, vector<1x32xf32>, vector<1x32xf32>, vector<1x32xf32>, vector<1x32xf32>, vector<1x32xf32>, vector<1x32xf32> -> vector<1x256xf32>
    %209 = vector.broadcast %208 : vector<1x256xf32> to vector<128x256xf32>
    %210 = arith.subf %185, %209 : vector<128x256xf32>
    %211 = arith.mulf %210, %210 : vector<128x256xf32>
    %cst_109 = arith.constant dense<0.000000e+00> : vector<256xf32>
    %212 = vector.multi_reduction <add>, %211, %cst_109 [0] : vector<128x256xf32> to vector<256xf32>
    %213 = vector.shape_cast %212 : vector<256xf32> to vector<1x256xf32>
    %214 = vector.extract_strided_slice %213 {offsets = [0, 0], sizes = [1, 32], strides = [1, 1]} : vector<1x256xf32> to vector<1x32xf32>
    %215 = vector.extract_strided_slice %213 {offsets = [0, 32], sizes = [1, 32], strides = [1, 1]} : vector<1x256xf32> to vector<1x32xf32>
    %216 = arith.addf %214, %215 : vector<1x32xf32>
    %217 = vector.extract_strided_slice %213 {offsets = [0, 64], sizes = [1, 32], strides = [1, 1]} : vector<1x256xf32> to vector<1x32xf32>
    %218 = arith.addf %216, %217 : vector<1x32xf32>
    %219 = vector.extract_strided_slice %213 {offsets = [0, 96], sizes = [1, 32], strides = [1, 1]} : vector<1x256xf32> to vector<1x32xf32>
    %220 = arith.addf %218, %219 : vector<1x32xf32>
    %221 = vector.extract_strided_slice %213 {offsets = [0, 128], sizes = [1, 32], strides = [1, 1]} : vector<1x256xf32> to vector<1x32xf32>
    %222 = arith.addf %220, %221 : vector<1x32xf32>
    %223 = vector.extract_strided_slice %213 {offsets = [0, 160], sizes = [1, 32], strides = [1, 1]} : vector<1x256xf32> to vector<1x32xf32>
    %224 = arith.addf %222, %223 : vector<1x32xf32>
    %225 = vector.extract_strided_slice %213 {offsets = [0, 192], sizes = [1, 32], strides = [1, 1]} : vector<1x256xf32> to vector<1x32xf32>
    %226 = arith.addf %224, %225 : vector<1x32xf32>
    %227 = vector.extract_strided_slice %213 {offsets = [0, 224], sizes = [1, 32], strides = [1, 1]} : vector<1x256xf32> to vector<1x32xf32>
    %228 = arith.addf %226, %227 : vector<1x32xf32>
    %cst_110 = arith.constant 1.024000e+03 : f32
    %229 = vector.broadcast %cst_110 : f32 to vector<1x32xf32>
    %230 = arith.divf %228, %229 : vector<1x32xf32>
    %cst_111 = arith.constant 9.99999974E-6 : f32
    %231 = vector.broadcast %cst_111 : f32 to vector<1x32xf32>
    %232 = arith.addf %230, %231 : vector<1x32xf32>
    %233 = math.rsqrt %232 : vector<1x32xf32>
    %234 = arith.mulf %186, %233 : vector<1x32xf32>
    %235 = arith.mulf %207, %234 : vector<1x32xf32>
    %236 = arith.subf %187, %235 : vector<1x32xf32>
    %237 = tpu.concatenate %234, %234, %234, %234, %234, %234, %234, %234 in 1 : vector<1x32xf32>, vector<1x32xf32>, vector<1x32xf32>, vector<1x32xf32>, vector<1x32xf32>, vector<1x32xf32>, vector<1x32xf32>, vector<1x32xf32> -> vector<1x256xf32>
    %238 = vector.broadcast %237 : vector<1x256xf32> to vector<128x256xf32>
    %239 = arith.mulf %185, %238 : vector<128x256xf32>
    %240 = tpu.concatenate %236, %236, %236, %236, %236, %236, %236, %236 in 1 : vector<1x32xf32>, vector<1x32xf32>, vector<1x32xf32>, vector<1x32xf32>, vector<1x32xf32>, vector<1x32xf32>, vector<1x32xf32>, vector<1x32xf32> -> vector<1x256xf32>
    %241 = vector.broadcast %240 : vector<1x256xf32> to vector<128x256xf32>
    %242 = arith.addf %239, %241 : vector<128x256xf32>
    %243 = arith.addf %242, %188 : vector<128x256xf32>
    %cst_112 = arith.constant 0.000000e+00 : f32
    %244 = vector.broadcast %cst_112 : f32 to vector<128x256xf32>
    %245 = arith.maximumf %243, %244 : vector<128x256xf32>
    %c0_113 = arith.constant 0 : index
    %c0_114 = arith.constant 0 : index
    %246 = vector.load %arg10[%c0_113, %c0_114] : memref<128x256xf32, #tpu.memory_space<vmem>>, vector<128x256xf32>
    tpu.vector_store %arg10[%c0_113, %c0_114], %245 {strides = array<i32>} : memref<128x256xf32, #tpu.memory_space<vmem>>, vector<128x256xf32>,
    return
  }
}

</mosaic_0001>

<llo_original>
// kernel: bottleneck_forward.1
$region0: #{bottleneck_forward.1}
  #allocation0 [shape = 'u32[]', space=smem, size = 0x4, offset = 0x4, fixed_abs, tag = 'smem constant byte address 0x4 - core index']
  #allocation1 [shape = 'u32[144,128]{1,0:T(1,128)}', space=vmem, size = 0x12000, scoped, tag = 'internal scratch']
  #allocation2 [shape = 'f32[2,10,10,64]{3,2,1,0:T(8,128)}', space=vmem, size = 0x28000, scoped, tag = 'scratch operand']
  %s0 = inlined_call_operand.vmem [shape: f32[128,256], index: 0, kind: input, shape index: {}]
  %s1 = inlined_call_operand.vmem [shape: bf16[256,64], index: 1, kind: input, shape index: {}]
  %s2 = inlined_call_operand.vmem [shape: bf16[576,64], index: 2, kind: input, shape index: {}]
  %s3 = inlined_call_operand.vmem [shape: bf16[64,256], index: 3, kind: input, shape index: {}]
  %s4 = inlined_call_operand.vmem [shape: f32[1,8], index: 4, kind: input, shape index: {}]
  %s5 = inlined_call_operand.vmem [shape: f32[1,8], index: 5, kind: input, shape index: {}]
  %s6 = inlined_call_operand.vmem [shape: f32[1,8], index: 6, kind: input, shape index: {}]
  %s7 = inlined_call_operand.vmem [shape: f32[1,8], index: 7, kind: input, shape index: {}]
  %s8 = inlined_call_operand.vmem [shape: f32[1,32], index: 8, kind: input, shape index: {}]
  %s9 = inlined_call_operand.vmem [shape: f32[1,32], index: 9, kind: input, shape index: {}]
  %s10 = inlined_call_operand.vmem [shape: f32[128,256], index: 10, kind: output, shape index: {}]
  %s11 = sld [smem:[#allocation0]]
  $region50: #{bottleneck_forward.1} parent=0
    _
  %s13 = ssub.s32 1, %s11
  %s14 = scalar_select 0, %s13, %s11
  // Predicated region
  $region2: #{bottleneck_forward.1} parent=0 // pred_check
    _
  $region3: #{bottleneck_forward.1} parent=0 // pred_check_branch
    %16 = sbr.rel (0) target = $region5
  $region4: #{bottleneck_forward.1} parent=0 // pred_region
    _
  $region5: #{bottleneck_forward.1} parent=0 // pred_fallthru
    _
  // Predicated region
  $region6: #{bottleneck_forward.1} parent=0 // pred_check
    _
  $region7: #{bottleneck_forward.1} parent=0 // pred_check_branch
    %18 = sbr.rel (0) target = $region9
  $region8: #{bottleneck_forward.1} parent=0 // pred_region
    _
  $region9: #{bottleneck_forward.1} parent=0 // pred_fallthru
    _
  // Predicated region
  $region10: #{bottleneck_forward.1} parent=0 // pred_check
    _
  $region11: #{bottleneck_forward.1} parent=0 // pred_check_branch
    %20 = sbr.rel (0) target = $region13
  $region12: #{bottleneck_forward.1} parent=0 // pred_region
    _
  $region13: #{bottleneck_forward.1} parent=0 // pred_fallthru
    _
  // Predicated region
  $region14: #{bottleneck_forward.1} parent=0 // pred_check
    _
  $region15: #{bottleneck_forward.1} parent=0 // pred_check_branch
    %22 = sbr.rel (0) target = $region17
  $region16: #{bottleneck_forward.1} parent=0 // pred_region
    _
  $region17: #{bottleneck_forward.1} parent=0 // pred_fallthru
    _
  // Predicated region
  $region18: #{bottleneck_forward.1} parent=0 // pred_check
    _
  $region19: #{bottleneck_forward.1} parent=0 // pred_check_branch
    %24 = sbr.rel (0) target = $region21
  $region20: #{bottleneck_forward.1} parent=0 // pred_region
    _
  $region21: #{bottleneck_forward.1} parent=0 // pred_fallthru
    _
  // Predicated region
  $region22: #{bottleneck_forward.1} parent=0 // pred_check
    _
  $region23: #{bottleneck_forward.1} parent=0 // pred_check_branch
    %26 = sbr.rel (0) target = $region25
  $region24: #{bottleneck_forward.1} parent=0 // pred_region
    _
  $region25: #{bottleneck_forward.1} parent=0 // pred_fallthru
    _
  // Predicated region
  $region26: #{bottleneck_forward.1} parent=0 // pred_check
    _
  $region27: #{bottleneck_forward.1} parent=0 // pred_check_branch
    %28 = sbr.rel (0) target = $region29
  $region28: #{bottleneck_forward.1} parent=0 // pred_region
    _
  $region29: #{bottleneck_forward.1} parent=0 // pred_fallthru
    _
  // Predicated region
  $region30: #{bottleneck_forward.1} parent=0 // pred_check
    _
  $region31: #{bottleneck_forward.1} parent=0 // pred_check_branch
    %30 = sbr.rel (0) target = $region33
  $region32: #{bottleneck_forward.1} parent=0 // pred_region
    _
  $region33: #{bottleneck_forward.1} parent=0 // pred_fallthru
    _
  // Predicated region
  $region34: #{bottleneck_forward.1} parent=0 // pred_check
    _
  $region35: #{bottleneck_forward.1} parent=0 // pred_check_branch
    %32 = sbr.rel (0) target = $region37
  $region36: #{bottleneck_forward.1} parent=0 // pred_region
    _
  $region37: #{bottleneck_forward.1} parent=0 // pred_fallthru
    _
  // Predicated region
  $region38: #{bottleneck_forward.1} parent=0 // pred_check
    _
  $region39: #{bottleneck_forward.1} parent=0 // pred_check_branch
    %34 = sbr.rel (0) target = $region41
  $region40: #{bottleneck_forward.1} parent=0 // pred_region
    _
  $region41: #{bottleneck_forward.1} parent=0 // pred_fallthru
    _
  %v36 = vld [vmem:[%s0] sm:$0xff]
  %v37 = vld [vmem:[%s0 + $0x8] sm:$0xff]
  %v38 = vld [vmem:[%s0 + $0x10] sm:$0xff]
  %v39 = vld [vmem:[%s0 + $0x18] sm:$0xff]
  %v40 = vld [vmem:[%s0 + $0x20] sm:$0xff]
  %v41 = vld [vmem:[%s0 + $0x28] sm:$0xff]
  %v42 = vld [vmem:[%s0 + $0x30] sm:$0xff]
  %v43 = vld [vmem:[%s0 + $0x38] sm:$0xff]
  %v44 = vld [vmem:[%s0 + $0x40] sm:$0xff]
  %v45 = vld [vmem:[%s0 + $0x48] sm:$0xff]
  %v46 = vld [vmem:[%s0 + $0x50] sm:$0xff]
  %v47 = vld [vmem:[%s0 + $0x58] sm:$0xff]
  %v48 = vld [vmem:[%s0 + $0x60] sm:$0xff]
  %v49 = vld [vmem:[%s0 + $0x68] sm:$0xff]
  %v50 = vld [vmem:[%s0 + $0x70] sm:$0xff]
  %v51 = vld [vmem:[%s0 + $0x78] sm:$0xff]
  %v52 = vld [vmem:[%s0 + $0x80] sm:$0xff]
  %v53 = vld [vmem:[%s0 + $0x88] sm:$0xff]
  %v54 = vld [vmem:[%s0 + $0x90] sm:$0xff]
  %v55 = vld [vmem:[%s0 + $0x98] sm:$0xff]
  %v56 = vld [vmem:[%s0 + $0xa0] sm:$0xff]
  %v57 = vld [vmem:[%s0 + $0xa8] sm:$0xff]
  %v58 = vld [vmem:[%s0 + $0xb0] sm:$0xff]
  %v59 = vld [vmem:[%s0 + $0xb8] sm:$0xff]
  %v60 = vld [vmem:[%s0 + $0xc0] sm:$0xff]
  %v61 = vld [vmem:[%s0 + $0xc8] sm:$0xff]
  %v62 = vld [vmem:[%s0 + $0xd0] sm:$0xff]
  %v63 = vld [vmem:[%s0 + $0xd8] sm:$0xff]
  %v64 = vld [vmem:[%s0 + $0xe0] sm:$0xff]
  %v65 = vld [vmem:[%s0 + $0xe8] sm:$0xff]
  %v66 = vld [vmem:[%s0 + $0xf0] sm:$0xff]
  %v67 = vld [vmem:[%s0 + $0xf8] sm:$0xff]
  %v68 = vpack.c.bf16 %v38, %v36
  %v69 = vpack.c.bf16 %v39, %v37
  %v70 = vpack.c.bf16 %v42, %v40
  %v71 = vpack.c.bf16 %v43, %v41
  %v72 = vpack.c.bf16 %v46, %v44
  %v73 = vpack.c.bf16 %v47, %v45
  %v74 = vpack.c.bf16 %v50, %v48
  %v75 = vpack.c.bf16 %v51, %v49
  %v76 = vpack.c.bf16 %v54, %v52
  %v77 = vpack.c.bf16 %v55, %v53
  %v78 = vpack.c.bf16 %v58, %v56
  %v79 = vpack.c.bf16 %v59, %v57
  %v80 = vpack.c.bf16 %v62, %v60
  %v81 = vpack.c.bf16 %v63, %v61
  %v82 = vpack.c.bf16 %v66, %v64
  %v83 = vpack.c.bf16 %v67, %v65
  %v84 = vld [vmem:[%s1] sm:$0xf]
  %v85 = vld [vmem:[%s1 + $0x4] sm:$0xf]
  %v86 = vld [vmem:[%s1 + $0x8] sm:$0xf]
  %v87 = vld [vmem:[%s1 + $0xc] sm:$0xf]
  %v88 = vld [vmem:[%s1 + $0x10] sm:$0xf]
  %v89 = vld [vmem:[%s1 + $0x14] sm:$0xf]
  %v90 = vld [vmem:[%s1 + $0x18] sm:$0xf]
  %v91 = vld [vmem:[%s1 + $0x1c] sm:$0xf]
  %v92 = vld [vmem:[%s1 + $0x20] sm:$0xf]
  %v93 = vld [vmem:[%s1 + $0x24] sm:$0xf]
  %v94 = vld [vmem:[%s1 + $0x28] sm:$0xf]
  %v95 = vld [vmem:[%s1 + $0x2c] sm:$0xf]
  %v96 = vld [vmem:[%s1 + $0x30] sm:$0xf]
  %v97 = vld [vmem:[%s1 + $0x34] sm:$0xf]
  %v98 = vld [vmem:[%s1 + $0x38] sm:$0xf]
  %v99 = vld [vmem:[%s1 + $0x3c] sm:$0xf]
  %v100 = vld [vmem:[%s1 + $0x40] sm:$0xf]
  %v101 = vld [vmem:[%s1 + $0x44] sm:$0xf]
  %v102 = vld [vmem:[%s1 + $0x48] sm:$0xf]
  %v103 = vld [vmem:[%s1 + $0x4c] sm:$0xf]
  %v104 = vld [vmem:[%s1 + $0x50] sm:$0xf]
  %v105 = vld [vmem:[%s1 + $0x54] sm:$0xf]
  %v106 = vld [vmem:[%s1 + $0x58] sm:$0xf]
  %v107 = vld [vmem:[%s1 + $0x5c] sm:$0xf]
  %v108 = vld [vmem:[%s1 + $0x60] sm:$0xf]
  %v109 = vld [vmem:[%s1 + $0x64] sm:$0xf]
  %v110 = vld [vmem:[%s1 + $0x68] sm:$0xf]
  %v111 = vld [vmem:[%s1 + $0x6c] sm:$0xf]
  %v112 = vld [vmem:[%s1 + $0x70] sm:$0xf]
  %v113 = vld [vmem:[%s1 + $0x74] sm:$0xf]
  %v114 = vld [vmem:[%s1 + $0x78] sm:$0xf]
  %v115 = vld [vmem:[%s1 + $0x7c] sm:$0xf]
  %v148 = vunpack.c.l.b16 %v84
  %v149 = vunpack.c.l.b16 %v85
  %v150 = vunpack.c.l.b16 %v86
  %v151 = vunpack.c.l.b16 %v87
  %v152 = vunpack.c.l.b16 %v88
  %v153 = vunpack.c.l.b16 %v89
  %v154 = vunpack.c.l.b16 %v90
  %v155 = vunpack.c.l.b16 %v91
  %v156 = vunpack.c.l.b16 %v92
  %v157 = vunpack.c.l.b16 %v93
  %v158 = vunpack.c.l.b16 %v94
  %v159 = vunpack.c.l.b16 %v95
  %v160 = vunpack.c.l.b16 %v96
  %v161 = vunpack.c.l.b16 %v97
  %v162 = vunpack.c.l.b16 %v98
  %v163 = vunpack.c.l.b16 %v99
  %v164 = vunpack.c.l.b16 %v100
  %v165 = vunpack.c.l.b16 %v101
  %v166 = vunpack.c.l.b16 %v102
  %v167 = vunpack.c.l.b16 %v103
  %v168 = vunpack.c.l.b16 %v104
  %v169 = vunpack.c.l.b16 %v105
  %v170 = vunpack.c.l.b16 %v106
  %v171 = vunpack.c.l.b16 %v107
  %v172 = vunpack.c.l.b16 %v108
  %v173 = vunpack.c.l.b16 %v109
  %v174 = vunpack.c.l.b16 %v110
  %v175 = vunpack.c.l.b16 %v111
  %v176 = vunpack.c.l.b16 %v112
  %v177 = vunpack.c.l.b16 %v113
  %v178 = vunpack.c.l.b16 %v114
  %v179 = vunpack.c.l.b16 %v115
  %v180 = vpack.c.b16 %v149, %v148
  %v181 = vpack.c.b16 %v151, %v150
  %v182 = vpack.c.b16 %v153, %v152
  %v183 = vpack.c.b16 %v155, %v154
  %v184 = vpack.c.b16 %v157, %v156
  %v185 = vpack.c.b16 %v159, %v158
  %v186 = vpack.c.b16 %v161, %v160
  %v187 = vpack.c.b16 %v163, %v162
  %v188 = vpack.c.b16 %v165, %v164
  %v189 = vpack.c.b16 %v167, %v166
  %v190 = vpack.c.b16 %v169, %v168
  %v191 = vpack.c.b16 %v171, %v170
  %v192 = vpack.c.b16 %v173, %v172
  %v193 = vpack.c.b16 %v175, %v174
  %v194 = vpack.c.b16 %v177, %v176
  %v195 = vpack.c.b16 %v179, %v178
  %212 = vmatprep.subr.bf16.mxu0 0
  %213 = vmatpush1.bf16.msra.mxu0 %v187
  %214 = vmatprep.subr.bf16.mxu0 0
  %215 = vmatpush1.bf16.msra.mxu0 %v186
  %216 = vmatprep.subr.bf16.mxu0 0
  %217 = vmatpush1.bf16.msra.mxu0 %v185
  %218 = vmatprep.subr.bf16.mxu0 0
  %219 = vmatpush1.bf16.msra.mxu0 %v184
  %220 = vmatprep.subr.bf16.mxu0 0
  %221 = vmatpush1.bf16.msra.mxu0 %v183
  %222 = vmatprep.subr.bf16.mxu0 0
  %223 = vmatpush1.bf16.msra.mxu0 %v182
  %224 = vmatprep.subr.bf16.mxu0 0
  %225 = vmatpush1.bf16.msra.mxu0 %v181
  %226 = vmatprep.subr.bf16.mxu0 0
  %227 = vmatpush1.bf16.msra.mxu0 %v180
  %228 = vmatprep.subr.bf16.mxu0 0
  %229 = vmatpush2.bf16.msra.mxu0 %v195
  %230 = vmatprep.subr.bf16.mxu0 0
  %231 = vmatpush2.bf16.msra.mxu0 %v194
  %232 = vmatprep.subr.bf16.mxu0 0
  %233 = vmatpush2.bf16.msra.mxu0 %v193
  %234 = vmatprep.subr.bf16.mxu0 0
  %235 = vmatpush2.bf16.msra.mxu0 %v192
  %236 = vmatprep.subr.bf16.mxu0 0
  %237 = vmatpush2.bf16.msra.mxu0 %v191
  %238 = vmatprep.subr.bf16.mxu0 0
  %239 = vmatpush2.bf16.msra.mxu0 %v190
  %240 = vmatprep.subr.bf16.mxu0 0
  %241 = vmatpush2.bf16.msra.mxu0 %v189
  %242 = vmatprep.subr.bf16.mxu0 0
  %243 = vmatpush2.bf16.msra.mxu0 %v188
  %244 = vmatprep.mubr.bf16.mxu0 %v69
  %245 = vmatmul.mubr.bf16.gmra.mxu0 %v68
  %v246 = vpop.f32.mrf.mxu0
  %v247 = vadd.f32 0.0, %v246
  %v248 = vpop.f32.mrf.mxu0
  %v249 = vpop.f32.mrf.mxu0
  %v250 = vadd.f32 0.0, %v249
  %v251 = vpop.f32.mrf.mxu0
  %252 = vmatprep.mubr.bf16.mxu0 %v71
  %253 = vmatmul.mubr.bf16.gmra.mxu0 %v70
  %v254 = vpop.f32.mrf.mxu0
  %v255 = vadd.f32 0.0, %v254
  %v256 = vpop.f32.mrf.mxu0
  %v257 = vpop.f32.mrf.mxu0
  %v258 = vadd.f32 0.0, %v257
  %v259 = vpop.f32.mrf.mxu0
  %260 = vmatprep.mubr.bf16.mxu0 %v73
  %261 = vmatmul.mubr.bf16.gmra.mxu0 %v72
  %v262 = vpop.f32.mrf.mxu0
  %v263 = vadd.f32 0.0, %v262
  %v264 = vpop.f32.mrf.mxu0
  %v265 = vpop.f32.mrf.mxu0
  %v266 = vadd.f32 0.0, %v265
  %v267 = vpop.f32.mrf.mxu0
  %268 = vmatprep.mubr.bf16.mxu0 %v75
  %269 = vmatmul.mubr.bf16.gmra.mxu0 %v74
  %v270 = vpop.f32.mrf.mxu0
  %v271 = vadd.f32 0.0, %v270
  %v272 = vpop.f32.mrf.mxu0
  %v273 = vpop.f32.mrf.mxu0
  %v274 = vadd.f32 0.0, %v273
  %v275 = vpop.f32.mrf.mxu0
  %276 = vmatprep.mubr.bf16.mxu0 %v77
  %277 = vmatmul.mubr.bf16.gmra.mxu0 %v76
  %v278 = vpop.f32.mrf.mxu0
  %v279 = vadd.f32 0.0, %v278
  %v280 = vpop.f32.mrf.mxu0
  %v281 = vpop.f32.mrf.mxu0
  %v282 = vadd.f32 0.0, %v281
  %v283 = vpop.f32.mrf.mxu0
  %284 = vmatprep.mubr.bf16.mxu0 %v79
  %285 = vmatmul.mubr.bf16.gmra.mxu0 %v78
  %v286 = vpop.f32.mrf.mxu0
  %v287 = vadd.f32 0.0, %v286
  %v288 = vpop.f32.mrf.mxu0
  %v289 = vpop.f32.mrf.mxu0
  %v290 = vadd.f32 0.0, %v289
  %v291 = vpop.f32.mrf.mxu0
  %292 = vmatprep.mubr.bf16.mxu0 %v81
  %293 = vmatmul.mubr.bf16.gmra.mxu0 %v80
  %v294 = vpop.f32.mrf.mxu0
  %v295 = vadd.f32 0.0, %v294
  %v296 = vpop.f32.mrf.mxu0
  %v297 = vpop.f32.mrf.mxu0
  %v298 = vadd.f32 0.0, %v297
  %v299 = vpop.f32.mrf.mxu0
  %300 = vmatprep.mubr.bf16.mxu0 %v83
  %301 = vmatmul.mubr.bf16.gmra.mxu0 %v82
  %v302 = vpop.f32.mrf.mxu0
  %v303 = vadd.f32 0.0, %v302
  %v304 = vpop.f32.mrf.mxu0
  %v305 = vpop.f32.mrf.mxu0
  %v306 = vadd.f32 0.0, %v305
  %v307 = vpop.f32.mrf.mxu0
  %308 = vdwg.mxu0
  %v309 = vld [vmem:[%s4] sm:$0x1]
  %v310 = vld [vmem:[%s5] sm:$0x1]
  %vm311 = vcmask 523264
  %v312 = vsel %vm311, %v247, 0.0
  %v313 = vsel %vm311, %v250, 0.0
  %v314 = vadd.f32 %v312, %v313
  %v315 = vsel %vm311, %v255, 0.0
  %v316 = vadd.f32 %v314, %v315
  %v317 = vsel %vm311, %v258, 0.0
  %v318 = vadd.f32 %v316, %v317
  %v319 = vsel %vm311, %v263, 0.0
  %v320 = vadd.f32 %v318, %v319
  %v321 = vsel %vm311, %v266, 0.0
  %v322 = vadd.f32 %v320, %v321
  %v323 = vsel %vm311, %v271, 0.0
  %v324 = vadd.f32 %v322, %v323
  %v325 = vsel %vm311, %v274, 0.0
  %v326 = vadd.f32 %v324, %v325
  %v327 = vsel %vm311, %v279, 0.0
  %v328 = vadd.f32 %v326, %v327
  %v329 = vsel %vm311, %v282, 0.0
  %v330 = vadd.f32 %v328, %v329
  %v331 = vsel %vm311, %v287, 0.0
  %v332 = vadd.f32 %v330, %v331
  %v333 = vsel %vm311, %v290, 0.0
  %v334 = vadd.f32 %v332, %v333
  %v335 = vsel %vm311, %v295, 0.0
  %v336 = vadd.f32 %v334, %v335
  %v337 = vsel %vm311, %v298, 0.0
  %v338 = vadd.f32 %v336, %v337
  %v339 = vsel %vm311, %v303, 0.0
  %v340 = vadd.f32 %v338, %v339
  %v341 = vsel %vm311, %v306, 0.0
  %v342 = vadd.f32 %v340, %v341
  %v343 = vrot.slane %v342, 4
  %v344 = vadd.f32 %v342, %v343
  %v345 = vrot.slane %v344, 2
  %v346 = vadd.f32 %v344, %v345
  %v347 = vrot.slane %v346, 1
  %v348 = vadd.f32 %v346, %v347
  %350 = vrot.lane.b32.xlu0 %v348, 120
  %v351 = vpop.permute.xlu0 %350
  %v353 = vadd.f32 %v348, %v351
  %354 = vrot.lane.b32.xlu0 %v348, 112
  %v355 = vpop.permute.xlu0 %354
  %v357 = vadd.f32 %v353, %v355
  %358 = vrot.lane.b32.xlu0 %v348, 104
  %v359 = vpop.permute.xlu0 %358
  %v361 = vadd.f32 %v357, %v359
  %362 = vrot.lane.b32.xlu0 %v348, 96
  %v363 = vpop.permute.xlu0 %362
  %v365 = vadd.f32 %v361, %v363
  %366 = vrot.lane.b32.xlu0 %v348, 88
  %v367 = vpop.permute.xlu0 %366
  %v369 = vadd.f32 %v365, %v367
  %370 = vrot.lane.b32.xlu0 %v348, 80
  %v371 = vpop.permute.xlu0 %370
  %v373 = vadd.f32 %v369, %v371
  %374 = vrot.lane.b32.xlu0 %v348, 72
  %v375 = vpop.permute.xlu0 %374
  %v377 = vadd.f32 %v373, %v375
  %v378 = vrcp.pop 1024.0
  %v379 = vmul.f32 %v377, %v378
  %381 = vrot.lane.b32.xlu0 %v379, 8
  %v382 = vpop.permute.xlu0 %381
  %384 = vrot.lane.b32.xlu0 %v379, 16
  %v385 = vpop.permute.xlu0 %384
  %387 = vrot.lane.b32.xlu0 %v379, 24
  %v388 = vpop.permute.xlu0 %387
  %390 = vrot.lane.b32.xlu0 %v379, 32
  %v391 = vpop.permute.xlu0 %390
  %393 = vrot.lane.b32.xlu0 %v379, 40
  %v394 = vpop.permute.xlu0 %393
  %396 = vrot.lane.b32.xlu0 %v379, 48
  %v397 = vpop.permute.xlu0 %396
  %399 = vrot.lane.b32.xlu0 %v379, 56
  %v400 = vpop.permute.xlu0 %399
  %vm402 = vcmask 64512
  %v403 = vsel %vm402, %v379, %v382
  %vm404 = vcmask 130048
  %v405 = vsel %vm404, %v403, %v385
  %vm406 = vcmask 195584
  %v407 = vsel %vm406, %v405, %v388
  %vm408 = vcmask 261120
  %v409 = vsel %vm408, %v407, %v391
  %vm410 = vcmask 326656
  %v411 = vsel %vm410, %v409, %v394
  %vm412 = vcmask 392192
  %v413 = vsel %vm412, %v411, %v397
  %vm414 = vcmask 457728
  %v415 = vsel %vm414, %v413, %v400
  %v416 = vlaneseq
  %v417 = vshrl.u32 %v416, 7
  %v418 = vsub.s32 0, %v417
  %v419 = vrot.slane %v415, %v418
  %v420 = vsub.f32 %v247, %v419
  %v421 = vsub.f32 %v250, %v419
  %v422 = vsub.f32 %v255, %v419
  %v423 = vsub.f32 %v258, %v419
  %v424 = vsub.f32 %v263, %v419
  %v425 = vsub.f32 %v266, %v419
  %v426 = vsub.f32 %v271, %v419
  %v427 = vsub.f32 %v274, %v419
  %v428 = vsub.f32 %v279, %v419
  %v429 = vsub.f32 %v282, %v419
  %v430 = vsub.f32 %v287, %v419
  %v431 = vsub.f32 %v290, %v419
  %v432 = vsub.f32 %v295, %v419
  %v433 = vsub.f32 %v298, %v419
  %v434 = vsub.f32 %v303, %v419
  %v435 = vsub.f32 %v306, %v419
  %v436 = vmul.f32 %v420, %v420
  %v437 = vmul.f32 %v421, %v421
  %v438 = vmul.f32 %v422, %v422
  %v439 = vmul.f32 %v423, %v423
  %v440 = vmul.f32 %v424, %v424
  %v441 = vmul.f32 %v425, %v425
  %v442 = vmul.f32 %v426, %v426
  %v443 = vmul.f32 %v427, %v427
  %v444 = vmul.f32 %v428, %v428
  %v445 = vmul.f32 %v429, %v429
  %v446 = vmul.f32 %v430, %v430
  %v447 = vmul.f32 %v431, %v431
  %v448 = vmul.f32 %v432, %v432
  %v449 = vmul.f32 %v433, %v433
  %v450 = vmul.f32 %v434, %v434
  %v451 = vmul.f32 %v435, %v435
  %v452 = vsel %vm311, %v436, 0.0
  %v453 = vsel %vm311, %v437, 0.0
  %v454 = vadd.f32 %v452, %v453
  %v455 = vsel %vm311, %v438, 0.0
  %v456 = vadd.f32 %v454, %v455
  %v457 = vsel %vm311, %v439, 0.0
  %v458 = vadd.f32 %v456, %v457
  %v459 = vsel %vm311, %v440, 0.0
  %v460 = vadd.f32 %v458, %v459
  %v461 = vsel %vm311, %v441, 0.0
  %v462 = vadd.f32 %v460, %v461
  %v463 = vsel %vm311, %v442, 0.0
  %v464 = vadd.f32 %v462, %v463
  %v465 = vsel %vm311, %v443, 0.0
  %v466 = vadd.f32 %v464, %v465
  %v467 = vsel %vm311, %v444, 0.0
  %v468 = vadd.f32 %v466, %v467
  %v469 = vsel %vm311, %v445, 0.0
  %v470 = vadd.f32 %v468, %v469
  %v471 = vsel %vm311, %v446, 0.0
  %v472 = vadd.f32 %v470, %v471
  %v473 = vsel %vm311, %v447, 0.0
  %v474 = vadd.f32 %v472, %v473
  %v475 = vsel %vm311, %v448, 0.0
  %v476 = vadd.f32 %v474, %v475
  %v477 = vsel %vm311, %v449, 0.0
  %v478 = vadd.f32 %v476, %v477
  %v479 = vsel %vm311, %v450, 0.0
  %v480 = vadd.f32 %v478, %v479
  %v481 = vsel %vm311, %v451, 0.0
  %v482 = vadd.f32 %v480, %v481
  %v483 = vrot.slane %v482, 4
  %v484 = vadd.f32 %v482, %v483
  %v485 = vrot.slane %v484, 2
  %v486 = vadd.f32 %v484, %v485
  %v487 = vrot.slane %v486, 1
  %v488 = vadd.f32 %v486, %v487
  %490 = vrot.lane.b32.xlu0 %v488, 120
  %v491 = vpop.permute.xlu0 %490
  %v493 = vadd.f32 %v488, %v491
  %494 = vrot.lane.b32.xlu0 %v488, 112
  %v495 = vpop.permute.xlu0 %494
  %v497 = vadd.f32 %v493, %v495
  %498 = vrot.lane.b32.xlu0 %v488, 104
  %v499 = vpop.permute.xlu0 %498
  %v501 = vadd.f32 %v497, %v499
  %502 = vrot.lane.b32.xlu0 %v488, 96
  %v503 = vpop.permute.xlu0 %502
  %v505 = vadd.f32 %v501, %v503
  %506 = vrot.lane.b32.xlu0 %v488, 88
  %v507 = vpop.permute.xlu0 %506
  %v509 = vadd.f32 %v505, %v507
  %510 = vrot.lane.b32.xlu0 %v488, 80
  %v511 = vpop.permute.xlu0 %510
  %v513 = vadd.f32 %v509, %v511
  %514 = vrot.lane.b32.xlu0 %v488, 72
  %v515 = vpop.permute.xlu0 %514
  %v517 = vadd.f32 %v513, %v515
  %v518 = vmul.f32 %v517, %v378
  %v519 = vadd.f32 %v518, 1e-05
  %v520 = vrsqrt.pop %v519
  %v521 = vmul.f32 %v309, %v520
  %v522 = vmul.f32 %v379, %v521
  %v523 = vsub.f32 %v310, %v522
  %v525 = vlaneseq
  %v526 = vshrl.u32 %v525, 7
  %v527 = vsub.s32 0, %v526
  %v528 = vrot.slane %v521, %v527
  %529 = vrot.lane.b32.xlu0 %v528, 8
  %v530 = vpop.permute.xlu0 %529
  %532 = vrot.lane.b32.xlu0 %v528, 16
  %v533 = vpop.permute.xlu0 %532
  %535 = vrot.lane.b32.xlu0 %v528, 24
  %v536 = vpop.permute.xlu0 %535
  %538 = vrot.lane.b32.xlu0 %v528, 32
  %v539 = vpop.permute.xlu0 %538
  %541 = vrot.lane.b32.xlu0 %v528, 40
  %v542 = vpop.permute.xlu0 %541
  %544 = vrot.lane.b32.xlu0 %v528, 48
  %v545 = vpop.permute.xlu0 %544
  %547 = vrot.lane.b32.xlu0 %v528, 56
  %v548 = vpop.permute.xlu0 %547
  %v550 = vsel %vm402, %v521, %v530
  %v551 = vsel %vm404, %v550, %v533
  %v552 = vsel %vm406, %v551, %v536
  %v553 = vsel %vm408, %v552, %v539
  %v554 = vsel %vm410, %v553, %v542
  %v555 = vsel %vm412, %v554, %v545
  %v556 = vsel %vm414, %v555, %v548
  %v557 = vlaneseq
  %v558 = vshrl.u32 %v557, 7
  %v559 = vsub.s32 0, %v558
  %v560 = vrot.slane %v556, %v559
  %v561 = vmul.f32 %v247, %v560
  %v562 = vmul.f32 %v250, %v560
  %v563 = vmul.f32 %v255, %v560
  %v564 = vmul.f32 %v258, %v560
  %v565 = vmul.f32 %v263, %v560
  %v566 = vmul.f32 %v266, %v560
  %v567 = vmul.f32 %v271, %v560
  %v568 = vmul.f32 %v274, %v560
  %v569 = vmul.f32 %v279, %v560
  %v570 = vmul.f32 %v282, %v560
  %v571 = vmul.f32 %v287, %v560
  %v572 = vmul.f32 %v290, %v560
  %v573 = vmul.f32 %v295, %v560
  %v574 = vmul.f32 %v298, %v560
  %v575 = vmul.f32 %v303, %v560
  %v576 = vmul.f32 %v306, %v560
  %v578 = vlaneseq
  %v579 = vshrl.u32 %v578, 7
  %v580 = vsub.s32 0, %v579
  %v581 = vrot.slane %v523, %v580
  %582 = vrot.lane.b32.xlu0 %v581, 8
  %v583 = vpop.permute.xlu0 %582
  %585 = vrot.lane.b32.xlu0 %v581, 16
  %v586 = vpop.permute.xlu0 %585
  %588 = vrot.lane.b32.xlu0 %v581, 24
  %v589 = vpop.permute.xlu0 %588
  %591 = vrot.lane.b32.xlu0 %v581, 32
  %v592 = vpop.permute.xlu0 %591
  %594 = vrot.lane.b32.xlu0 %v581, 40
  %v595 = vpop.permute.xlu0 %594
  %597 = vrot.lane.b32.xlu0 %v581, 48
  %v598 = vpop.permute.xlu0 %597
  %600 = vrot.lane.b32.xlu0 %v581, 56
  %v601 = vpop.permute.xlu0 %600
  %v603 = vsel %vm402, %v523, %v583
  %v604 = vsel %vm404, %v603, %v586
  %v605 = vsel %vm406, %v604, %v589
  %v606 = vsel %vm408, %v605, %v592
  %v607 = vsel %vm410, %v606, %v595
  %v608 = vsel %vm412, %v607, %v598
  %v609 = vsel %vm414, %v608, %v601
  %v610 = vlaneseq
  %v611 = vshrl.u32 %v610, 7
  %v612 = vsub.s32 0, %v611
  %v613 = vrot.slane %v609, %v612
  %v614 = vadd.f32 %v561, %v613
  %v615 = vadd.f32 %v562, %v613
  %v616 = vadd.f32 %v563, %v613
  %v617 = vadd.f32 %v564, %v613
  %v618 = vadd.f32 %v565, %v613
  %v619 = vadd.f32 %v566, %v613
  %v620 = vadd.f32 %v567, %v613
  %v621 = vadd.f32 %v568, %v613
  %v622 = vadd.f32 %v569, %v613
  %v623 = vadd.f32 %v570, %v613
  %v624 = vadd.f32 %v571, %v613
  %v625 = vadd.f32 %v572, %v613
  %v626 = vadd.f32 %v573, %v613
  %v627 = vadd.f32 %v574, %v613
  %v628 = vadd.f32 %v575, %v613
  %v629 = vadd.f32 %v576, %v613
  %v630 = vmax.f32 %v614, 0.0
  %v631 = vmax.f32 %v615, 0.0
  %v632 = vmax.f32 %v616, 0.0
  %v633 = vmax.f32 %v617, 0.0
  %v634 = vmax.f32 %v618, 0.0
  %v635 = vmax.f32 %v619, 0.0
  %v636 = vmax.f32 %v620, 0.0
  %v637 = vmax.f32 %v621, 0.0
  %v638 = vmax.f32 %v622, 0.0
  %v639 = vmax.f32 %v623, 0.0
  %v640 = vmax.f32 %v624, 0.0
  %v641 = vmax.f32 %v625, 0.0
  %v642 = vmax.f32 %v626, 0.0
  %v643 = vmax.f32 %v627, 0.0
  %v644 = vmax.f32 %v628, 0.0
  %v645 = vmax.f32 %v629, 0.0
  %646 = vst.msk [vmem:[#allocation2] sm:$0xff] %vm311, 0.0
  %vm647 = vcmask 517120
  %648 = vst.msk [vmem:[#allocation2 + $0x8] sm:$0x3] %vm647, 0.0
  %649 = vst.msk [vmem:[#allocation2 + $0xa0] sm:$0xff] %vm311, 0.0
  %650 = vst.msk [vmem:[#allocation2 + $0xa8] sm:$0x3] %vm647, 0.0
  %s651 = scalar_lea.vmem [#allocation2], 144
  %652 = vst.msk [vmem:[%s651] sm:$0xff] %vm311, 0.0
  %653 = vst.msk [vmem:[%s651 + $0x8] sm:$0x3] %vm647, 0.0
  %654 = vst.msk [vmem:[%s651 + $0xa0] sm:$0xff] %vm311, 0.0
  %655 = vst.msk [vmem:[%s651 + $0xa8] sm:$0x3] %vm647, 0.0
  %vm656 = vcmask 516096
  %657 = vst.msk [vmem:[#allocation2] sm:$0x1] %vm656, 0.0
  %658 = vst.msk [vmem:[#allocation2 + $0x10] sm:$0x1] %vm656, 0.0
  %659 = vst.msk [vmem:[#allocation2 + $0x20] sm:$0x1] %vm656, 0.0
  %660 = vst.msk [vmem:[#allocation2 + $0x30] sm:$0x1] %vm656, 0.0
  %661 = vst.msk [vmem:[#allocation2 + $0x40] sm:$0x1] %vm656, 0.0
  %662 = vst.msk [vmem:[#allocation2 + $0x50] sm:$0x1] %vm656, 0.0
  %663 = vst.msk [vmem:[#allocation2 + $0x60] sm:$0x1] %vm656, 0.0
  %664 = vst.msk [vmem:[#allocation2 + $0x70] sm:$0x1] %vm656, 0.0
  %665 = vst.msk [vmem:[#allocation2 + $0x80] sm:$0x1] %vm656, 0.0
  %666 = vst.msk [vmem:[#allocation2 + $0x90] sm:$0x1] %vm656, 0.0
  %667 = vst.msk [vmem:[#allocation2 + $0xa0] sm:$0x1] %vm656, 0.0
  %668 = vst.msk [vmem:[#allocation2 + $0xb0] sm:$0x1] %vm656, 0.0
  %669 = vst.msk [vmem:[#allocation2 + $0xc0] sm:$0x1] %vm656, 0.0
  %670 = vst.msk [vmem:[#allocation2 + $0xd0] sm:$0x1] %vm656, 0.0
  %671 = vst.msk [vmem:[#allocation2 + $0xe0] sm:$0x1] %vm656, 0.0
  %672 = vst.msk [vmem:[#allocation2 + $0xf0] sm:$0x1] %vm656, 0.0
  %673 = vst.msk [vmem:[#allocation2 + $0x100] sm:$0x1] %vm656, 0.0
  %674 = vst.msk [vmem:[#allocation2 + $0x110] sm:$0x1] %vm656, 0.0
  %675 = vst.msk [vmem:[#allocation2 + $0x120] sm:$0x1] %vm656, 0.0
  %676 = vst.msk [vmem:[#allocation2 + $0x130] sm:$0x1] %vm656, 0.0
  %677 = vst.msk [vmem:[#allocation2 + $0x9] sm:$0x1] %vm656, 0.0
  %678 = vst.msk [vmem:[#allocation2 + $0x19] sm:$0x1] %vm656, 0.0
  %679 = vst.msk [vmem:[#allocation2 + $0x29] sm:$0x1] %vm656, 0.0
  %680 = vst.msk [vmem:[#allocation2 + $0x39] sm:$0x1] %vm656, 0.0
  %681 = vst.msk [vmem:[#allocation2 + $0x49] sm:$0x1] %vm656, 0.0
  %682 = vst.msk [vmem:[#allocation2 + $0x59] sm:$0x1] %vm656, 0.0
  %683 = vst.msk [vmem:[#allocation2 + $0x69] sm:$0x1] %vm656, 0.0
  %684 = vst.msk [vmem:[#allocation2 + $0x79] sm:$0x1] %vm656, 0.0
  %685 = vst.msk [vmem:[#allocation2 + $0x89] sm:$0x1] %vm656, 0.0
  %686 = vst.msk [vmem:[#allocation2 + $0x99] sm:$0x1] %vm656, 0.0
  %687 = vst.msk [vmem:[#allocation2 + $0xa9] sm:$0x1] %vm656, 0.0
  %688 = vst.msk [vmem:[#allocation2 + $0xb9] sm:$0x1] %vm656, 0.0
  %689 = vst.msk [vmem:[#allocation2 + $0xc9] sm:$0x1] %vm656, 0.0
  %690 = vst.msk [vmem:[#allocation2 + $0xd9] sm:$0x1] %vm656, 0.0
  %691 = vst.msk [vmem:[#allocation2 + $0xe9] sm:$0x1] %vm656, 0.0
  %692 = vst.msk [vmem:[#allocation2 + $0xf9] sm:$0x1] %vm656, 0.0
  %693 = vst.msk [vmem:[#allocation2 + $0x109] sm:$0x1] %vm656, 0.0
  %694 = vst.msk [vmem:[#allocation2 + $0x119] sm:$0x1] %vm656, 0.0
  %695 = vst.msk [vmem:[#allocation2 + $0x129] sm:$0x1] %vm656, 0.0
  %696 = vst.msk [vmem:[#allocation2 + $0x139] sm:$0x1] %vm656, 0.0
  %s697 = scalar_lea.vmem [#allocation2], 16
  %698 = vst.msk [vmem:[%s697 + $0x1] sm:$0xff] %vm311, %v630
  %699 = vst.msk [vmem:[%s697 + $0x11] sm:$0xff] %vm311, %v631
  %700 = vst.msk [vmem:[%s697 + $0x21] sm:$0xff] %vm311, %v632
  %701 = vst.msk [vmem:[%s697 + $0x31] sm:$0xff] %vm311, %v633
  %702 = vst.msk [vmem:[%s697 + $0x41] sm:$0xff] %vm311, %v634
  %703 = vst.msk [vmem:[%s697 + $0x51] sm:$0xff] %vm311, %v635
  %704 = vst.msk [vmem:[%s697 + $0x61] sm:$0xff] %vm311, %v636
  %705 = vst.msk [vmem:[%s697 + $0x71] sm:$0xff] %vm311, %v637
  %706 = vst.msk [vmem:[%s697 + $0xa1] sm:$0xff] %vm311, %v638
  %707 = vst.msk [vmem:[%s697 + $0xb1] sm:$0xff] %vm311, %v639
  %708 = vst.msk [vmem:[%s697 + $0xc1] sm:$0xff] %vm311, %v640
  %709 = vst.msk [vmem:[%s697 + $0xd1] sm:$0xff] %vm311, %v641
  %710 = vst.msk [vmem:[%s697 + $0xe1] sm:$0xff] %vm311, %v642
  %711 = vst.msk [vmem:[%s697 + $0xf1] sm:$0xff] %vm311, %v643
  %712 = vst.msk [vmem:[%s697 + $0x101] sm:$0xff] %vm311, %v644
  %713 = vst.msk [vmem:[%s697 + $0x111] sm:$0xff] %vm311, %v645
  %v714 = vld [vmem:[#allocation2] sm:$0xff]
  %v715 = vld [vmem:[#allocation2 + $0x10] sm:$0xff]
  %v716 = vld [vmem:[#allocation2 + $0x20] sm:$0xff]
  %v717 = vld [vmem:[#allocation2 + $0x30] sm:$0xff]
  %v718 = vld [vmem:[#allocation2 + $0x40] sm:$0xff]
  %v719 = vld [vmem:[#allocation2 + $0x50] sm:$0xff]
  %v720 = vld [vmem:[#allocation2 + $0x60] sm:$0xff]
  %v721 = vld [vmem:[#allocation2 + $0x70] sm:$0xff]
  %v722 = vld [vmem:[#allocation2 + $0xa0] sm:$0xff]
  %v723 = vld [vmem:[#allocation2 + $0xb0] sm:$0xff]
  %v724 = vld [vmem:[#allocation2 + $0xc0] sm:$0xff]
  %v725 = vld [vmem:[#allocation2 + $0xd0] sm:$0xff]
  %v726 = vld [vmem:[#allocation2 + $0xe0] sm:$0xff]
  %v727 = vld [vmem:[#allocation2 + $0xf0] sm:$0xff]
  %v728 = vld [vmem:[#allocation2 + $0x100] sm:$0xff]
  %v729 = vld [vmem:[#allocation2 + $0x110] sm:$0xff]
  %v730 = vpack.c.bf16 %v715, %v714
  %v731 = vpack.c.bf16 %v717, %v716
  %v732 = vpack.c.bf16 %v719, %v718
  %v733 = vpack.c.bf16 %v721, %v720
  %v734 = vpack.c.bf16 %v723, %v722
  %v735 = vpack.c.bf16 %v725, %v724
  %v736 = vpack.c.bf16 %v727, %v726
  %v737 = vpack.c.bf16 %v729, %v728
  %v738 = vld [vmem:[%s2] sm:$0xf]
  %v739 = vld [vmem:[%s2 + $0x4] sm:$0xf]
  %v740 = vld [vmem:[%s2 + $0x8] sm:$0xf]
  %v741 = vld [vmem:[%s2 + $0xc] sm:$0xf]
  %v742 = vld [vmem:[%s2 + $0x10] sm:$0xf]
  %v743 = vld [vmem:[%s2 + $0x14] sm:$0xf]
  %v744 = vld [vmem:[%s2 + $0x18] sm:$0xf]
  %v745 = vld [vmem:[%s2 + $0x1c] sm:$0xf]
  %v746 = vld [vmem:[#allocation2 + $0x1] sm:$0xff]
  %v747 = vld [vmem:[#allocation2 + $0x11] sm:$0xff]
  %v748 = vld [vmem:[#allocation2 + $0x21] sm:$0xff]
  %v749 = vld [vmem:[#allocation2 + $0x31] sm:$0xff]
  %v750 = vld [vmem:[#allocation2 + $0x41] sm:$0xff]
  %v751 = vld [vmem:[#allocation2 + $0x51] sm:$0xff]
  %v752 = vld [vmem:[#allocation2 + $0x61] sm:$0xff]
  %v753 = vld [vmem:[#allocation2 + $0x71] sm:$0xff]
  %v754 = vld [vmem:[#allocation2 + $0xa1] sm:$0xff]
  %v755 = vld [vmem:[#allocation2 + $0xb1] sm:$0xff]
  %v756 = vld [vmem:[#allocation2 + $0xc1] sm:$0xff]
  %v757 = vld [vmem:[#allocation2 + $0xd1] sm:$0xff]
  %v758 = vld [vmem:[#allocation2 + $0xe1] sm:$0xff]
  %v759 = vld [vmem:[#allocation2 + $0xf1] sm:$0xff]
  %v760 = vld [vmem:[#allocation2 + $0x101] sm:$0xff]
  %v761 = vld [vmem:[#allocation2 + $0x111] sm:$0xff]
  %v762 = vpack.c.bf16 %v747, %v746
  %v763 = vpack.c.bf16 %v749, %v748
  %v764 = vpack.c.bf16 %v751, %v750
  %v765 = vpack.c.bf16 %v753, %v752
  %v766 = vpack.c.bf16 %v755, %v754
  %v767 = vpack.c.bf16 %v757, %v756
  %v768 = vpack.c.bf16 %v759, %v758
  %v769 = vpack.c.bf16 %v761, %v760
  %v770 = vld [vmem:[%s2 + $0x20] sm:$0xf]
  %v771 = vld [vmem:[%s2 + $0x24] sm:$0xf]
  %v772 = vld [vmem:[%s2 + $0x28] sm:$0xf]
  %v773 = vld [vmem:[%s2 + $0x2c] sm:$0xf]
  %v774 = vld [vmem:[%s2 + $0x30] sm:$0xf]
  %v775 = vld [vmem:[%s2 + $0x34] sm:$0xf]
  %v776 = vld [vmem:[%s2 + $0x38] sm:$0xf]
  %v777 = vld [vmem:[%s2 + $0x3c] sm:$0xf]
  %v786 = vunpack.c.l.b16 %v770
  %v787 = vunpack.c.l.b16 %v771
  %v788 = vunpack.c.l.b16 %v772
  %v789 = vunpack.c.l.b16 %v773
  %v790 = vunpack.c.l.b16 %v774
  %v791 = vunpack.c.l.b16 %v775
  %v792 = vunpack.c.l.b16 %v776
  %v793 = vunpack.c.l.b16 %v777
  %v794 = vpack.c.b16 %v787, %v786
  %v795 = vpack.c.b16 %v789, %v788
  %v796 = vpack.c.b16 %v791, %v790
  %v797 = vpack.c.b16 %v793, %v792
  %v803 = vsel %vm311, %v762, 0
  %v806 = vsel %vm311, %v763, 0
  %v809 = vsel %vm311, %v764, 0
  %v812 = vsel %vm311, %v765, 0
  %v815 = vsel %vm311, %v766, 0
  %v818 = vsel %vm311, %v767, 0
  %v821 = vsel %vm311, %v768, 0
  %v824 = vsel %vm311, %v769, 0
  %826 = vmatprep.subr.bf16.mxu0 0
  %827 = vmatpush1.bf16.msra.mxu0 0
  %828 = vmatprep.subr.bf16.mxu0 0
  %829 = vmatpush1.bf16.msra.mxu0 0
  %830 = vmatprep.subr.bf16.mxu0 0
  %831 = vmatpush1.bf16.msra.mxu0 0
  %832 = vmatprep.subr.bf16.mxu0 0
  %833 = vmatpush1.bf16.msra.mxu0 0
  %834 = vmatprep.subr.bf16.mxu0 0
  %835 = vmatpush1.bf16.msra.mxu0 %v797
  %836 = vmatprep.subr.bf16.mxu0 0
  %837 = vmatpush1.bf16.msra.mxu0 %v796
  %838 = vmatprep.subr.bf16.mxu0 0
  %839 = vmatpush1.bf16.msra.mxu0 %v795
  %840 = vmatprep.subr.bf16.mxu0 0
  %841 = vmatpush1.bf16.msra.mxu0 %v794
  %842 = vmatprep.subr.bf16.mxu0 0
  %843 = vmatpush2.bf16.msra.mxu0 0
  %844 = vmatprep.subr.bf16.mxu0 0
  %845 = vmatpush2.bf16.msra.mxu0 0
  %846 = vmatprep.subr.bf16.mxu0 0
  %847 = vmatpush2.bf16.msra.mxu0 0
  %848 = vmatprep.subr.bf16.mxu0 0
  %849 = vmatpush2.bf16.msra.mxu0 0
  %850 = vmatprep.subr.bf16.mxu0 0
  %851 = vmatpush2.bf16.msra.mxu0 0
  %852 = vmatprep.subr.bf16.mxu0 0
  %853 = vmatpush2.bf16.msra.mxu0 0
  %854 = vmatprep.subr.bf16.mxu0 0
  %855 = vmatpush2.bf16.msra.mxu0 0
  %856 = vmatprep.subr.bf16.mxu0 0
  %857 = vmatpush2.bf16.msra.mxu0 0
  %858 = vmatprep.mubr.bf16.mxu0 0
  %859 = vmatmul.mubr.bf16.gmra.mxu0 %v803
  %v860 = vpop.f32.mrf.mxu0
  %v861 = vadd.f32 0.0, %v860
  %v862 = vpop.f32.mrf.mxu0
  %v863 = vpop.f32.mrf.mxu0
  %v864 = vadd.f32 0.0, %v863
  %v865 = vpop.f32.mrf.mxu0
  %866 = vmatprep.mubr.bf16.mxu0 0
  %867 = vmatmul.mubr.bf16.gmra.mxu0 %v806
  %v868 = vpop.f32.mrf.mxu0
  %v869 = vadd.f32 0.0, %v868
  %v870 = vpop.f32.mrf.mxu0
  %v871 = vpop.f32.mrf.mxu0
  %v872 = vadd.f32 0.0, %v871
  %v873 = vpop.f32.mrf.mxu0
  %874 = vmatprep.mubr.bf16.mxu0 0
  %875 = vmatmul.mubr.bf16.gmra.mxu0 %v809
  %v876 = vpop.f32.mrf.mxu0
  %v877 = vadd.f32 0.0, %v876
  %v878 = vpop.f32.mrf.mxu0
  %v879 = vpop.f32.mrf.mxu0
  %v880 = vadd.f32 0.0, %v879
  %v881 = vpop.f32.mrf.mxu0
  %882 = vmatprep.mubr.bf16.mxu0 0
  %883 = vmatmul.mubr.bf16.gmra.mxu0 %v812
  %v884 = vpop.f32.mrf.mxu0
  %v885 = vadd.f32 0.0, %v884
  %v886 = vpop.f32.mrf.mxu0
  %v887 = vpop.f32.mrf.mxu0
  %v888 = vadd.f32 0.0, %v887
  %v889 = vpop.f32.mrf.mxu0
  %890 = vmatprep.mubr.bf16.mxu0 0
  %891 = vmatmul.mubr.bf16.gmra.mxu0 %v815
  %v892 = vpop.f32.mrf.mxu0
  %v893 = vadd.f32 0.0, %v892
  %v894 = vpop.f32.mrf.mxu0
  %v895 = vpop.f32.mrf.mxu0
  %v896 = vadd.f32 0.0, %v895
  %v897 = vpop.f32.mrf.mxu0
  %898 = vmatprep.mubr.bf16.mxu0 0
  %899 = vmatmul.mubr.bf16.gmra.mxu0 %v818
  %v900 = vpop.f32.mrf.mxu0
  %v901 = vadd.f32 0.0, %v900
  %v902 = vpop.f32.mrf.mxu0
  %v903 = vpop.f32.mrf.mxu0
  %v904 = vadd.f32 0.0, %v903
  %v905 = vpop.f32.mrf.mxu0
  %906 = vmatprep.mubr.bf16.mxu0 0
  %907 = vmatmul.mubr.bf16.gmra.mxu0 %v821
  %v908 = vpop.f32.mrf.mxu0
  %v909 = vadd.f32 0.0, %v908
  %v910 = vpop.f32.mrf.mxu0
  %v911 = vpop.f32.mrf.mxu0
  %v912 = vadd.f32 0.0, %v911
  %v913 = vpop.f32.mrf.mxu0
  %914 = vmatprep.mubr.bf16.mxu0 0
  %915 = vmatmul.mubr.bf16.gmra.mxu0 %v824
  %v916 = vpop.f32.mrf.mxu0
  %v917 = vadd.f32 0.0, %v916
  %v918 = vpop.f32.mrf.mxu0
  %v919 = vpop.f32.mrf.mxu0
  %v920 = vadd.f32 0.0, %v919
  %v921 = vpop.f32.mrf.mxu0
  %922 = vdwg.mxu0
  %v931 = vunpack.c.l.b16 %v738
  %v932 = vunpack.c.l.b16 %v739
  %v933 = vunpack.c.l.b16 %v740
  %v934 = vunpack.c.l.b16 %v741
  %v935 = vunpack.c.l.b16 %v742
  %v936 = vunpack.c.l.b16 %v743
  %v937 = vunpack.c.l.b16 %v744
  %v938 = vunpack.c.l.b16 %v745
  %v939 = vpack.c.b16 %v932, %v931
  %v940 = vpack.c.b16 %v934, %v933
  %v941 = vpack.c.b16 %v936, %v935
  %v942 = vpack.c.b16 %v938, %v937
  %v948 = vsel %vm311, %v730, 0
  %v951 = vsel %vm311, %v731, 0
  %v954 = vsel %vm311, %v732, 0
  %v957 = vsel %vm311, %v733, 0
  %v960 = vsel %vm311, %v734, 0
  %v963 = vsel %vm311, %v735, 0
  %v966 = vsel %vm311, %v736, 0
  %v969 = vsel %vm311, %v737, 0
  %971 = vmatprep.subr.bf16.mxu0 0
  %972 = vmatpush1.bf16.msra.mxu0 0
  %973 = vmatprep.subr.bf16.mxu0 0
  %974 = vmatpush1.bf16.msra.mxu0 0
  %975 = vmatprep.subr.bf16.mxu0 0
  %976 = vmatpush1.bf16.msra.mxu0 0
  %977 = vmatprep.subr.bf16.mxu0 0
  %978 = vmatpush1.bf16.msra.mxu0 0
  %979 = vmatprep.subr.bf16.mxu0 0
  %980 = vmatpush1.bf16.msra.mxu0 %v942
  %981 = vmatprep.subr.bf16.mxu0 0
  %982 = vmatpush1.bf16.msra.mxu0 %v941
  %983 = vmatprep.subr.bf16.mxu0 0
  %984 = vmatpush1.bf16.msra.mxu0 %v940
  %985 = vmatprep.subr.bf16.mxu0 0
  %986 = vmatpush1.bf16.msra.mxu0 %v939
  %987 = vmatprep.subr.bf16.mxu0 0
  %988 = vmatpush2.bf16.msra.mxu0 0
  %989 = vmatprep.subr.bf16.mxu0 0
  %990 = vmatpush2.bf16.msra.mxu0 0
  %991 = vmatprep.subr.bf16.mxu0 0
  %992 = vmatpush2.bf16.msra.mxu0 0
  %993 = vmatprep.subr.bf16.mxu0 0
  %994 = vmatpush2.bf16.msra.mxu0 0
  %995 = vmatprep.subr.bf16.mxu0 0
  %996 = vmatpush2.bf16.msra.mxu0 0
  %997 = vmatprep.subr.bf16.mxu0 0
  %998 = vmatpush2.bf16.msra.mxu0 0
  %999 = vmatprep.subr.bf16.mxu0 0
  %1000 = vmatpush2.bf16.msra.mxu0 0
  %1001 = vmatprep.subr.bf16.mxu0 0
  %1002 = vmatpush2.bf16.msra.mxu0 0
  %1003 = vmatprep.mubr.bf16.mxu0 0
  %1004 = vmatmul.mubr.bf16.gmra.mxu0 %v948
  %v1005 = vpop.f32.mrf.mxu0
  %v1006 = vadd.f32 %v861, %v1005
  %v1007 = vpop.f32.mrf.mxu0
  %v1008 = vpop.f32.mrf.mxu0
  %v1009 = vadd.f32 %v864, %v1008
  %v1010 = vpop.f32.mrf.mxu0
  %1011 = vmatprep.mubr.bf16.mxu0 0
  %1012 = vmatmul.mubr.bf16.gmra.mxu0 %v951
  %v1013 = vpop.f32.mrf.mxu0
  %v1014 = vadd.f32 %v869, %v1013
  %v1015 = vpop.f32.mrf.mxu0
  %v1016 = vpop.f32.mrf.mxu0
  %v1017 = vadd.f32 %v872, %v1016
  %v1018 = vpop.f32.mrf.mxu0
  %1019 = vmatprep.mubr.bf16.mxu0 0
  %1020 = vmatmul.mubr.bf16.gmra.mxu0 %v954
  %v1021 = vpop.f32.mrf.mxu0
  %v1022 = vadd.f32 %v877, %v1021
  %v1023 = vpop.f32.mrf.mxu0
  %v1024 = vpop.f32.mrf.mxu0
  %v1025 = vadd.f32 %v880, %v1024
  %v1026 = vpop.f32.mrf.mxu0
  %1027 = vmatprep.mubr.bf16.mxu0 0
  %1028 = vmatmul.mubr.bf16.gmra.mxu0 %v957
  %v1029 = vpop.f32.mrf.mxu0
  %v1030 = vadd.f32 %v885, %v1029
  %v1031 = vpop.f32.mrf.mxu0
  %v1032 = vpop.f32.mrf.mxu0
  %v1033 = vadd.f32 %v888, %v1032
  %v1034 = vpop.f32.mrf.mxu0
  %1035 = vmatprep.mubr.bf16.mxu0 0
  %1036 = vmatmul.mubr.bf16.gmra.mxu0 %v960
  %v1037 = vpop.f32.mrf.mxu0
  %v1038 = vadd.f32 %v893, %v1037
  %v1039 = vpop.f32.mrf.mxu0
  %v1040 = vpop.f32.mrf.mxu0
  %v1041 = vadd.f32 %v896, %v1040
  %v1042 = vpop.f32.mrf.mxu0
  %1043 = vmatprep.mubr.bf16.mxu0 0
  %1044 = vmatmul.mubr.bf16.gmra.mxu0 %v963
  %v1045 = vpop.f32.mrf.mxu0
  %v1046 = vadd.f32 %v901, %v1045
  %v1047 = vpop.f32.mrf.mxu0
  %v1048 = vpop.f32.mrf.mxu0
  %v1049 = vadd.f32 %v904, %v1048
  %v1050 = vpop.f32.mrf.mxu0
  %1051 = vmatprep.mubr.bf16.mxu0 0
  %1052 = vmatmul.mubr.bf16.gmra.mxu0 %v966
  %v1053 = vpop.f32.mrf.mxu0
  %v1054 = vadd.f32 %v909, %v1053
  %v1055 = vpop.f32.mrf.mxu0
  %v1056 = vpop.f32.mrf.mxu0
  %v1057 = vadd.f32 %v912, %v1056
  %v1058 = vpop.f32.mrf.mxu0
  %1059 = vmatprep.mubr.bf16.mxu0 0
  %1060 = vmatmul.mubr.bf16.gmra.mxu0 %v969
  %v1061 = vpop.f32.mrf.mxu0
  %v1062 = vadd.f32 %v917, %v1061
  %v1063 = vpop.f32.mrf.mxu0
  %v1064 = vpop.f32.mrf.mxu0
  %v1065 = vadd.f32 %v920, %v1064
  %v1066 = vpop.f32.mrf.mxu0
  %1067 = vdwg.mxu0
  %v1068 = vld [vmem:[#allocation2 + $0x2] sm:$0xff]
  %v1069 = vld [vmem:[#allocation2 + $0x12] sm:$0xff]
  %v1070 = vld [vmem:[#allocation2 + $0x22] sm:$0xff]
  %v1071 = vld [vmem:[#allocation2 + $0x32] sm:$0xff]
  %v1072 = vld [vmem:[#allocation2 + $0x42] sm:$0xff]
  %v1073 = vld [vmem:[#allocation2 + $0x52] sm:$0xff]
  %v1074 = vld [vmem:[#allocation2 + $0x62] sm:$0xff]
  %v1075 = vld [vmem:[#allocation2 + $0x72] sm:$0xff]
  %v1076 = vld [vmem:[#allocation2 + $0xa2] sm:$0xff]
  %v1077 = vld [vmem:[#allocation2 + $0xb2] sm:$0xff]
  %v1078 = vld [vmem:[#allocation2 + $0xc2] sm:$0xff]
  %v1079 = vld [vmem:[#allocation2 + $0xd2] sm:$0xff]
  %v1080 = vld [vmem:[#allocation2 + $0xe2] sm:$0xff]
  %v1081 = vld [vmem:[#allocation2 + $0xf2] sm:$0xff]
  %v1082 = vld [vmem:[#allocation2 + $0x102] sm:$0xff]
  %v1083 = vld [vmem:[#allocation2 + $0x112] sm:$0xff]
  %v1084 = vpack.c.bf16 %v1069, %v1068
  %v1085 = vpack.c.bf16 %v1071, %v1070
  %v1086 = vpack.c.bf16 %v1073, %v1072
  %v1087 = vpack.c.bf16 %v1075, %v1074
  %v1088 = vpack.c.bf16 %v1077, %v1076
  %v1089 = vpack.c.bf16 %v1079, %v1078
  %v1090 = vpack.c.bf16 %v1081, %v1080
  %v1091 = vpack.c.bf16 %v1083, %v1082
  %v1092 = vld [vmem:[%s2 + $0x40] sm:$0xf]
  %v1093 = vld [vmem:[%s2 + $0x44] sm:$0xf]
  %v1094 = vld [vmem:[%s2 + $0x48] sm:$0xf]
  %v1095 = vld [vmem:[%s2 + $0x4c] sm:$0xf]
  %v1096 = vld [vmem:[%s2 + $0x50] sm:$0xf]
  %v1097 = vld [vmem:[%s2 + $0x54] sm:$0xf]
  %v1098 = vld [vmem:[%s2 + $0x58] sm:$0xf]
  %v1099 = vld [vmem:[%s2 + $0x5c] sm:$0xf]
  %v1108 = vunpack.c.l.b16 %v1092
  %v1109 = vunpack.c.l.b16 %v1093
  %v1110 = vunpack.c.l.b16 %v1094
  %v1111 = vunpack.c.l.b16 %v1095
  %v1112 = vunpack.c.l.b16 %v1096
  %v1113 = vunpack.c.l.b16 %v1097
  %v1114 = vunpack.c.l.b16 %v1098
  %v1115 = vunpack.c.l.b16 %v1099
  %v1116 = vpack.c.b16 %v1109, %v1108
  %v1117 = vpack.c.b16 %v1111, %v1110
  %v1118 = vpack.c.b16 %v1113, %v1112
  %v1119 = vpack.c.b16 %v1115, %v1114
  %v1125 = vsel %vm311, %v1084, 0
  %v1128 = vsel %vm311, %v1085, 0
  %v1131 = vsel %vm311, %v1086, 0
  %v1134 = vsel %vm311, %v1087, 0
  %v1137 = vsel %vm311, %v1088, 0
  %v1140 = vsel %vm311, %v1089, 0
  %v1143 = vsel %vm311, %v1090, 0
  %v1146 = vsel %vm311, %v1091, 0
  %1148 = vmatprep.subr.bf16.mxu0 0
  %1149 = vmatpush1.bf16.msra.mxu0 0
  %1150 = vmatprep.subr.bf16.mxu0 0
  %1151 = vmatpush1.bf16.msra.mxu0 0
  %1152 = vmatprep.subr.bf16.mxu0 0
  %1153 = vmatpush1.bf16.msra.mxu0 0
  %1154 = vmatprep.subr.bf16.mxu0 0
  %1155 = vmatpush1.bf16.msra.mxu0 0
  %1156 = vmatprep.subr.bf16.mxu0 0
  %1157 = vmatpush1.bf16.msra.mxu0 %v1119
  %1158 = vmatprep.subr.bf16.mxu0 0
  %1159 = vmatpush1.bf16.msra.mxu0 %v1118
  %1160 = vmatprep.subr.bf16.mxu0 0
  %1161 = vmatpush1.bf16.msra.mxu0 %v1117
  %1162 = vmatprep.subr.bf16.mxu0 0
  %1163 = vmatpush1.bf16.msra.mxu0 %v1116
  %1164 = vmatprep.subr.bf16.mxu0 0
  %1165 = vmatpush2.bf16.msra.mxu0 0
  %1166 = vmatprep.subr.bf16.mxu0 0
  %1167 = vmatpush2.bf16.msra.mxu0 0
  %1168 = vmatprep.subr.bf16.mxu0 0
  %1169 = vmatpush2.bf16.msra.mxu0 0
  %1170 = vmatprep.subr.bf16.mxu0 0
  %1171 = vmatpush2.bf16.msra.mxu0 0
  %1172 = vmatprep.subr.bf16.mxu0 0
  %1173 = vmatpush2.bf16.msra.mxu0 0
  %1174 = vmatprep.subr.bf16.mxu0 0
  %1175 = vmatpush2.bf16.msra.mxu0 0
  %1176 = vmatprep.subr.bf16.mxu0 0
  %1177 = vmatpush2.bf16.msra.mxu0 0
  %1178 = vmatprep.subr.bf16.mxu0 0
  %1179 = vmatpush2.bf16.msra.mxu0 0
  %1180 = vmatprep.mubr.bf16.mxu0 0
  %1181 = vmatmul.mubr.bf16.gmra.mxu0 %v1125
  %v1182 = vpop.f32.mrf.mxu0
  %v1183 = vadd.f32 0.0, %v1182
  %v1184 = vpop.f32.mrf.mxu0
  %v1185 = vpop.f32.mrf.mxu0
  %v1186 = vadd.f32 0.0, %v1185
  %v1187 = vpop.f32.mrf.mxu0
  %1188 = vmatprep.mubr.bf16.mxu0 0
  %1189 = vmatmul.mubr.bf16.gmra.mxu0 %v1128
  %v1190 = vpop.f32.mrf.mxu0
  %v1191 = vadd.f32 0.0, %v1190
  %v1192 = vpop.f32.mrf.mxu0
  %v1193 = vpop.f32.mrf.mxu0
  %v1194 = vadd.f32 0.0, %v1193
  %v1195 = vpop.f32.mrf.mxu0
  %1196 = vmatprep.mubr.bf16.mxu0 0
  %1197 = vmatmul.mubr.bf16.gmra.mxu0 %v1131
  %v1198 = vpop.f32.mrf.mxu0
  %v1199 = vadd.f32 0.0, %v1198
  %v1200 = vpop.f32.mrf.mxu0
  %v1201 = vpop.f32.mrf.mxu0
  %v1202 = vadd.f32 0.0, %v1201
  %v1203 = vpop.f32.mrf.mxu0
  %1204 = vmatprep.mubr.bf16.mxu0 0
  %1205 = vmatmul.mubr.bf16.gmra.mxu0 %v1134
  %v1206 = vpop.f32.mrf.mxu0
  %v1207 = vadd.f32 0.0, %v1206
  %v1208 = vpop.f32.mrf.mxu0
  %v1209 = vpop.f32.mrf.mxu0
  %v1210 = vadd.f32 0.0, %v1209
  %v1211 = vpop.f32.mrf.mxu0
  %1212 = vmatprep.mubr.bf16.mxu0 0
  %1213 = vmatmul.mubr.bf16.gmra.mxu0 %v1137
  %v1214 = vpop.f32.mrf.mxu0
  %v1215 = vadd.f32 0.0, %v1214
  %v1216 = vpop.f32.mrf.mxu0
  %v1217 = vpop.f32.mrf.mxu0
  %v1218 = vadd.f32 0.0, %v1217
  %v1219 = vpop.f32.mrf.mxu0
  %1220 = vmatprep.mubr.bf16.mxu0 0
  %1221 = vmatmul.mubr.bf16.gmra.mxu0 %v1140
  %v1222 = vpop.f32.mrf.mxu0
  %v1223 = vadd.f32 0.0, %v1222
  %v1224 = vpop.f32.mrf.mxu0
  %v1225 = vpop.f32.mrf.mxu0
  %v1226 = vadd.f32 0.0, %v1225
  %v1227 = vpop.f32.mrf.mxu0
  %1228 = vmatprep.mubr.bf16.mxu0 0
  %1229 = vmatmul.mubr.bf16.gmra.mxu0 %v1143
  %v1230 = vpop.f32.mrf.mxu0
  %v1231 = vadd.f32 0.0, %v1230
  %v1232 = vpop.f32.mrf.mxu0
  %v1233 = vpop.f32.mrf.mxu0
  %v1234 = vadd.f32 0.0, %v1233
  %v1235 = vpop.f32.mrf.mxu0
  %1236 = vmatprep.mubr.bf16.mxu0 0
  %1237 = vmatmul.mubr.bf16.gmra.mxu0 %v1146
  %v1238 = vpop.f32.mrf.mxu0
  %v1239 = vadd.f32 0.0, %v1238
  %v1240 = vpop.f32.mrf.mxu0
  %v1241 = vpop.f32.mrf.mxu0
  %v1242 = vadd.f32 0.0, %v1241
  %v1243 = vpop.f32.mrf.mxu0
  %1244 = vdwg.mxu0
  %v1245 = vadd.f32 %v1006, %v1183
  %v1246 = vadd.f32 %v1009, %v1186
  %v1247 = vadd.f32 %v1014, %v1191
  %v1248 = vadd.f32 %v1017, %v1194
  %v1249 = vadd.f32 %v1022, %v1199
  %v1250 = vadd.f32 %v1025, %v1202
  %v1251 = vadd.f32 %v1030, %v1207
  %v1252 = vadd.f32 %v1033, %v1210
  %v1253 = vadd.f32 %v1038, %v1215
  %v1254 = vadd.f32 %v1041, %v1218
  %v1255 = vadd.f32 %v1046, %v1223
  %v1256 = vadd.f32 %v1049, %v1226
  %v1257 = vadd.f32 %v1054, %v1231
  %v1258 = vadd.f32 %v1057, %v1234
  %v1259 = vadd.f32 %v1062, %v1239
  %v1260 = vadd.f32 %v1065, %v1242
  %v1261 = vld [vmem:[%s697] sm:$0xff]
  %v1262 = vld [vmem:[%s697 + $0x10] sm:$0xff]
  %v1263 = vld [vmem:[%s697 + $0x20] sm:$0xff]
  %v1264 = vld [vmem:[%s697 + $0x30] sm:$0xff]
  %v1265 = vld [vmem:[%s697 + $0x40] sm:$0xff]
  %v1266 = vld [vmem:[%s697 + $0x50] sm:$0xff]
  %v1267 = vld [vmem:[%s697 + $0x60] sm:$0xff]
  %v1268 = vld [vmem:[%s697 + $0x70] sm:$0xff]
  %v1269 = vld [vmem:[%s697 + $0xa0] sm:$0xff]
  %v1270 = vld [vmem:[%s697 + $0xb0] sm:$0xff]
  %v1271 = vld [vmem:[%s697 + $0xc0] sm:$0xff]
  %v1272 = vld [vmem:[%s697 + $0xd0] sm:$0xff]
  %v1273 = vld [vmem:[%s697 + $0xe0] sm:$0xff]
  %v1274 = vld [vmem:[%s697 + $0xf0] sm:$0xff]
  %v1275 = vld [vmem:[%s697 + $0x100] sm:$0xff]
  %v1276 = vld [vmem:[%s697 + $0x110] sm:$0xff]
  %v1277 = vpack.c.bf16 %v1262, %v1261
  %v1278 = vpack.c.bf16 %v1264, %v1263
  %v1279 = vpack.c.bf16 %v1266, %v1265
  %v1280 = vpack.c.bf16 %v1268, %v1267
  %v1281 = vpack.c.bf16 %v1270, %v1269
  %v1282 = vpack.c.bf16 %v1272, %v1271
  %v1283 = vpack.c.bf16 %v1274, %v1273
  %v1284 = vpack.c.bf16 %v1276, %v1275
  %v1285 = vld [vmem:[%s2 + $0x60] sm:$0xf]
  %v1286 = vld [vmem:[%s2 + $0x64] sm:$0xf]
  %v1287 = vld [vmem:[%s2 + $0x68] sm:$0xf]
  %v1288 = vld [vmem:[%s2 + $0x6c] sm:$0xf]
  %v1289 = vld [vmem:[%s2 + $0x70] sm:$0xf]
  %v1290 = vld [vmem:[%s2 + $0x74] sm:$0xf]
  %v1291 = vld [vmem:[%s2 + $0x78] sm:$0xf]
  %v1292 = vld [vmem:[%s2 + $0x7c] sm:$0xf]
  %v1301 = vunpack.c.l.b16 %v1285
  %v1302 = vunpack.c.l.b16 %v1286
  %v1303 = vunpack.c.l.b16 %v1287
  %v1304 = vunpack.c.l.b16 %v1288
  %v1305 = vunpack.c.l.b16 %v1289
  %v1306 = vunpack.c.l.b16 %v1290
  %v1307 = vunpack.c.l.b16 %v1291
  %v1308 = vunpack.c.l.b16 %v1292
  %v1309 = vpack.c.b16 %v1302, %v1301
  %v1310 = vpack.c.b16 %v1304, %v1303
  %v1311 = vpack.c.b16 %v1306, %v1305
  %v1312 = vpack.c.b16 %v1308, %v1307
  %v1318 = vsel %vm311, %v1277, 0
  %v1321 = vsel %vm311, %v1278, 0
  %v1324 = vsel %vm311, %v1279, 0
  %v1327 = vsel %vm311, %v1280, 0
  %v1330 = vsel %vm311, %v1281, 0
  %v1333 = vsel %vm311, %v1282, 0
  %v1336 = vsel %vm311, %v1283, 0
  %v1339 = vsel %vm311, %v1284, 0
  %1341 = vmatprep.subr.bf16.mxu0 0
  %1342 = vmatpush1.bf16.msra.mxu0 0
  %1343 = vmatprep.subr.bf16.mxu0 0
  %1344 = vmatpush1.bf16.msra.mxu0 0
  %1345 = vmatprep.subr.bf16.mxu0 0
  %1346 = vmatpush1.bf16.msra.mxu0 0
  %1347 = vmatprep.subr.bf16.mxu0 0
  %1348 = vmatpush1.bf16.msra.mxu0 0
  %1349 = vmatprep.subr.bf16.mxu0 0
  %1350 = vmatpush1.bf16.msra.mxu0 %v1312
  %1351 = vmatprep.subr.bf16.mxu0 0
  %1352 = vmatpush1.bf16.msra.mxu0 %v1311
  %1353 = vmatprep.subr.bf16.mxu0 0
  %1354 = vmatpush1.bf16.msra.mxu0 %v1310
  %1355 = vmatprep.subr.bf16.mxu0 0
  %1356 = vmatpush1.bf16.msra.mxu0 %v1309
  %1357 = vmatprep.subr.bf16.mxu0 0
  %1358 = vmatpush2.bf16.msra.mxu0 0
  %1359 = vmatprep.subr.bf16.mxu0 0
  %1360 = vmatpush2.bf16.msra.mxu0 0
  %1361 = vmatprep.subr.bf16.mxu0 0
  %1362 = vmatpush2.bf16.msra.mxu0 0
  %1363 = vmatprep.subr.bf16.mxu0 0
  %1364 = vmatpush2.bf16.msra.mxu0 0
  %1365 = vmatprep.subr.bf16.mxu0 0
  %1366 = vmatpush2.bf16.msra.mxu0 0
  %1367 = vmatprep.subr.bf16.mxu0 0
  %1368 = vmatpush2.bf16.msra.mxu0 0
  %1369 = vmatprep.subr.bf16.mxu0 0
  %1370 = vmatpush2.bf16.msra.mxu0 0
  %1371 = vmatprep.subr.bf16.mxu0 0
  %1372 = vmatpush2.bf16.msra.mxu0 0
  %1373 = vmatprep.mubr.bf16.mxu0 0
  %1374 = vmatmul.mubr.bf16.gmra.mxu0 %v1318
  %v1375 = vpop.f32.mrf.mxu0
  %v1376 = vadd.f32 0.0, %v1375
  %v1377 = vpop.f32.mrf.mxu0
  %v1378 = vpop.f32.mrf.mxu0
  %v1379 = vadd.f32 0.0, %v1378
  %v1380 = vpop.f32.mrf.mxu0
  %1381 = vmatprep.mubr.bf16.mxu0 0
  %1382 = vmatmul.mubr.bf16.gmra.mxu0 %v1321
  %v1383 = vpop.f32.mrf.mxu0
  %v1384 = vadd.f32 0.0, %v1383
  %v1385 = vpop.f32.mrf.mxu0
  %v1386 = vpop.f32.mrf.mxu0
  %v1387 = vadd.f32 0.0, %v1386
  %v1388 = vpop.f32.mrf.mxu0
  %1389 = vmatprep.mubr.bf16.mxu0 0
  %1390 = vmatmul.mubr.bf16.gmra.mxu0 %v1324
  %v1391 = vpop.f32.mrf.mxu0
  %v1392 = vadd.f32 0.0, %v1391
  %v1393 = vpop.f32.mrf.mxu0
  %v1394 = vpop.f32.mrf.mxu0
  %v1395 = vadd.f32 0.0, %v1394
  %v1396 = vpop.f32.mrf.mxu0
  %1397 = vmatprep.mubr.bf16.mxu0 0
  %1398 = vmatmul.mubr.bf16.gmra.mxu0 %v1327
  %v1399 = vpop.f32.mrf.mxu0
  %v1400 = vadd.f32 0.0, %v1399
  %v1401 = vpop.f32.mrf.mxu0
  %v1402 = vpop.f32.mrf.mxu0
  %v1403 = vadd.f32 0.0, %v1402
  %v1404 = vpop.f32.mrf.mxu0
  %1405 = vmatprep.mubr.bf16.mxu0 0
  %1406 = vmatmul.mubr.bf16.gmra.mxu0 %v1330
  %v1407 = vpop.f32.mrf.mxu0
  %v1408 = vadd.f32 0.0, %v1407
  %v1409 = vpop.f32.mrf.mxu0
  %v1410 = vpop.f32.mrf.mxu0
  %v1411 = vadd.f32 0.0, %v1410
  %v1412 = vpop.f32.mrf.mxu0
  %1413 = vmatprep.mubr.bf16.mxu0 0
  %1414 = vmatmul.mubr.bf16.gmra.mxu0 %v1333
  %v1415 = vpop.f32.mrf.mxu0
  %v1416 = vadd.f32 0.0, %v1415
  %v1417 = vpop.f32.mrf.mxu0
  %v1418 = vpop.f32.mrf.mxu0
  %v1419 = vadd.f32 0.0, %v1418
  %v1420 = vpop.f32.mrf.mxu0
  %1421 = vmatprep.mubr.bf16.mxu0 0
  %1422 = vmatmul.mubr.bf16.gmra.mxu0 %v1336
  %v1423 = vpop.f32.mrf.mxu0
  %v1424 = vadd.f32 0.0, %v1423
  %v1425 = vpop.f32.mrf.mxu0
  %v1426 = vpop.f32.mrf.mxu0
  %v1427 = vadd.f32 0.0, %v1426
  %v1428 = vpop.f32.mrf.mxu0
  %1429 = vmatprep.mubr.bf16.mxu0 0
  %1430 = vmatmul.mubr.bf16.gmra.mxu0 %v1339
  %v1431 = vpop.f32.mrf.mxu0
  %v1432 = vadd.f32 0.0, %v1431
  %v1433 = vpop.f32.mrf.mxu0
  %v1434 = vpop.f32.mrf.mxu0
  %v1435 = vadd.f32 0.0, %v1434
  %v1436 = vpop.f32.mrf.mxu0
  %1437 = vdwg.mxu0
  %v1438 = vadd.f32 %v1245, %v1376
  %v1439 = vadd.f32 %v1246, %v1379
  %v1440 = vadd.f32 %v1247, %v1384
  %v1441 = vadd.f32 %v1248, %v1387
  %v1442 = vadd.f32 %v1249, %v1392
  %v1443 = vadd.f32 %v1250, %v1395
  %v1444 = vadd.f32 %v1251, %v1400
  %v1445 = vadd.f32 %v1252, %v1403
  %v1446 = vadd.f32 %v1253, %v1408
  %v1447 = vadd.f32 %v1254, %v1411
  %v1448 = vadd.f32 %v1255, %v1416
  %v1449 = vadd.f32 %v1256, %v1419
  %v1450 = vadd.f32 %v1257, %v1424
  %v1451 = vadd.f32 %v1258, %v1427
  %v1452 = vadd.f32 %v1259, %v1432
  %v1453 = vadd.f32 %v1260, %v1435
  %v1454 = vld [vmem:[%s697 + $0x1] sm:$0xff]
  %v1455 = vld [vmem:[%s697 + $0x11] sm:$0xff]
  %v1456 = vld [vmem:[%s697 + $0x21] sm:$0xff]
  %v1457 = vld [vmem:[%s697 + $0x31] sm:$0xff]
  %v1458 = vld [vmem:[%s697 + $0x41] sm:$0xff]
  %v1459 = vld [vmem:[%s697 + $0x51] sm:$0xff]
  %v1460 = vld [vmem:[%s697 + $0x61] sm:$0xff]
  %v1461 = vld [vmem:[%s697 + $0x71] sm:$0xff]
  %v1462 = vld [vmem:[%s697 + $0xa1] sm:$0xff]
  %v1463 = vld [vmem:[%s697 + $0xb1] sm:$0xff]
  %v1464 = vld [vmem:[%s697 + $0xc1] sm:$0xff]
  %v1465 = vld [vmem:[%s697 + $0xd1] sm:$0xff]
  %v1466 = vld [vmem:[%s697 + $0xe1] sm:$0xff]
  %v1467 = vld [vmem:[%s697 + $0xf1] sm:$0xff]
  %v1468 = vld [vmem:[%s697 + $0x101] sm:$0xff]
  %v1469 = vld [vmem:[%s697 + $0x111] sm:$0xff]
  %v1470 = vpack.c.bf16 %v1455, %v1454
  %v1471 = vpack.c.bf16 %v1457, %v1456
  %v1472 = vpack.c.bf16 %v1459, %v1458
  %v1473 = vpack.c.bf16 %v1461, %v1460
  %v1474 = vpack.c.bf16 %v1463, %v1462
  %v1475 = vpack.c.bf16 %v1465, %v1464
  %v1476 = vpack.c.bf16 %v1467, %v1466
  %v1477 = vpack.c.bf16 %v1469, %v1468
  %v1478 = vld [vmem:[%s2 + $0x80] sm:$0xf]
  %v1479 = vld [vmem:[%s2 + $0x84] sm:$0xf]
  %v1480 = vld [vmem:[%s2 + $0x88] sm:$0xf]
  %v1481 = vld [vmem:[%s2 + $0x8c] sm:$0xf]
  %v1482 = vld [vmem:[%s2 + $0x90] sm:$0xf]
  %v1483 = vld [vmem:[%s2 + $0x94] sm:$0xf]
  %v1484 = vld [vmem:[%s2 + $0x98] sm:$0xf]
  %v1485 = vld [vmem:[%s2 + $0x9c] sm:$0xf]
  %v1494 = vunpack.c.l.b16 %v1478
  %v1495 = vunpack.c.l.b16 %v1479
  %v1496 = vunpack.c.l.b16 %v1480
  %v1497 = vunpack.c.l.b16 %v1481
  %v1498 = vunpack.c.l.b16 %v1482
  %v1499 = vunpack.c.l.b16 %v1483
  %v1500 = vunpack.c.l.b16 %v1484
  %v1501 = vunpack.c.l.b16 %v1485
  %v1502 = vpack.c.b16 %v1495, %v1494
  %v1503 = vpack.c.b16 %v1497, %v1496
  %v1504 = vpack.c.b16 %v1499, %v1498
  %v1505 = vpack.c.b16 %v1501, %v1500
  %v1511 = vsel %vm311, %v1470, 0
  %v1514 = vsel %vm311, %v1471, 0
  %v1517 = vsel %vm311, %v1472, 0
  %v1520 = vsel %vm311, %v1473, 0
  %v1523 = vsel %vm311, %v1474, 0
  %v1526 = vsel %vm311, %v1475, 0
  %v1529 = vsel %vm311, %v1476, 0
  %v1532 = vsel %vm311, %v1477, 0
  %1534 = vmatprep.subr.bf16.mxu0 0
  %1535 = vmatpush1.bf16.msra.mxu0 0
  %1536 = vmatprep.subr.bf16.mxu0 0
  %1537 = vmatpush1.bf16.msra.mxu0 0
  %1538 = vmatprep.subr.bf16.mxu0 0
  %1539 = vmatpush1.bf16.msra.mxu0 0
  %1540 = vmatprep.subr.bf16.mxu0 0
  %1541 = vmatpush1.bf16.msra.mxu0 0
  %1542 = vmatprep.subr.bf16.mxu0 0
  %1543 = vmatpush1.bf16.msra.mxu0 %v1505
  %1544 = vmatprep.subr.bf16.mxu0 0
  %1545 = vmatpush1.bf16.msra.mxu0 %v1504
  %1546 = vmatprep.subr.bf16.mxu0 0
  %1547 = vmatpush1.bf16.msra.mxu0 %v1503
  %1548 = vmatprep.subr.bf16.mxu0 0
  %1549 = vmatpush1.bf16.msra.mxu0 %v1502
  %1550 = vmatprep.subr.bf16.mxu0 0
  %1551 = vmatpush2.bf16.msra.mxu0 0
  %1552 = vmatprep.subr.bf16.mxu0 0
  %1553 = vmatpush2.bf16.msra.mxu0 0
  %1554 = vmatprep.subr.bf16.mxu0 0
  %1555 = vmatpush2.bf16.msra.mxu0 0
  %1556 = vmatprep.subr.bf16.mxu0 0
  %1557 = vmatpush2.bf16.msra.mxu0 0
  %1558 = vmatprep.subr.bf16.mxu0 0
  %1559 = vmatpush2.bf16.msra.mxu0 0
  %1560 = vmatprep.subr.bf16.mxu0 0
  %1561 = vmatpush2.bf16.msra.mxu0 0
  %1562 = vmatprep.subr.bf16.mxu0 0
  %1563 = vmatpush2.bf16.msra.mxu0 0
  %1564 = vmatprep.subr.bf16.mxu0 0
  %1565 = vmatpush2.bf16.msra.mxu0 0
  %1566 = vmatprep.mubr.bf16.mxu0 0
  %1567 = vmatmul.mubr.bf16.gmra.mxu0 %v1511
  %v1568 = vpop.f32.mrf.mxu0
  %v1569 = vadd.f32 0.0, %v1568
  %v1570 = vpop.f32.mrf.mxu0
  %v1571 = vpop.f32.mrf.mxu0
  %v1572 = vadd.f32 0.0, %v1571
  %v1573 = vpop.f32.mrf.mxu0
  %1574 = vmatprep.mubr.bf16.mxu0 0
  %1575 = vmatmul.mubr.bf16.gmra.mxu0 %v1514
  %v1576 = vpop.f32.mrf.mxu0
  %v1577 = vadd.f32 0.0, %v1576
  %v1578 = vpop.f32.mrf.mxu0
  %v1579 = vpop.f32.mrf.mxu0
  %v1580 = vadd.f32 0.0, %v1579
  %v1581 = vpop.f32.mrf.mxu0
  %1582 = vmatprep.mubr.bf16.mxu0 0
  %1583 = vmatmul.mubr.bf16.gmra.mxu0 %v1517
  %v1584 = vpop.f32.mrf.mxu0
  %v1585 = vadd.f32 0.0, %v1584
  %v1586 = vpop.f32.mrf.mxu0
  %v1587 = vpop.f32.mrf.mxu0
  %v1588 = vadd.f32 0.0, %v1587
  %v1589 = vpop.f32.mrf.mxu0
  %1590 = vmatprep.mubr.bf16.mxu0 0
  %1591 = vmatmul.mubr.bf16.gmra.mxu0 %v1520
  %v1592 = vpop.f32.mrf.mxu0
  %v1593 = vadd.f32 0.0, %v1592
  %v1594 = vpop.f32.mrf.mxu0
  %v1595 = vpop.f32.mrf.mxu0
  %v1596 = vadd.f32 0.0, %v1595
  %v1597 = vpop.f32.mrf.mxu0
  %1598 = vmatprep.mubr.bf16.mxu0 0
  %1599 = vmatmul.mubr.bf16.gmra.mxu0 %v1523
  %v1600 = vpop.f32.mrf.mxu0
  %v1601 = vadd.f32 0.0, %v1600
  %v1602 = vpop.f32.mrf.mxu0
  %v1603 = vpop.f32.mrf.mxu0
  %v1604 = vadd.f32 0.0, %v1603
  %v1605 = vpop.f32.mrf.mxu0
  %1606 = vmatprep.mubr.bf16.mxu0 0
  %1607 = vmatmul.mubr.bf16.gmra.mxu0 %v1526
  %v1608 = vpop.f32.mrf.mxu0
  %v1609 = vadd.f32 0.0, %v1608
  %v1610 = vpop.f32.mrf.mxu0
  %v1611 = vpop.f32.mrf.mxu0
  %v1612 = vadd.f32 0.0, %v1611
  %v1613 = vpop.f32.mrf.mxu0
  %1614 = vmatprep.mubr.bf16.mxu0 0
  %1615 = vmatmul.mubr.bf16.gmra.mxu0 %v1529
  %v1616 = vpop.f32.mrf.mxu0
  %v1617 = vadd.f32 0.0, %v1616
  %v1618 = vpop.f32.mrf.mxu0
  %v1619 = vpop.f32.mrf.mxu0
  %v1620 = vadd.f32 0.0, %v1619
  %v1621 = vpop.f32.mrf.mxu0
  %1622 = vmatprep.mubr.bf16.mxu0 0
  %1623 = vmatmul.mubr.bf16.gmra.mxu0 %v1532
  %v1624 = vpop.f32.mrf.mxu0
  %v1625 = vadd.f32 0.0, %v1624
  %v1626 = vpop.f32.mrf.mxu0
  %v1627 = vpop.f32.mrf.mxu0
  %v1628 = vadd.f32 0.0, %v1627
  %v1629 = vpop.f32.mrf.mxu0
  %1630 = vdwg.mxu0
  %v1631 = vadd.f32 %v1438, %v1569
  %v1632 = vadd.f32 %v1439, %v1572
  %v1633 = vadd.f32 %v1440, %v1577
  %v1634 = vadd.f32 %v1441, %v1580
  %v1635 = vadd.f32 %v1442, %v1585
  %v1636 = vadd.f32 %v1443, %v1588
  %v1637 = vadd.f32 %v1444, %v1593
  %v1638 = vadd.f32 %v1445, %v1596
  %v1639 = vadd.f32 %v1446, %v1601
  %v1640 = vadd.f32 %v1447, %v1604
  %v1641 = vadd.f32 %v1448, %v1609
  %v1642 = vadd.f32 %v1449, %v1612
  %v1643 = vadd.f32 %v1450, %v1617
  %v1644 = vadd.f32 %v1451, %v1620
  %v1645 = vadd.f32 %v1452, %v1625
  %v1646 = vadd.f32 %v1453, %v1628
  %v1647 = vld [vmem:[%s697 + $0x2] sm:$0xff]
  %v1648 = vld [vmem:[%s697 + $0x12] sm:$0xff]
  %v1649 = vld [vmem:[%s697 + $0x22] sm:$0xff]
  %v1650 = vld [vmem:[%s697 + $0x32] sm:$0xff]
  %v1651 = vld [vmem:[%s697 + $0x42] sm:$0xff]
  %v1652 = vld [vmem:[%s697 + $0x52] sm:$0xff]
  %v1653 = vld [vmem:[%s697 + $0x62] sm:$0xff]
  %v1654 = vld [vmem:[%s697 + $0x72] sm:$0xff]
  %v1655 = vld [vmem:[%s697 + $0xa2] sm:$0xff]
  %v1656 = vld [vmem:[%s697 + $0xb2] sm:$0xff]
  %v1657 = vld [vmem:[%s697 + $0xc2] sm:$0xff]
  %v1658 = vld [vmem:[%s697 + $0xd2] sm:$0xff]
  %v1659 = vld [vmem:[%s697 + $0xe2] sm:$0xff]
  %v1660 = vld [vmem:[%s697 + $0xf2] sm:$0xff]
  %v1661 = vld [vmem:[%s697 + $0x102] sm:$0xff]
  %v1662 = vld [vmem:[%s697 + $0x112] sm:$0xff]
  %v1663 = vpack.c.bf16 %v1648, %v1647
  %v1664 = vpack.c.bf16 %v1650, %v1649
  %v1665 = vpack.c.bf16 %v1652, %v1651
  %v1666 = vpack.c.bf16 %v1654, %v1653
  %v1667 = vpack.c.bf16 %v1656, %v1655
  %v1668 = vpack.c.bf16 %v1658, %v1657
  %v1669 = vpack.c.bf16 %v1660, %v1659
  %v1670 = vpack.c.bf16 %v1662, %v1661
  %v1671 = vld [vmem:[%s2 + $0xa0] sm:$0xf]
  %v1672 = vld [vmem:[%s2 + $0xa4] sm:$0xf]
  %v1673 = vld [vmem:[%s2 + $0xa8] sm:$0xf]
  %v1674 = vld [vmem:[%s2 + $0xac] sm:$0xf]
  %v1675 = vld [vmem:[%s2 + $0xb0] sm:$0xf]
  %v1676 = vld [vmem:[%s2 + $0xb4] sm:$0xf]
  %v1677 = vld [vmem:[%s2 + $0xb8] sm:$0xf]
  %v1678 = vld [vmem:[%s2 + $0xbc] sm:$0xf]
  %v1687 = vunpack.c.l.b16 %v1671
  %v1688 = vunpack.c.l.b16 %v1672
  %v1689 = vunpack.c.l.b16 %v1673
  %v1690 = vunpack.c.l.b16 %v1674
  %v1691 = vunpack.c.l.b16 %v1675
  %v1692 = vunpack.c.l.b16 %v1676
  %v1693 = vunpack.c.l.b16 %v1677
  %v1694 = vunpack.c.l.b16 %v1678
  %v1695 = vpack.c.b16 %v1688, %v1687
  %v1696 = vpack.c.b16 %v1690, %v1689
  %v1697 = vpack.c.b16 %v1692, %v1691
  %v1698 = vpack.c.b16 %v1694, %v1693
  %v1704 = vsel %vm311, %v1663, 0
  %v1707 = vsel %vm311, %v1664, 0
  %v1710 = vsel %vm311, %v1665, 0
  %v1713 = vsel %vm311, %v1666, 0
  %v1716 = vsel %vm311, %v1667, 0
  %v1719 = vsel %vm311, %v1668, 0
  %v1722 = vsel %vm311, %v1669, 0
  %v1725 = vsel %vm311, %v1670, 0
  %1727 = vmatprep.subr.bf16.mxu0 0
  %1728 = vmatpush1.bf16.msra.mxu0 0
  %1729 = vmatprep.subr.bf16.mxu0 0
  %1730 = vmatpush1.bf16.msra.mxu0 0
  %1731 = vmatprep.subr.bf16.mxu0 0
  %1732 = vmatpush1.bf16.msra.mxu0 0
  %1733 = vmatprep.subr.bf16.mxu0 0
  %1734 = vmatpush1.bf16.msra.mxu0 0
  %1735 = vmatprep.subr.bf16.mxu0 0
  %1736 = vmatpush1.bf16.msra.mxu0 %v1698
  %1737 = vmatprep.subr.bf16.mxu0 0
  %1738 = vmatpush1.bf16.msra.mxu0 %v1697
  %1739 = vmatprep.subr.bf16.mxu0 0
  %1740 = vmatpush1.bf16.msra.mxu0 %v1696
  %1741 = vmatprep.subr.bf16.mxu0 0
  %1742 = vmatpush1.bf16.msra.mxu0 %v1695
  %1743 = vmatprep.subr.bf16.mxu0 0
  %1744 = vmatpush2.bf16.msra.mxu0 0
  %1745 = vmatprep.subr.bf16.mxu0 0
  %1746 = vmatpush2.bf16.msra.mxu0 0
  %1747 = vmatprep.subr.bf16.mxu0 0
  %1748 = vmatpush2.bf16.msra.mxu0 0
  %1749 = vmatprep.subr.bf16.mxu0 0
  %1750 = vmatpush2.bf16.msra.mxu0 0
  %1751 = vmatprep.subr.bf16.mxu0 0
  %1752 = vmatpush2.bf16.msra.mxu0 0
  %1753 = vmatprep.subr.bf16.mxu0 0
  %1754 = vmatpush2.bf16.msra.mxu0 0
  %1755 = vmatprep.subr.bf16.mxu0 0
  %1756 = vmatpush2.bf16.msra.mxu0 0
  %1757 = vmatprep.subr.bf16.mxu0 0
  %1758 = vmatpush2.bf16.msra.mxu0 0
  %1759 = vmatprep.mubr.bf16.mxu0 0
  %1760 = vmatmul.mubr.bf16.gmra.mxu0 %v1704
  %v1761 = vpop.f32.mrf.mxu0
  %v1762 = vadd.f32 0.0, %v1761
  %v1763 = vpop.f32.mrf.mxu0
  %v1764 = vpop.f32.mrf.mxu0
  %v1765 = vadd.f32 0.0, %v1764
  %v1766 = vpop.f32.mrf.mxu0
  %1767 = vmatprep.mubr.bf16.mxu0 0
  %1768 = vmatmul.mubr.bf16.gmra.mxu0 %v1707
  %v1769 = vpop.f32.mrf.mxu0
  %v1770 = vadd.f32 0.0, %v1769
  %v1771 = vpop.f32.mrf.mxu0
  %v1772 = vpop.f32.mrf.mxu0
  %v1773 = vadd.f32 0.0, %v1772
  %v1774 = vpop.f32.mrf.mxu0
  %1775 = vmatprep.mubr.bf16.mxu0 0
  %1776 = vmatmul.mubr.bf16.gmra.mxu0 %v1710
  %v1777 = vpop.f32.mrf.mxu0
  %v1778 = vadd.f32 0.0, %v1777
  %v1779 = vpop.f32.mrf.mxu0
  %v1780 = vpop.f32.mrf.mxu0
  %v1781 = vadd.f32 0.0, %v1780
  %v1782 = vpop.f32.mrf.mxu0
  %1783 = vmatprep.mubr.bf16.mxu0 0
  %1784 = vmatmul.mubr.bf16.gmra.mxu0 %v1713
  %v1785 = vpop.f32.mrf.mxu0
  %v1786 = vadd.f32 0.0, %v1785
  %v1787 = vpop.f32.mrf.mxu0
  %v1788 = vpop.f32.mrf.mxu0
  %v1789 = vadd.f32 0.0, %v1788
  %v1790 = vpop.f32.mrf.mxu0
  %1791 = vmatprep.mubr.bf16.mxu0 0
  %1792 = vmatmul.mubr.bf16.gmra.mxu0 %v1716
  %v1793 = vpop.f32.mrf.mxu0
  %v1794 = vadd.f32 0.0, %v1793
  %v1795 = vpop.f32.mrf.mxu0
  %v1796 = vpop.f32.mrf.mxu0
  %v1797 = vadd.f32 0.0, %v1796
  %v1798 = vpop.f32.mrf.mxu0
  %1799 = vmatprep.mubr.bf16.mxu0 0
  %1800 = vmatmul.mubr.bf16.gmra.mxu0 %v1719
  %v1801 = vpop.f32.mrf.mxu0
  %v1802 = vadd.f32 0.0, %v1801
  %v1803 = vpop.f32.mrf.mxu0
  %v1804 = vpop.f32.mrf.mxu0
  %v1805 = vadd.f32 0.0, %v1804
  %v1806 = vpop.f32.mrf.mxu0
  %1807 = vmatprep.mubr.bf16.mxu0 0
  %1808 = vmatmul.mubr.bf16.gmra.mxu0 %v1722
  %v1809 = vpop.f32.mrf.mxu0
  %v1810 = vadd.f32 0.0, %v1809
  %v1811 = vpop.f32.mrf.mxu0
  %v1812 = vpop.f32.mrf.mxu0
  %v1813 = vadd.f32 0.0, %v1812
  %v1814 = vpop.f32.mrf.mxu0
  %1815 = vmatprep.mubr.bf16.mxu0 0
  %1816 = vmatmul.mubr.bf16.gmra.mxu0 %v1725
  %v1817 = vpop.f32.mrf.mxu0
  %v1818 = vadd.f32 0.0, %v1817
  %v1819 = vpop.f32.mrf.mxu0
  %v1820 = vpop.f32.mrf.mxu0
  %v1821 = vadd.f32 0.0, %v1820
  %v1822 = vpop.f32.mrf.mxu0
  %1823 = vdwg.mxu0
  %v1824 = vadd.f32 %v1631, %v1762
  %v1825 = vadd.f32 %v1632, %v1765
  %v1826 = vadd.f32 %v1633, %v1770
  %v1827 = vadd.f32 %v1634, %v1773
  %v1828 = vadd.f32 %v1635, %v1778
  %v1829 = vadd.f32 %v1636, %v1781
  %v1830 = vadd.f32 %v1637, %v1786
  %v1831 = vadd.f32 %v1638, %v1789
  %v1832 = vadd.f32 %v1639, %v1794
  %v1833 = vadd.f32 %v1640, %v1797
  %v1834 = vadd.f32 %v1641, %v1802
  %v1835 = vadd.f32 %v1642, %v1805
  %v1836 = vadd.f32 %v1643, %v1810
  %v1837 = vadd.f32 %v1644, %v1813
  %v1838 = vadd.f32 %v1645, %v1818
  %v1839 = vadd.f32 %v1646, %v1821
  %s1840 = scalar_lea.vmem [#allocation2], 32
  %v1841 = vld [vmem:[%s1840] sm:$0xff]
  %v1842 = vld [vmem:[%s1840 + $0x10] sm:$0xff]
  %v1843 = vld [vmem:[%s1840 + $0x20] sm:$0xff]
  %v1844 = vld [vmem:[%s1840 + $0x30] sm:$0xff]
  %v1845 = vld [vmem:[%s1840 + $0x40] sm:$0xff]
  %v1846 = vld [vmem:[%s1840 + $0x50] sm:$0xff]
  %v1847 = vld [vmem:[%s1840 + $0x60] sm:$0xff]
  %v1848 = vld [vmem:[%s1840 + $0x70] sm:$0xff]
  %v1849 = vld [vmem:[%s1840 + $0xa0] sm:$0xff]
  %v1850 = vld [vmem:[%s1840 + $0xb0] sm:$0xff]
  %v1851 = vld [vmem:[%s1840 + $0xc0] sm:$0xff]
  %v1852 = vld [vmem:[%s1840 + $0xd0] sm:$0xff]
  %v1853 = vld [vmem:[%s1840 + $0xe0] sm:$0xff]
  %v1854 = vld [vmem:[%s1840 + $0xf0] sm:$0xff]
  %v1855 = vld [vmem:[%s1840 + $0x100] sm:$0xff]
  %v1856 = vld [vmem:[%s1840 + $0x110] sm:$0xff]
  %v1857 = vpack.c.bf16 %v1842, %v1841
  %v1858 = vpack.c.bf16 %v1844, %v1843
  %v1859 = vpack.c.bf16 %v1846, %v1845
  %v1860 = vpack.c.bf16 %v1848, %v1847
  %v1861 = vpack.c.bf16 %v1850, %v1849
  %v1862 = vpack.c.bf16 %v1852, %v1851
  %v1863 = vpack.c.bf16 %v1854, %v1853
  %v1864 = vpack.c.bf16 %v1856, %v1855
  %v1865 = vld [vmem:[%s2 + $0xc0] sm:$0xf]
  %v1866 = vld [vmem:[%s2 + $0xc4] sm:$0xf]
  %v1867 = vld [vmem:[%s2 + $0xc8] sm:$0xf]
  %v1868 = vld [vmem:[%s2 + $0xcc] sm:$0xf]
  %v1869 = vld [vmem:[%s2 + $0xd0] sm:$0xf]
  %v1870 = vld [vmem:[%s2 + $0xd4] sm:$0xf]
  %v1871 = vld [vmem:[%s2 + $0xd8] sm:$0xf]
  %v1872 = vld [vmem:[%s2 + $0xdc] sm:$0xf]
  %v1881 = vunpack.c.l.b16 %v1865
  %v1882 = vunpack.c.l.b16 %v1866
  %v1883 = vunpack.c.l.b16 %v1867
  %v1884 = vunpack.c.l.b16 %v1868
  %v1885 = vunpack.c.l.b16 %v1869
  %v1886 = vunpack.c.l.b16 %v1870
  %v1887 = vunpack.c.l.b16 %v1871
  %v1888 = vunpack.c.l.b16 %v1872
  %v1889 = vpack.c.b16 %v1882, %v1881
  %v1890 = vpack.c.b16 %v1884, %v1883
  %v1891 = vpack.c.b16 %v1886, %v1885
  %v1892 = vpack.c.b16 %v1888, %v1887
  %v1898 = vsel %vm311, %v1857, 0
  %v1901 = vsel %vm311, %v1858, 0
  %v1904 = vsel %vm311, %v1859, 0
  %v1907 = vsel %vm311, %v1860, 0
  %v1910 = vsel %vm311, %v1861, 0
  %v1913 = vsel %vm311, %v1862, 0
  %v1916 = vsel %vm311, %v1863, 0
  %v1919 = vsel %vm311, %v1864, 0
  %1921 = vmatprep.subr.bf16.mxu0 0
  %1922 = vmatpush1.bf16.msra.mxu0 0
  %1923 = vmatprep.subr.bf16.mxu0 0
  %1924 = vmatpush1.bf16.msra.mxu0 0
  %1925 = vmatprep.subr.bf16.mxu0 0
  %1926 = vmatpush1.bf16.msra.mxu0 0
  %1927 = vmatprep.subr.bf16.mxu0 0
  %1928 = vmatpush1.bf16.msra.mxu0 0
  %1929 = vmatprep.subr.bf16.mxu0 0
  %1930 = vmatpush1.bf16.msra.mxu0 %v1892
  %1931 = vmatprep.subr.bf16.mxu0 0
  %1932 = vmatpush1.bf16.msra.mxu0 %v1891
  %1933 = vmatprep.subr.bf16.mxu0 0
  %1934 = vmatpush1.bf16.msra.mxu0 %v1890
  %1935 = vmatprep.subr.bf16.mxu0 0
  %1936 = vmatpush1.bf16.msra.mxu0 %v1889
  %1937 = vmatprep.subr.bf16.mxu0 0
  %1938 = vmatpush2.bf16.msra.mxu0 0
  %1939 = vmatprep.subr.bf16.mxu0 0
  %1940 = vmatpush2.bf16.msra.mxu0 0
  %1941 = vmatprep.subr.bf16.mxu0 0
  %1942 = vmatpush2.bf16.msra.mxu0 0
  %1943 = vmatprep.subr.bf16.mxu0 0
  %1944 = vmatpush2.bf16.msra.mxu0 0
  %1945 = vmatprep.subr.bf16.mxu0 0
  %1946 = vmatpush2.bf16.msra.mxu0 0
  %1947 = vmatprep.subr.bf16.mxu0 0
  %1948 = vmatpush2.bf16.msra.mxu0 0
  %1949 = vmatprep.subr.bf16.mxu0 0
  %1950 = vmatpush2.bf16.msra.mxu0 0
  %1951 = vmatprep.subr.bf16.mxu0 0
  %1952 = vmatpush2.bf16.msra.mxu0 0
  %1953 = vmatprep.mubr.bf16.mxu0 0
  %1954 = vmatmul.mubr.bf16.gmra.mxu0 %v1898
  %v1955 = vpop.f32.mrf.mxu0
  %v1956 = vadd.f32 0.0, %v1955
  %v1957 = vpop.f32.mrf.mxu0
  %v1958 = vpop.f32.mrf.mxu0
  %v1959 = vadd.f32 0.0, %v1958
  %v1960 = vpop.f32.mrf.mxu0
  %1961 = vmatprep.mubr.bf16.mxu0 0
  %1962 = vmatmul.mubr.bf16.gmra.mxu0 %v1901
  %v1963 = vpop.f32.mrf.mxu0
  %v1964 = vadd.f32 0.0, %v1963
  %v1965 = vpop.f32.mrf.mxu0
  %v1966 = vpop.f32.mrf.mxu0
  %v1967 = vadd.f32 0.0, %v1966
  %v1968 = vpop.f32.mrf.mxu0
  %1969 = vmatprep.mubr.bf16.mxu0 0
  %1970 = vmatmul.mubr.bf16.gmra.mxu0 %v1904
  %v1971 = vpop.f32.mrf.mxu0
  %v1972 = vadd.f32 0.0, %v1971
  %v1973 = vpop.f32.mrf.mxu0
  %v1974 = vpop.f32.mrf.mxu0
  %v1975 = vadd.f32 0.0, %v1974
  %v1976 = vpop.f32.mrf.mxu0
  %1977 = vmatprep.mubr.bf16.mxu0 0
  %1978 = vmatmul.mubr.bf16.gmra.mxu0 %v1907
  %v1979 = vpop.f32.mrf.mxu0
  %v1980 = vadd.f32 0.0, %v1979
  %v1981 = vpop.f32.mrf.mxu0
  %v1982 = vpop.f32.mrf.mxu0
  %v1983 = vadd.f32 0.0, %v1982
  %v1984 = vpop.f32.mrf.mxu0
  %1985 = vmatprep.mubr.bf16.mxu0 0
  %1986 = vmatmul.mubr.bf16.gmra.mxu0 %v1910
  %v1987 = vpop.f32.mrf.mxu0
  %v1988 = vadd.f32 0.0, %v1987
  %v1989 = vpop.f32.mrf.mxu0
  %v1990 = vpop.f32.mrf.mxu0
  %v1991 = vadd.f32 0.0, %v1990
  %v1992 = vpop.f32.mrf.mxu0
  %1993 = vmatprep.mubr.bf16.mxu0 0
  %1994 = vmatmul.mubr.bf16.gmra.mxu0 %v1913
  %v1995 = vpop.f32.mrf.mxu0
  %v1996 = vadd.f32 0.0, %v1995
  %v1997 = vpop.f32.mrf.mxu0
  %v1998 = vpop.f32.mrf.mxu0
  %v1999 = vadd.f32 0.0, %v1998
  %v2000 = vpop.f32.mrf.mxu0
  %2001 = vmatprep.mubr.bf16.mxu0 0
  %2002 = vmatmul.mubr.bf16.gmra.mxu0 %v1916
  %v2003 = vpop.f32.mrf.mxu0
  %v2004 = vadd.f32 0.0, %v2003
  %v2005 = vpop.f32.mrf.mxu0
  %v2006 = vpop.f32.mrf.mxu0
  %v2007 = vadd.f32 0.0, %v2006
  %v2008 = vpop.f32.mrf.mxu0
  %2009 = vmatprep.mubr.bf16.mxu0 0
  %2010 = vmatmul.mubr.bf16.gmra.mxu0 %v1919
  %v2011 = vpop.f32.mrf.mxu0
  %v2012 = vadd.f32 0.0, %v2011
  %v2013 = vpop.f32.mrf.mxu0
  %v2014 = vpop.f32.mrf.mxu0
  %v2015 = vadd.f32 0.0, %v2014
  %v2016 = vpop.f32.mrf.mxu0
  %2017 = vdwg.mxu0
  %v2018 = vadd.f32 %v1824, %v1956
  %v2019 = vadd.f32 %v1825, %v1959
  %v2020 = vadd.f32 %v1826, %v1964
  %v2021 = vadd.f32 %v1827, %v1967
  %v2022 = vadd.f32 %v1828, %v1972
  %v2023 = vadd.f32 %v1829, %v1975
  %v2024 = vadd.f32 %v1830, %v1980
  %v2025 = vadd.f32 %v1831, %v1983
  %v2026 = vadd.f32 %v1832, %v1988
  %v2027 = vadd.f32 %v1833, %v1991
  %v2028 = vadd.f32 %v1834, %v1996
  %v2029 = vadd.f32 %v1835, %v1999
  %v2030 = vadd.f32 %v1836, %v2004
  %v2031 = vadd.f32 %v1837, %v2007
  %v2032 = vadd.f32 %v1838, %v2012
  %v2033 = vadd.f32 %v1839, %v2015
  %v2034 = vld [vmem:[%s1840 + $0x1] sm:$0xff]
  %v2035 = vld [vmem:[%s1840 + $0x11] sm:$0xff]
  %v2036 = vld [vmem:[%s1840 + $0x21] sm:$0xff]
  %v2037 = vld [vmem:[%s1840 + $0x31] sm:$0xff]
  %v2038 = vld [vmem:[%s1840 + $0x41] sm:$0xff]
  %v2039 = vld [vmem:[%s1840 + $0x51] sm:$0xff]
  %v2040 = vld [vmem:[%s1840 + $0x61] sm:$0xff]
  %v2041 = vld [vmem:[%s1840 + $0x71] sm:$0xff]
  %v2042 = vld [vmem:[%s1840 + $0xa1] sm:$0xff]
  %v2043 = vld [vmem:[%s1840 + $0xb1] sm:$0xff]
  %v2044 = vld [vmem:[%s1840 + $0xc1] sm:$0xff]
  %v2045 = vld [vmem:[%s1840 + $0xd1] sm:$0xff]
  %v2046 = vld [vmem:[%s1840 + $0xe1] sm:$0xff]
  %v2047 = vld [vmem:[%s1840 + $0xf1] sm:$0xff]
  %v2048 = vld [vmem:[%s1840 + $0x101] sm:$0xff]
  %v2049 = vld [vmem:[%s1840 + $0x111] sm:$0xff]
  %v2050 = vpack.c.bf16 %v2035, %v2034
  %v2051 = vpack.c.bf16 %v2037, %v2036
  %v2052 = vpack.c.bf16 %v2039, %v2038
  %v2053 = vpack.c.bf16 %v2041, %v2040
  %v2054 = vpack.c.bf16 %v2043, %v2042
  %v2055 = vpack.c.bf16 %v2045, %v2044
  %v2056 = vpack.c.bf16 %v2047, %v2046
  %v2057 = vpack.c.bf16 %v2049, %v2048
  %v2058 = vld [vmem:[%s2 + $0xe0] sm:$0xf]
  %v2059 = vld [vmem:[%s2 + $0xe4] sm:$0xf]
  %v2060 = vld [vmem:[%s2 + $0xe8] sm:$0xf]
  %v2061 = vld [vmem:[%s2 + $0xec] sm:$0xf]
  %v2062 = vld [vmem:[%s2 + $0xf0] sm:$0xf]
  %v2063 = vld [vmem:[%s2 + $0xf4] sm:$0xf]
  %v2064 = vld [vmem:[%s2 + $0xf8] sm:$0xf]
  %v2065 = vld [vmem:[%s2 + $0xfc] sm:$0xf]
  %v2074 = vunpack.c.l.b16 %v2058
  %v2075 = vunpack.c.l.b16 %v2059
  %v2076 = vunpack.c.l.b16 %v2060
  %v2077 = vunpack.c.l.b16 %v2061
  %v2078 = vunpack.c.l.b16 %v2062
  %v2079 = vunpack.c.l.b16 %v2063
  %v2080 = vunpack.c.l.b16 %v2064
  %v2081 = vunpack.c.l.b16 %v2065
  %v2082 = vpack.c.b16 %v2075, %v2074
  %v2083 = vpack.c.b16 %v2077, %v2076
  %v2084 = vpack.c.b16 %v2079, %v2078
  %v2085 = vpack.c.b16 %v2081, %v2080
  %v2091 = vsel %vm311, %v2050, 0
  %v2094 = vsel %vm311, %v2051, 0
  %v2097 = vsel %vm311, %v2052, 0
  %v2100 = vsel %vm311, %v2053, 0
  %v2103 = vsel %vm311, %v2054, 0
  %v2106 = vsel %vm311, %v2055, 0
  %v2109 = vsel %vm311, %v2056, 0
  %v2112 = vsel %vm311, %v2057, 0
  %2114 = vmatprep.subr.bf16.mxu0 0
  %2115 = vmatpush1.bf16.msra.mxu0 0
  %2116 = vmatprep.subr.bf16.mxu0 0
  %2117 = vmatpush1.bf16.msra.mxu0 0
  %2118 = vmatprep.subr.bf16.mxu0 0
  %2119 = vmatpush1.bf16.msra.mxu0 0
  %2120 = vmatprep.subr.bf16.mxu0 0
  %2121 = vmatpush1.bf16.msra.mxu0 0
  %2122 = vmatprep.subr.bf16.mxu0 0
  %2123 = vmatpush1.bf16.msra.mxu0 %v2085
  %2124 = vmatprep.subr.bf16.mxu0 0
  %2125 = vmatpush1.bf16.msra.mxu0 %v2084
  %2126 = vmatprep.subr.bf16.mxu0 0
  %2127 = vmatpush1.bf16.msra.mxu0 %v2083
  %2128 = vmatprep.subr.bf16.mxu0 0
  %2129 = vmatpush1.bf16.msra.mxu0 %v2082
  %2130 = vmatprep.subr.bf16.mxu0 0
  %2131 = vmatpush2.bf16.msra.mxu0 0
  %2132 = vmatprep.subr.bf16.mxu0 0
  %2133 = vmatpush2.bf16.msra.mxu0 0
  %2134 = vmatprep.subr.bf16.mxu0 0
  %2135 = vmatpush2.bf16.msra.mxu0 0
  %2136 = vmatprep.subr.bf16.mxu0 0
  %2137 = vmatpush2.bf16.msra.mxu0 0
  %2138 = vmatprep.subr.bf16.mxu0 0
  %2139 = vmatpush2.bf16.msra.mxu0 0
  %2140 = vmatprep.subr.bf16.mxu0 0
  %2141 = vmatpush2.bf16.msra.mxu0 0
  %2142 = vmatprep.subr.bf16.mxu0 0
  %2143 = vmatpush2.bf16.msra.mxu0 0
  %2144 = vmatprep.subr.bf16.mxu0 0
  %2145 = vmatpush2.bf16.msra.mxu0 0
  %2146 = vmatprep.mubr.bf16.mxu0 0
  %2147 = vmatmul.mubr.bf16.gmra.mxu0 %v2091
  %v2148 = vpop.f32.mrf.mxu0
  %v2149 = vadd.f32 0.0, %v2148
  %v2150 = vpop.f32.mrf.mxu0
  %v2151 = vpop.f32.mrf.mxu0
  %v2152 = vadd.f32 0.0, %v2151
  %v2153 = vpop.f32.mrf.mxu0
  %2154 = vmatprep.mubr.bf16.mxu0 0
  %2155 = vmatmul.mubr.bf16.gmra.mxu0 %v2094
  %v2156 = vpop.f32.mrf.mxu0
  %v2157 = vadd.f32 0.0, %v2156
  %v2158 = vpop.f32.mrf.mxu0
  %v2159 = vpop.f32.mrf.mxu0
  %v2160 = vadd.f32 0.0, %v2159
  %v2161 = vpop.f32.mrf.mxu0
  %2162 = vmatprep.mubr.bf16.mxu0 0
  %2163 = vmatmul.mubr.bf16.gmra.mxu0 %v2097
  %v2164 = vpop.f32.mrf.mxu0
  %v2165 = vadd.f32 0.0, %v2164
  %v2166 = vpop.f32.mrf.mxu0
  %v2167 = vpop.f32.mrf.mxu0
  %v2168 = vadd.f32 0.0, %v2167
  %v2169 = vpop.f32.mrf.mxu0
  %2170 = vmatprep.mubr.bf16.mxu0 0
  %2171 = vmatmul.mubr.bf16.gmra.mxu0 %v2100
  %v2172 = vpop.f32.mrf.mxu0
  %v2173 = vadd.f32 0.0, %v2172
  %v2174 = vpop.f32.mrf.mxu0
  %v2175 = vpop.f32.mrf.mxu0
  %v2176 = vadd.f32 0.0, %v2175
  %v2177 = vpop.f32.mrf.mxu0
  %2178 = vmatprep.mubr.bf16.mxu0 0
  %2179 = vmatmul.mubr.bf16.gmra.mxu0 %v2103
  %v2180 = vpop.f32.mrf.mxu0
  %v2181 = vadd.f32 0.0, %v2180
  %v2182 = vpop.f32.mrf.mxu0
  %v2183 = vpop.f32.mrf.mxu0
  %v2184 = vadd.f32 0.0, %v2183
  %v2185 = vpop.f32.mrf.mxu0
  %2186 = vmatprep.mubr.bf16.mxu0 0
  %2187 = vmatmul.mubr.bf16.gmra.mxu0 %v2106
  %v2188 = vpop.f32.mrf.mxu0
  %v2189 = vadd.f32 0.0, %v2188
  %v2190 = vpop.f32.mrf.mxu0
  %v2191 = vpop.f32.mrf.mxu0
  %v2192 = vadd.f32 0.0, %v2191
  %v2193 = vpop.f32.mrf.mxu0
  %2194 = vmatprep.mubr.bf16.mxu0 0
  %2195 = vmatmul.mubr.bf16.gmra.mxu0 %v2109
  %v2196 = vpop.f32.mrf.mxu0
  %v2197 = vadd.f32 0.0, %v2196
  %v2198 = vpop.f32.mrf.mxu0
  %v2199 = vpop.f32.mrf.mxu0
  %v2200 = vadd.f32 0.0, %v2199
  %v2201 = vpop.f32.mrf.mxu0
  %2202 = vmatprep.mubr.bf16.mxu0 0
  %2203 = vmatmul.mubr.bf16.gmra.mxu0 %v2112
  %v2204 = vpop.f32.mrf.mxu0
  %v2205 = vadd.f32 0.0, %v2204
  %v2206 = vpop.f32.mrf.mxu0
  %v2207 = vpop.f32.mrf.mxu0
  %v2208 = vadd.f32 0.0, %v2207
  %v2209 = vpop.f32.mrf.mxu0
  %2210 = vdwg.mxu0
  %v2211 = vadd.f32 %v2018, %v2149
  %v2212 = vadd.f32 %v2019, %v2152
  %v2213 = vadd.f32 %v2020, %v2157
  %v2214 = vadd.f32 %v2021, %v2160
  %v2215 = vadd.f32 %v2022, %v2165
  %v2216 = vadd.f32 %v2023, %v2168
  %v2217 = vadd.f32 %v2024, %v2173
  %v2218 = vadd.f32 %v2025, %v2176
  %v2219 = vadd.f32 %v2026, %v2181
  %v2220 = vadd.f32 %v2027, %v2184
  %v2221 = vadd.f32 %v2028, %v2189
  %v2222 = vadd.f32 %v2029, %v2192
  %v2223 = vadd.f32 %v2030, %v2197
  %v2224 = vadd.f32 %v2031, %v2200
  %v2225 = vadd.f32 %v2032, %v2205
  %v2226 = vadd.f32 %v2033, %v2208
  %v2227 = vld [vmem:[%s1840 + $0x2] sm:$0xff]
  %v2228 = vld [vmem:[%s1840 + $0x12] sm:$0xff]
  %v2229 = vld [vmem:[%s1840 + $0x22] sm:$0xff]
  %v2230 = vld [vmem:[%s1840 + $0x32] sm:$0xff]
  %v2231 = vld [vmem:[%s1840 + $0x42] sm:$0xff]
  %v2232 = vld [vmem:[%s1840 + $0x52] sm:$0xff]
  %v2233 = vld [vmem:[%s1840 + $0x62] sm:$0xff]
  %v2234 = vld [vmem:[%s1840 + $0x72] sm:$0xff]
  %v2235 = vld [vmem:[%s1840 + $0xa2] sm:$0xff]
  %v2236 = vld [vmem:[%s1840 + $0xb2] sm:$0xff]
  %v2237 = vld [vmem:[%s1840 + $0xc2] sm:$0xff]
  %v2238 = vld [vmem:[%s1840 + $0xd2] sm:$0xff]
  %v2239 = vld [vmem:[%s1840 + $0xe2] sm:$0xff]
  %v2240 = vld [vmem:[%s1840 + $0xf2] sm:$0xff]
  %v2241 = vld [vmem:[%s1840 + $0x102] sm:$0xff]
  %v2242 = vld [vmem:[%s1840 + $0x112] sm:$0xff]
  %v2243 = vpack.c.bf16 %v2228, %v2227
  %v2244 = vpack.c.bf16 %v2230, %v2229
  %v2245 = vpack.c.bf16 %v2232, %v2231
  %v2246 = vpack.c.bf16 %v2234, %v2233
  %v2247 = vpack.c.bf16 %v2236, %v2235
  %v2248 = vpack.c.bf16 %v2238, %v2237
  %v2249 = vpack.c.bf16 %v2240, %v2239
  %v2250 = vpack.c.bf16 %v2242, %v2241
  %v2251 = vld [vmem:[%s2 + $0x100] sm:$0xf]
  %v2252 = vld [vmem:[%s2 + $0x104] sm:$0xf]
  %v2253 = vld [vmem:[%s2 + $0x108] sm:$0xf]
  %v2254 = vld [vmem:[%s2 + $0x10c] sm:$0xf]
  %v2255 = vld [vmem:[%s2 + $0x110] sm:$0xf]
  %v2256 = vld [vmem:[%s2 + $0x114] sm:$0xf]
  %v2257 = vld [vmem:[%s2 + $0x118] sm:$0xf]
  %v2258 = vld [vmem:[%s2 + $0x11c] sm:$0xf]
  %v2267 = vunpack.c.l.b16 %v2251
  %v2268 = vunpack.c.l.b16 %v2252
  %v2269 = vunpack.c.l.b16 %v2253
  %v2270 = vunpack.c.l.b16 %v2254
  %v2271 = vunpack.c.l.b16 %v2255
  %v2272 = vunpack.c.l.b16 %v2256
  %v2273 = vunpack.c.l.b16 %v2257
  %v2274 = vunpack.c.l.b16 %v2258
  %v2275 = vpack.c.b16 %v2268, %v2267
  %v2276 = vpack.c.b16 %v2270, %v2269
  %v2277 = vpack.c.b16 %v2272, %v2271
  %v2278 = vpack.c.b16 %v2274, %v2273
  %v2284 = vsel %vm311, %v2243, 0
  %v2287 = vsel %vm311, %v2244, 0
  %v2290 = vsel %vm311, %v2245, 0
  %v2293 = vsel %vm311, %v2246, 0
  %v2296 = vsel %vm311, %v2247, 0
  %v2299 = vsel %vm311, %v2248, 0
  %v2302 = vsel %vm311, %v2249, 0
  %v2305 = vsel %vm311, %v2250, 0
  %2307 = vmatprep.subr.bf16.mxu0 0
  %2308 = vmatpush1.bf16.msra.mxu0 0
  %2309 = vmatprep.subr.bf16.mxu0 0
  %2310 = vmatpush1.bf16.msra.mxu0 0
  %2311 = vmatprep.subr.bf16.mxu0 0
  %2312 = vmatpush1.bf16.msra.mxu0 0
  %2313 = vmatprep.subr.bf16.mxu0 0
  %2314 = vmatpush1.bf16.msra.mxu0 0
  %2315 = vmatprep.subr.bf16.mxu0 0
  %2316 = vmatpush1.bf16.msra.mxu0 %v2278
  %2317 = vmatprep.subr.bf16.mxu0 0
  %2318 = vmatpush1.bf16.msra.mxu0 %v2277
  %2319 = vmatprep.subr.bf16.mxu0 0
  %2320 = vmatpush1.bf16.msra.mxu0 %v2276
  %2321 = vmatprep.subr.bf16.mxu0 0
  %2322 = vmatpush1.bf16.msra.mxu0 %v2275
  %2323 = vmatprep.subr.bf16.mxu0 0
  %2324 = vmatpush2.bf16.msra.mxu0 0
  %2325 = vmatprep.subr.bf16.mxu0 0
  %2326 = vmatpush2.bf16.msra.mxu0 0
  %2327 = vmatprep.subr.bf16.mxu0 0
  %2328 = vmatpush2.bf16.msra.mxu0 0
  %2329 = vmatprep.subr.bf16.mxu0 0
  %2330 = vmatpush2.bf16.msra.mxu0 0
  %2331 = vmatprep.subr.bf16.mxu0 0
  %2332 = vmatpush2.bf16.msra.mxu0 0
  %2333 = vmatprep.subr.bf16.mxu0 0
  %2334 = vmatpush2.bf16.msra.mxu0 0
  %2335 = vmatprep.subr.bf16.mxu0 0
  %2336 = vmatpush2.bf16.msra.mxu0 0
  %2337 = vmatprep.subr.bf16.mxu0 0
  %2338 = vmatpush2.bf16.msra.mxu0 0
  %2339 = vmatprep.mubr.bf16.mxu0 0
  %2340 = vmatmul.mubr.bf16.gmra.mxu0 %v2284
  %v2341 = vpop.f32.mrf.mxu0
  %v2342 = vadd.f32 0.0, %v2341
  %v2343 = vpop.f32.mrf.mxu0
  %v2344 = vpop.f32.mrf.mxu0
  %v2345 = vadd.f32 0.0, %v2344
  %v2346 = vpop.f32.mrf.mxu0
  %2347 = vmatprep.mubr.bf16.mxu0 0
  %2348 = vmatmul.mubr.bf16.gmra.mxu0 %v2287
  %v2349 = vpop.f32.mrf.mxu0
  %v2350 = vadd.f32 0.0, %v2349
  %v2351 = vpop.f32.mrf.mxu0
  %v2352 = vpop.f32.mrf.mxu0
  %v2353 = vadd.f32 0.0, %v2352
  %v2354 = vpop.f32.mrf.mxu0
  %2355 = vmatprep.mubr.bf16.mxu0 0
  %2356 = vmatmul.mubr.bf16.gmra.mxu0 %v2290
  %v2357 = vpop.f32.mrf.mxu0
  %v2358 = vadd.f32 0.0, %v2357
  %v2359 = vpop.f32.mrf.mxu0
  %v2360 = vpop.f32.mrf.mxu0
  %v2361 = vadd.f32 0.0, %v2360
  %v2362 = vpop.f32.mrf.mxu0
  %2363 = vmatprep.mubr.bf16.mxu0 0
  %2364 = vmatmul.mubr.bf16.gmra.mxu0 %v2293
  %v2365 = vpop.f32.mrf.mxu0
  %v2366 = vadd.f32 0.0, %v2365
  %v2367 = vpop.f32.mrf.mxu0
  %v2368 = vpop.f32.mrf.mxu0
  %v2369 = vadd.f32 0.0, %v2368
  %v2370 = vpop.f32.mrf.mxu0
  %2371 = vmatprep.mubr.bf16.mxu0 0
  %2372 = vmatmul.mubr.bf16.gmra.mxu0 %v2296
  %v2373 = vpop.f32.mrf.mxu0
  %v2374 = vadd.f32 0.0, %v2373
  %v2375 = vpop.f32.mrf.mxu0
  %v2376 = vpop.f32.mrf.mxu0
  %v2377 = vadd.f32 0.0, %v2376
  %v2378 = vpop.f32.mrf.mxu0
  %2379 = vmatprep.mubr.bf16.mxu0 0
  %2380 = vmatmul.mubr.bf16.gmra.mxu0 %v2299
  %v2381 = vpop.f32.mrf.mxu0
  %v2382 = vadd.f32 0.0, %v2381
  %v2383 = vpop.f32.mrf.mxu0
  %v2384 = vpop.f32.mrf.mxu0
  %v2385 = vadd.f32 0.0, %v2384
  %v2386 = vpop.f32.mrf.mxu0
  %2387 = vmatprep.mubr.bf16.mxu0 0
  %2388 = vmatmul.mubr.bf16.gmra.mxu0 %v2302
  %v2389 = vpop.f32.mrf.mxu0
  %v2390 = vadd.f32 0.0, %v2389
  %v2391 = vpop.f32.mrf.mxu0
  %v2392 = vpop.f32.mrf.mxu0
  %v2393 = vadd.f32 0.0, %v2392
  %v2394 = vpop.f32.mrf.mxu0
  %2395 = vmatprep.mubr.bf16.mxu0 0
  %2396 = vmatmul.mubr.bf16.gmra.mxu0 %v2305
  %v2397 = vpop.f32.mrf.mxu0
  %v2398 = vadd.f32 0.0, %v2397
  %v2399 = vpop.f32.mrf.mxu0
  %v2400 = vpop.f32.mrf.mxu0
  %v2401 = vadd.f32 0.0, %v2400
  %v2402 = vpop.f32.mrf.mxu0
  %2403 = vdwg.mxu0
  %v2404 = vadd.f32 %v2211, %v2342
  %v2405 = vadd.f32 %v2212, %v2345
  %v2406 = vadd.f32 %v2213, %v2350
  %v2407 = vadd.f32 %v2214, %v2353
  %v2408 = vadd.f32 %v2215, %v2358
  %v2409 = vadd.f32 %v2216, %v2361
  %v2410 = vadd.f32 %v2217, %v2366
  %v2411 = vadd.f32 %v2218, %v2369
  %v2412 = vadd.f32 %v2219, %v2374
  %v2413 = vadd.f32 %v2220, %v2377
  %v2414 = vadd.f32 %v2221, %v2382
  %v2415 = vadd.f32 %v2222, %v2385
  %v2416 = vadd.f32 %v2223, %v2390
  %v2417 = vadd.f32 %v2224, %v2393
  %v2418 = vadd.f32 %v2225, %v2398
  %v2419 = vadd.f32 %v2226, %v2401
  %v2420 = vld [vmem:[%s6] sm:$0x1]
  %v2421 = vld [vmem:[%s7] sm:$0x1]
  %v2422 = vsel %vm311, %v2404, 0.0
  %v2423 = vsel %vm311, %v2405, 0.0
  %v2424 = vadd.f32 %v2422, %v2423
  %v2425 = vsel %vm311, %v2406, 0.0
  %v2426 = vadd.f32 %v2424, %v2425
  %v2427 = vsel %vm311, %v2407, 0.0
  %v2428 = vadd.f32 %v2426, %v2427
  %v2429 = vsel %vm311, %v2408, 0.0
  %v2430 = vadd.f32 %v2428, %v2429
  %v2431 = vsel %vm311, %v2409, 0.0
  %v2432 = vadd.f32 %v2430, %v2431
  %v2433 = vsel %vm311, %v2410, 0.0
  %v2434 = vadd.f32 %v2432, %v2433
  %v2435 = vsel %vm311, %v2411, 0.0
  %v2436 = vadd.f32 %v2434, %v2435
  %v2437 = vsel %vm311, %v2412, 0.0
  %v2438 = vadd.f32 %v2436, %v2437
  %v2439 = vsel %vm311, %v2413, 0.0
  %v2440 = vadd.f32 %v2438, %v2439
  %v2441 = vsel %vm311, %v2414, 0.0
  %v2442 = vadd.f32 %v2440, %v2441
  %v2443 = vsel %vm311, %v2415, 0.0
  %v2444 = vadd.f32 %v2442, %v2443
  %v2445 = vsel %vm311, %v2416, 0.0
  %v2446 = vadd.f32 %v2444, %v2445
  %v2447 = vsel %vm311, %v2417, 0.0
  %v2448 = vadd.f32 %v2446, %v2447
  %v2449 = vsel %vm311, %v2418, 0.0
  %v2450 = vadd.f32 %v2448, %v2449
  %v2451 = vsel %vm311, %v2419, 0.0
  %v2452 = vadd.f32 %v2450, %v2451
  %v2453 = vrot.slane %v2452, 4
  %v2454 = vadd.f32 %v2452, %v2453
  %v2455 = vrot.slane %v2454, 2
  %v2456 = vadd.f32 %v2454, %v2455
  %v2457 = vrot.slane %v2456, 1
  %v2458 = vadd.f32 %v2456, %v2457
  %2460 = vrot.lane.b32.xlu0 %v2458, 120
  %v2461 = vpop.permute.xlu0 %2460
  %v2463 = vadd.f32 %v2458, %v2461
  %2464 = vrot.lane.b32.xlu0 %v2458, 112
  %v2465 = vpop.permute.xlu0 %2464
  %v2467 = vadd.f32 %v2463, %v2465
  %2468 = vrot.lane.b32.xlu0 %v2458, 104
  %v2469 = vpop.permute.xlu0 %2468
  %v2471 = vadd.f32 %v2467, %v2469
  %2472 = vrot.lane.b32.xlu0 %v2458, 96
  %v2473 = vpop.permute.xlu0 %2472
  %v2475 = vadd.f32 %v2471, %v2473
  %2476 = vrot.lane.b32.xlu0 %v2458, 88
  %v2477 = vpop.permute.xlu0 %2476
  %v2479 = vadd.f32 %v2475, %v2477
  %2480 = vrot.lane.b32.xlu0 %v2458, 80
  %v2481 = vpop.permute.xlu0 %2480
  %v2483 = vadd.f32 %v2479, %v2481
  %2484 = vrot.lane.b32.xlu0 %v2458, 72
  %v2485 = vpop.permute.xlu0 %2484
  %v2487 = vadd.f32 %v2483, %v2485
  %v2488 = vmul.f32 %v2487, %v378
  %2490 = vrot.lane.b32.xlu0 %v2488, 8
  %v2491 = vpop.permute.xlu0 %2490
  %2493 = vrot.lane.b32.xlu0 %v2488, 16
  %v2494 = vpop.permute.xlu0 %2493
  %2496 = vrot.lane.b32.xlu0 %v2488, 24
  %v2497 = vpop.permute.xlu0 %2496
  %2499 = vrot.lane.b32.xlu0 %v2488, 32
  %v2500 = vpop.permute.xlu0 %2499
  %2502 = vrot.lane.b32.xlu0 %v2488, 40
  %v2503 = vpop.permute.xlu0 %2502
  %2505 = vrot.lane.b32.xlu0 %v2488, 48
  %v2506 = vpop.permute.xlu0 %2505
  %2508 = vrot.lane.b32.xlu0 %v2488, 56
  %v2509 = vpop.permute.xlu0 %2508
  %v2511 = vsel %vm402, %v2488, %v2491
  %v2512 = vsel %vm404, %v2511, %v2494
  %v2513 = vsel %vm406, %v2512, %v2497
  %v2514 = vsel %vm408, %v2513, %v2500
  %v2515 = vsel %vm410, %v2514, %v2503
  %v2516 = vsel %vm412, %v2515, %v2506
  %v2517 = vsel %vm414, %v2516, %v2509
  %v2518 = vlaneseq
  %v2519 = vshrl.u32 %v2518, 7
  %v2520 = vsub.s32 0, %v2519
  %v2521 = vrot.slane %v2517, %v2520
  %v2522 = vsub.f32 %v2404, %v2521
  %v2523 = vsub.f32 %v2405, %v2521
  %v2524 = vsub.f32 %v2406, %v2521
  %v2525 = vsub.f32 %v2407, %v2521
  %v2526 = vsub.f32 %v2408, %v2521
  %v2527 = vsub.f32 %v2409, %v2521
  %v2528 = vsub.f32 %v2410, %v2521
  %v2529 = vsub.f32 %v2411, %v2521
  %v2530 = vsub.f32 %v2412, %v2521
  %v2531 = vsub.f32 %v2413, %v2521
  %v2532 = vsub.f32 %v2414, %v2521
  %v2533 = vsub.f32 %v2415, %v2521
  %v2534 = vsub.f32 %v2416, %v2521
  %v2535 = vsub.f32 %v2417, %v2521
  %v2536 = vsub.f32 %v2418, %v2521
  %v2537 = vsub.f32 %v2419, %v2521
  %v2538 = vmul.f32 %v2522, %v2522
  %v2539 = vmul.f32 %v2523, %v2523
  %v2540 = vmul.f32 %v2524, %v2524
  %v2541 = vmul.f32 %v2525, %v2525
  %v2542 = vmul.f32 %v2526, %v2526
  %v2543 = vmul.f32 %v2527, %v2527
  %v2544 = vmul.f32 %v2528, %v2528
  %v2545 = vmul.f32 %v2529, %v2529
  %v2546 = vmul.f32 %v2530, %v2530
  %v2547 = vmul.f32 %v2531, %v2531
  %v2548 = vmul.f32 %v2532, %v2532
  %v2549 = vmul.f32 %v2533, %v2533
  %v2550 = vmul.f32 %v2534, %v2534
  %v2551 = vmul.f32 %v2535, %v2535
  %v2552 = vmul.f32 %v2536, %v2536
  %v2553 = vmul.f32 %v2537, %v2537
  %v2554 = vsel %vm311, %v2538, 0.0
  %v2555 = vsel %vm311, %v2539, 0.0
  %v2556 = vadd.f32 %v2554, %v2555
  %v2557 = vsel %vm311, %v2540, 0.0
  %v2558 = vadd.f32 %v2556, %v2557
  %v2559 = vsel %vm311, %v2541, 0.0
  %v2560 = vadd.f32 %v2558, %v2559
  %v2561 = vsel %vm311, %v2542, 0.0
  %v2562 = vadd.f32 %v2560, %v2561
  %v2563 = vsel %vm311, %v2543, 0.0
  %v2564 = vadd.f32 %v2562, %v2563
  %v2565 = vsel %vm311, %v2544, 0.0
  %v2566 = vadd.f32 %v2564, %v2565
  %v2567 = vsel %vm311, %v2545, 0.0
  %v2568 = vadd.f32 %v2566, %v2567
  %v2569 = vsel %vm311, %v2546, 0.0
  %v2570 = vadd.f32 %v2568, %v2569
  %v2571 = vsel %vm311, %v2547, 0.0
  %v2572 = vadd.f32 %v2570, %v2571
  %v2573 = vsel %vm311, %v2548, 0.0
  %v2574 = vadd.f32 %v2572, %v2573
  %v2575 = vsel %vm311, %v2549, 0.0
  %v2576 = vadd.f32 %v2574, %v2575
  %v2577 = vsel %vm311, %v2550, 0.0
  %v2578 = vadd.f32 %v2576, %v2577
  %v2579 = vsel %vm311, %v2551, 0.0
  %v2580 = vadd.f32 %v2578, %v2579
  %v2581 = vsel %vm311, %v2552, 0.0
  %v2582 = vadd.f32 %v2580, %v2581
  %v2583 = vsel %vm311, %v2553, 0.0
  %v2584 = vadd.f32 %v2582, %v2583
  %v2585 = vrot.slane %v2584, 4
  %v2586 = vadd.f32 %v2584, %v2585
  %v2587 = vrot.slane %v2586, 2
  %v2588 = vadd.f32 %v2586, %v2587
  %v2589 = vrot.slane %v2588, 1
  %v2590 = vadd.f32 %v2588, %v2589
  %2592 = vrot.lane.b32.xlu0 %v2590, 120
  %v2593 = vpop.permute.xlu0 %2592
  %v2595 = vadd.f32 %v2590, %v2593
  %2596 = vrot.lane.b32.xlu0 %v2590, 112
  %v2597 = vpop.permute.xlu0 %2596
  %v2599 = vadd.f32 %v2595, %v2597
  %2600 = vrot.lane.b32.xlu0 %v2590, 104
  %v2601 = vpop.permute.xlu0 %2600
  %v2603 = vadd.f32 %v2599, %v2601
  %2604 = vrot.lane.b32.xlu0 %v2590, 96
  %v2605 = vpop.permute.xlu0 %2604
  %v2607 = vadd.f32 %v2603, %v2605
  %2608 = vrot.lane.b32.xlu0 %v2590, 88
  %v2609 = vpop.permute.xlu0 %2608
  %v2611 = vadd.f32 %v2607, %v2609
  %2612 = vrot.lane.b32.xlu0 %v2590, 80
  %v2613 = vpop.permute.xlu0 %2612
  %v2615 = vadd.f32 %v2611, %v2613
  %2616 = vrot.lane.b32.xlu0 %v2590, 72
  %v2617 = vpop.permute.xlu0 %2616
  %v2619 = vadd.f32 %v2615, %v2617
  %v2620 = vmul.f32 %v2619, %v378
  %v2621 = vadd.f32 %v2620, 1e-05
  %v2622 = vrsqrt.pop %v2621
  %v2623 = vmul.f32 %v2420, %v2622
  %v2624 = vmul.f32 %v2488, %v2623
  %v2625 = vsub.f32 %v2421, %v2624
  %v2627 = vlaneseq
  %v2628 = vshrl.u32 %v2627, 7
  %v2629 = vsub.s32 0, %v2628
  %v2630 = vrot.slane %v2623, %v2629
  %2631 = vrot.lane.b32.xlu0 %v2630, 8
  %v2632 = vpop.permute.xlu0 %2631
  %2634 = vrot.lane.b32.xlu0 %v2630, 16
  %v2635 = vpop.permute.xlu0 %2634
  %2637 = vrot.lane.b32.xlu0 %v2630, 24
  %v2638 = vpop.permute.xlu0 %2637
  %2640 = vrot.lane.b32.xlu0 %v2630, 32
  %v2641 = vpop.permute.xlu0 %2640
  %2643 = vrot.lane.b32.xlu0 %v2630, 40
  %v2644 = vpop.permute.xlu0 %2643
  %2646 = vrot.lane.b32.xlu0 %v2630, 48
  %v2647 = vpop.permute.xlu0 %2646
  %2649 = vrot.lane.b32.xlu0 %v2630, 56
  %v2650 = vpop.permute.xlu0 %2649
  %v2652 = vsel %vm402, %v2623, %v2632
  %v2653 = vsel %vm404, %v2652, %v2635
  %v2654 = vsel %vm406, %v2653, %v2638
  %v2655 = vsel %vm408, %v2654, %v2641
  %v2656 = vsel %vm410, %v2655, %v2644
  %v2657 = vsel %vm412, %v2656, %v2647
  %v2658 = vsel %vm414, %v2657, %v2650
  %v2659 = vlaneseq
  %v2660 = vshrl.u32 %v2659, 7
  %v2661 = vsub.s32 0, %v2660
  %v2662 = vrot.slane %v2658, %v2661
  %v2663 = vmul.f32 %v2404, %v2662
  %v2664 = vmul.f32 %v2405, %v2662
  %v2665 = vmul.f32 %v2406, %v2662
  %v2666 = vmul.f32 %v2407, %v2662
  %v2667 = vmul.f32 %v2408, %v2662
  %v2668 = vmul.f32 %v2409, %v2662
  %v2669 = vmul.f32 %v2410, %v2662
  %v2670 = vmul.f32 %v2411, %v2662
  %v2671 = vmul.f32 %v2412, %v2662
  %v2672 = vmul.f32 %v2413, %v2662
  %v2673 = vmul.f32 %v2414, %v2662
  %v2674 = vmul.f32 %v2415, %v2662
  %v2675 = vmul.f32 %v2416, %v2662
  %v2676 = vmul.f32 %v2417, %v2662
  %v2677 = vmul.f32 %v2418, %v2662
  %v2678 = vmul.f32 %v2419, %v2662
  %v2680 = vlaneseq
  %v2681 = vshrl.u32 %v2680, 7
  %v2682 = vsub.s32 0, %v2681
  %v2683 = vrot.slane %v2625, %v2682
  %2684 = vrot.lane.b32.xlu0 %v2683, 8
  %v2685 = vpop.permute.xlu0 %2684
  %2687 = vrot.lane.b32.xlu0 %v2683, 16
  %v2688 = vpop.permute.xlu0 %2687
  %2690 = vrot.lane.b32.xlu0 %v2683, 24
  %v2691 = vpop.permute.xlu0 %2690
  %2693 = vrot.lane.b32.xlu0 %v2683, 32
  %v2694 = vpop.permute.xlu0 %2693
  %2696 = vrot.lane.b32.xlu0 %v2683, 40
  %v2697 = vpop.permute.xlu0 %2696
  %2699 = vrot.lane.b32.xlu0 %v2683, 48
  %v2700 = vpop.permute.xlu0 %2699
  %2702 = vrot.lane.b32.xlu0 %v2683, 56
  %v2703 = vpop.permute.xlu0 %2702
  %v2705 = vsel %vm402, %v2625, %v2685
  %v2706 = vsel %vm404, %v2705, %v2688
  %v2707 = vsel %vm406, %v2706, %v2691
  %v2708 = vsel %vm408, %v2707, %v2694
  %v2709 = vsel %vm410, %v2708, %v2697
  %v2710 = vsel %vm412, %v2709, %v2700
  %v2711 = vsel %vm414, %v2710, %v2703
  %v2712 = vlaneseq
  %v2713 = vshrl.u32 %v2712, 7
  %v2714 = vsub.s32 0, %v2713
  %v2715 = vrot.slane %v2711, %v2714
  %v2716 = vadd.f32 %v2663, %v2715
  %v2717 = vadd.f32 %v2664, %v2715
  %v2718 = vadd.f32 %v2665, %v2715
  %v2719 = vadd.f32 %v2666, %v2715
  %v2720 = vadd.f32 %v2667, %v2715
  %v2721 = vadd.f32 %v2668, %v2715
  %v2722 = vadd.f32 %v2669, %v2715
  %v2723 = vadd.f32 %v2670, %v2715
  %v2724 = vadd.f32 %v2671, %v2715
  %v2725 = vadd.f32 %v2672, %v2715
  %v2726 = vadd.f32 %v2673, %v2715
  %v2727 = vadd.f32 %v2674, %v2715
  %v2728 = vadd.f32 %v2675, %v2715
  %v2729 = vadd.f32 %v2676, %v2715
  %v2730 = vadd.f32 %v2677, %v2715
  %v2731 = vadd.f32 %v2678, %v2715
  %v2732 = vmax.f32 %v2716, 0.0
  %v2733 = vmax.f32 %v2717, 0.0
  %v2734 = vmax.f32 %v2718, 0.0
  %v2735 = vmax.f32 %v2719, 0.0
  %v2736 = vmax.f32 %v2720, 0.0
  %v2737 = vmax.f32 %v2721, 0.0
  %v2738 = vmax.f32 %v2722, 0.0
  %v2739 = vmax.f32 %v2723, 0.0
  %v2740 = vmax.f32 %v2724, 0.0
  %v2741 = vmax.f32 %v2725, 0.0
  %v2742 = vmax.f32 %v2726, 0.0
  %v2743 = vmax.f32 %v2727, 0.0
  %v2744 = vmax.f32 %v2728, 0.0
  %v2745 = vmax.f32 %v2729, 0.0
  %v2746 = vmax.f32 %v2730, 0.0
  %v2747 = vmax.f32 %v2731, 0.0
  %v2748 = vpack.c.bf16 %v2733, %v2732
  %v2749 = vpack.c.bf16 %v2735, %v2734
  %v2750 = vpack.c.bf16 %v2737, %v2736
  %v2751 = vpack.c.bf16 %v2739, %v2738
  %v2752 = vpack.c.bf16 %v2741, %v2740
  %v2753 = vpack.c.bf16 %v2743, %v2742
  %v2754 = vpack.c.bf16 %v2745, %v2744
  %v2755 = vpack.c.bf16 %v2747, %v2746
  %v2756 = vld [vmem:[%s3] sm:$0xff]
  %v2757 = vld [vmem:[%s3 + $0x8] sm:$0xff]
  %v2758 = vld [vmem:[%s3 + $0x10] sm:$0xff]
  %v2759 = vld [vmem:[%s3 + $0x18] sm:$0xff]
  %v2760 = vld [vmem:[%s3 + $0x20] sm:$0xff]
  %v2761 = vld [vmem:[%s3 + $0x28] sm:$0xff]
  %v2762 = vld [vmem:[%s3 + $0x30] sm:$0xff]
  %v2763 = vld [vmem:[%s3 + $0x38] sm:$0xff]
  %v2772 = vunpack.c.l.b16 %v2756
  %v2773 = vunpack.c.h.b16 %v2756
  %v2774 = vunpack.c.l.b16 %v2757
  %v2775 = vunpack.c.h.b16 %v2757
  %v2776 = vunpack.c.l.b16 %v2758
  %v2777 = vunpack.c.h.b16 %v2758
  %v2778 = vunpack.c.l.b16 %v2759
  %v2779 = vunpack.c.h.b16 %v2759
  %v2780 = vunpack.c.l.b16 %v2760
  %v2781 = vunpack.c.h.b16 %v2760
  %v2782 = vunpack.c.l.b16 %v2761
  %v2783 = vunpack.c.h.b16 %v2761
  %v2784 = vunpack.c.l.b16 %v2762
  %v2785 = vunpack.c.h.b16 %v2762
  %v2786 = vunpack.c.l.b16 %v2763
  %v2787 = vunpack.c.h.b16 %v2763
  %v2788 = vpack.c.b16 %v2774, %v2772
  %v2789 = vpack.c.b16 %v2775, %v2773
  %v2790 = vpack.c.b16 %v2778, %v2776
  %v2791 = vpack.c.b16 %v2779, %v2777
  %v2792 = vpack.c.b16 %v2782, %v2780
  %v2793 = vpack.c.b16 %v2783, %v2781
  %v2794 = vpack.c.b16 %v2786, %v2784
  %v2795 = vpack.c.b16 %v2787, %v2785
  %v2805 = vsel %vm311, %v2748, 0
  %v2808 = vsel %vm311, %v2749, 0
  %v2811 = vsel %vm311, %v2750, 0
  %v2814 = vsel %vm311, %v2751, 0
  %v2817 = vsel %vm311, %v2752, 0
  %v2820 = vsel %vm311, %v2753, 0
  %v2823 = vsel %vm311, %v2754, 0
  %v2826 = vsel %vm311, %v2755, 0
  %2828 = vmatprep.subr.bf16.mxu0 0
  %2829 = vmatpush1.bf16.msra.mxu0 0
  %2830 = vmatprep.subr.bf16.mxu0 0
  %2831 = vmatpush1.bf16.msra.mxu0 0
  %2832 = vmatprep.subr.bf16.mxu0 0
  %2833 = vmatpush1.bf16.msra.mxu0 0
  %2834 = vmatprep.subr.bf16.mxu0 0
  %2835 = vmatpush1.bf16.msra.mxu0 0
  %2836 = vmatprep.subr.bf16.mxu0 %v2795
  %2837 = vmatpush1.bf16.msra.mxu0 %v2794
  %2838 = vmatprep.subr.bf16.mxu0 %v2793
  %2839 = vmatpush1.bf16.msra.mxu0 %v2792
  %2840 = vmatprep.subr.bf16.mxu0 %v2791
  %2841 = vmatpush1.bf16.msra.mxu0 %v2790
  %2842 = vmatprep.subr.bf16.mxu0 %v2789
  %2843 = vmatpush1.bf16.msra.mxu0 %v2788
  %2844 = vmatprep.subr.bf16.mxu0 0
  %2845 = vmatpush2.bf16.msra.mxu0 0
  %2846 = vmatprep.subr.bf16.mxu0 0
  %2847 = vmatpush2.bf16.msra.mxu0 0
  %2848 = vmatprep.subr.bf16.mxu0 0
  %2849 = vmatpush2.bf16.msra.mxu0 0
  %2850 = vmatprep.subr.bf16.mxu0 0
  %2851 = vmatpush2.bf16.msra.mxu0 0
  %2852 = vmatprep.subr.bf16.mxu0 0
  %2853 = vmatpush2.bf16.msra.mxu0 0
  %2854 = vmatprep.subr.bf16.mxu0 0
  %2855 = vmatpush2.bf16.msra.mxu0 0
  %2856 = vmatprep.subr.bf16.mxu0 0
  %2857 = vmatpush2.bf16.msra.mxu0 0
  %2858 = vmatprep.subr.bf16.mxu0 0
  %2859 = vmatpush2.bf16.msra.mxu0 0
  %2860 = vmatprep.mubr.bf16.mxu0 0
  %2861 = vmatmul.mubr.bf16.gmra.mxu0 %v2805
  %v2862 = vpop.f32.mrf.mxu0
  %v2863 = vadd.f32 0.0, %v2862
  %v2864 = vpop.f32.mrf.mxu0
  %v2865 = vadd.f32 0.0, %v2864
  %v2866 = vpop.f32.mrf.mxu0
  %v2867 = vadd.f32 0.0, %v2866
  %v2868 = vpop.f32.mrf.mxu0
  %v2869 = vadd.f32 0.0, %v2868
  %2870 = vmatprep.mubr.bf16.mxu0 0
  %2871 = vmatmul.mubr.bf16.gmra.mxu0 %v2808
  %v2872 = vpop.f32.mrf.mxu0
  %v2873 = vadd.f32 0.0, %v2872
  %v2874 = vpop.f32.mrf.mxu0
  %v2875 = vadd.f32 0.0, %v2874
  %v2876 = vpop.f32.mrf.mxu0
  %v2877 = vadd.f32 0.0, %v2876
  %v2878 = vpop.f32.mrf.mxu0
  %v2879 = vadd.f32 0.0, %v2878
  %2880 = vmatprep.mubr.bf16.mxu0 0
  %2881 = vmatmul.mubr.bf16.gmra.mxu0 %v2811
  %v2882 = vpop.f32.mrf.mxu0
  %v2883 = vadd.f32 0.0, %v2882
  %v2884 = vpop.f32.mrf.mxu0
  %v2885 = vadd.f32 0.0, %v2884
  %v2886 = vpop.f32.mrf.mxu0
  %v2887 = vadd.f32 0.0, %v2886
  %v2888 = vpop.f32.mrf.mxu0
  %v2889 = vadd.f32 0.0, %v2888
  %2890 = vmatprep.mubr.bf16.mxu0 0
  %2891 = vmatmul.mubr.bf16.gmra.mxu0 %v2814
  %v2892 = vpop.f32.mrf.mxu0
  %v2893 = vadd.f32 0.0, %v2892
  %v2894 = vpop.f32.mrf.mxu0
  %v2895 = vadd.f32 0.0, %v2894
  %v2896 = vpop.f32.mrf.mxu0
  %v2897 = vadd.f32 0.0, %v2896
  %v2898 = vpop.f32.mrf.mxu0
  %v2899 = vadd.f32 0.0, %v2898
  %2900 = vmatprep.mubr.bf16.mxu0 0
  %2901 = vmatmul.mubr.bf16.gmra.mxu0 %v2817
  %v2902 = vpop.f32.mrf.mxu0
  %v2903 = vadd.f32 0.0, %v2902
  %v2904 = vpop.f32.mrf.mxu0
  %v2905 = vadd.f32 0.0, %v2904
  %v2906 = vpop.f32.mrf.mxu0
  %v2907 = vadd.f32 0.0, %v2906
  %v2908 = vpop.f32.mrf.mxu0
  %v2909 = vadd.f32 0.0, %v2908
  %2910 = vmatprep.mubr.bf16.mxu0 0
  %2911 = vmatmul.mubr.bf16.gmra.mxu0 %v2820
  %v2912 = vpop.f32.mrf.mxu0
  %v2913 = vadd.f32 0.0, %v2912
  %v2914 = vpop.f32.mrf.mxu0
  %v2915 = vadd.f32 0.0, %v2914
  %v2916 = vpop.f32.mrf.mxu0
  %v2917 = vadd.f32 0.0, %v2916
  %v2918 = vpop.f32.mrf.mxu0
  %v2919 = vadd.f32 0.0, %v2918
  %2920 = vmatprep.mubr.bf16.mxu0 0
  %2921 = vmatmul.mubr.bf16.gmra.mxu0 %v2823
  %v2922 = vpop.f32.mrf.mxu0
  %v2923 = vadd.f32 0.0, %v2922
  %v2924 = vpop.f32.mrf.mxu0
  %v2925 = vadd.f32 0.0, %v2924
  %v2926 = vpop.f32.mrf.mxu0
  %v2927 = vadd.f32 0.0, %v2926
  %v2928 = vpop.f32.mrf.mxu0
  %v2929 = vadd.f32 0.0, %v2928
  %2930 = vmatprep.mubr.bf16.mxu0 0
  %2931 = vmatmul.mubr.bf16.gmra.mxu0 %v2826
  %v2932 = vpop.f32.mrf.mxu0
  %v2933 = vadd.f32 0.0, %v2932
  %v2934 = vpop.f32.mrf.mxu0
  %v2935 = vadd.f32 0.0, %v2934
  %v2936 = vpop.f32.mrf.mxu0
  %v2937 = vadd.f32 0.0, %v2936
  %v2938 = vpop.f32.mrf.mxu0
  %v2939 = vadd.f32 0.0, %v2938
  %2940 = vdwg.mxu0
  %v2941 = vld [vmem:[%s8] sm:$0x1]
  %v2942 = vld [vmem:[%s9] sm:$0x1]
  %v2943 = vld [vmem:[%s0] sm:$0xff]
  %v2944 = vld [vmem:[%s0 + $0x8] sm:$0xff]
  %v2945 = vld [vmem:[%s0 + $0x10] sm:$0xff]
  %v2946 = vld [vmem:[%s0 + $0x18] sm:$0xff]
  %v2947 = vld [vmem:[%s0 + $0x20] sm:$0xff]
  %v2948 = vld [vmem:[%s0 + $0x28] sm:$0xff]
  %v2949 = vld [vmem:[%s0 + $0x30] sm:$0xff]
  %v2950 = vld [vmem:[%s0 + $0x38] sm:$0xff]
  %v2951 = vld [vmem:[%s0 + $0x40] sm:$0xff]
  %v2952 = vld [vmem:[%s0 + $0x48] sm:$0xff]
  %v2953 = vld [vmem:[%s0 + $0x50] sm:$0xff]
  %v2954 = vld [vmem:[%s0 + $0x58] sm:$0xff]
  %v2955 = vld [vmem:[%s0 + $0x60] sm:$0xff]
  %v2956 = vld [vmem:[%s0 + $0x68] sm:$0xff]
  %v2957 = vld [vmem:[%s0 + $0x70] sm:$0xff]
  %v2958 = vld [vmem:[%s0 + $0x78] sm:$0xff]
  %v2959 = vld [vmem:[%s0 + $0x80] sm:$0xff]
  %v2960 = vld [vmem:[%s0 + $0x88] sm:$0xff]
  %v2961 = vld [vmem:[%s0 + $0x90] sm:$0xff]
  %v2962 = vld [vmem:[%s0 + $0x98] sm:$0xff]
  %v2963 = vld [vmem:[%s0 + $0xa0] sm:$0xff]
  %v2964 = vld [vmem:[%s0 + $0xa8] sm:$0xff]
  %v2965 = vld [vmem:[%s0 + $0xb0] sm:$0xff]
  %v2966 = vld [vmem:[%s0 + $0xb8] sm:$0xff]
  %v2967 = vld [vmem:[%s0 + $0xc0] sm:$0xff]
  %v2968 = vld [vmem:[%s0 + $0xc8] sm:$0xff]
  %v2969 = vld [vmem:[%s0 + $0xd0] sm:$0xff]
  %v2970 = vld [vmem:[%s0 + $0xd8] sm:$0xff]
  %v2971 = vld [vmem:[%s0 + $0xe0] sm:$0xff]
  %v2972 = vld [vmem:[%s0 + $0xe8] sm:$0xff]
  %v2973 = vld [vmem:[%s0 + $0xf0] sm:$0xff]
  %v2974 = vld [vmem:[%s0 + $0xf8] sm:$0xff]
  %v2975 = vadd.f32 %v2863, %v2867
  %v2976 = vadd.f32 %v2975, %v2873
  %v2977 = vadd.f32 %v2976, %v2877
  %v2978 = vadd.f32 %v2977, %v2883
  %v2979 = vadd.f32 %v2978, %v2887
  %v2980 = vadd.f32 %v2979, %v2893
  %v2981 = vadd.f32 %v2980, %v2897
  %v2982 = vadd.f32 %v2981, %v2903
  %v2983 = vadd.f32 %v2982, %v2907
  %v2984 = vadd.f32 %v2983, %v2913
  %v2985 = vadd.f32 %v2984, %v2917
  %v2986 = vadd.f32 %v2985, %v2923
  %v2987 = vadd.f32 %v2986, %v2927
  %v2988 = vadd.f32 %v2987, %v2933
  %v2989 = vadd.f32 %v2988, %v2937
  %v2990 = vrot.slane %v2989, 4
  %v2991 = vadd.f32 %v2989, %v2990
  %v2992 = vrot.slane %v2991, 2
  %v2993 = vadd.f32 %v2991, %v2992
  %v2994 = vrot.slane %v2993, 1
  %v2995 = vadd.f32 %v2993, %v2994
  %v2996 = vadd.f32 %v2865, %v2869
  %v2997 = vadd.f32 %v2996, %v2875
  %v2998 = vadd.f32 %v2997, %v2879
  %v2999 = vadd.f32 %v2998, %v2885
  %v3000 = vadd.f32 %v2999, %v2889
  %v3001 = vadd.f32 %v3000, %v2895
  %v3002 = vadd.f32 %v3001, %v2899
  %v3003 = vadd.f32 %v3002, %v2905
  %v3004 = vadd.f32 %v3003, %v2909
  %v3005 = vadd.f32 %v3004, %v2915
  %v3006 = vadd.f32 %v3005, %v2919
  %v3007 = vadd.f32 %v3006, %v2925
  %v3008 = vadd.f32 %v3007, %v2929
  %v3009 = vadd.f32 %v3008, %v2935
  %v3010 = vadd.f32 %v3009, %v2939
  %v3011 = vrot.slane %v3010, 4
  %v3012 = vadd.f32 %v3010, %v3011
  %v3013 = vrot.slane %v3012, 2
  %v3014 = vadd.f32 %v3012, %v3013
  %v3015 = vrot.slane %v3014, 1
  %v3016 = vadd.f32 %v3014, %v3015
  %3018 = vrot.lane.b32.xlu0 %v2995, 96
  %v3019 = vpop.permute.xlu0 %3018
  %v3021 = vadd.f32 %v2995, %v3019
  %3022 = vrot.lane.b32.xlu0 %v2995, 64
  %v3023 = vpop.permute.xlu0 %3022
  %v3025 = vadd.f32 %v3021, %v3023
  %3026 = vrot.lane.b32.xlu0 %v2995, 32
  %v3027 = vpop.permute.xlu0 %3026
  %v3029 = vadd.f32 %v3025, %v3027
  %v3030 = vadd.f32 %v3029, %v3016
  %3032 = vrot.lane.b32.xlu0 %v3016, 96
  %v3033 = vpop.permute.xlu0 %3032
  %v3035 = vadd.f32 %v3030, %v3033
  %3036 = vrot.lane.b32.xlu0 %v3016, 64
  %v3037 = vpop.permute.xlu0 %3036
  %v3039 = vadd.f32 %v3035, %v3037
  %3040 = vrot.lane.b32.xlu0 %v3016, 32
  %v3041 = vpop.permute.xlu0 %3040
  %v3043 = vadd.f32 %v3039, %v3041
  %v3044 = vmul.f32 %v3043, %v378
  %3046 = vrot.lane.b32.xlu0 %v3044, 32
  %v3047 = vpop.permute.xlu0 %3046
  %3049 = vrot.lane.b32.xlu0 %v3044, 64
  %v3050 = vpop.permute.xlu0 %3049
  %3052 = vrot.lane.b32.xlu0 %v3044, 96
  %v3053 = vpop.permute.xlu0 %3052
  %v3055 = vsel %vm408, %v3044, %v3047
  %v3056 = vsel %vm311, %v3055, %v3050
  %vm3057 = vcmask 785408
  %v3058 = vsel %vm3057, %v3056, %v3053
  %v3059 = vlaneseq
  %v3060 = vshrl.u32 %v3059, 7
  %v3061 = vsub.s32 0, %v3060
  %v3062 = vrot.slane %v3058, %v3061
  %v3063 = vsub.f32 %v2863, %v3062
  %v3064 = vsub.f32 %v2865, %v3062
  %v3065 = vsub.f32 %v2867, %v3062
  %v3066 = vsub.f32 %v2869, %v3062
  %v3067 = vsub.f32 %v2873, %v3062
  %v3068 = vsub.f32 %v2875, %v3062
  %v3069 = vsub.f32 %v2877, %v3062
  %v3070 = vsub.f32 %v2879, %v3062
  %v3071 = vsub.f32 %v2883, %v3062
  %v3072 = vsub.f32 %v2885, %v3062
  %v3073 = vsub.f32 %v2887, %v3062
  %v3074 = vsub.f32 %v2889, %v3062
  %v3075 = vsub.f32 %v2893, %v3062
  %v3076 = vsub.f32 %v2895, %v3062
  %v3077 = vsub.f32 %v2897, %v3062
  %v3078 = vsub.f32 %v2899, %v3062
  %v3079 = vsub.f32 %v2903, %v3062
  %v3080 = vsub.f32 %v2905, %v3062
  %v3081 = vsub.f32 %v2907, %v3062
  %v3082 = vsub.f32 %v2909, %v3062
  %v3083 = vsub.f32 %v2913, %v3062
  %v3084 = vsub.f32 %v2915, %v3062
  %v3085 = vsub.f32 %v2917, %v3062
  %v3086 = vsub.f32 %v2919, %v3062
  %v3087 = vsub.f32 %v2923, %v3062
  %v3088 = vsub.f32 %v2925, %v3062
  %v3089 = vsub.f32 %v2927, %v3062
  %v3090 = vsub.f32 %v2929, %v3062
  %v3091 = vsub.f32 %v2933, %v3062
  %v3092 = vsub.f32 %v2935, %v3062
  %v3093 = vsub.f32 %v2937, %v3062
  %v3094 = vsub.f32 %v2939, %v3062
  %v3095 = vmul.f32 %v3063, %v3063
  %v3096 = vmul.f32 %v3064, %v3064
  %v3097 = vmul.f32 %v3065, %v3065
  %v3098 = vmul.f32 %v3066, %v3066
  %v3099 = vmul.f32 %v3067, %v3067
  %v3100 = vmul.f32 %v3068, %v3068
  %v3101 = vmul.f32 %v3069, %v3069
  %v3102 = vmul.f32 %v3070, %v3070
  %v3103 = vmul.f32 %v3071, %v3071
  %v3104 = vmul.f32 %v3072, %v3072
  %v3105 = vmul.f32 %v3073, %v3073
  %v3106 = vmul.f32 %v3074, %v3074
  %v3107 = vmul.f32 %v3075, %v3075
  %v3108 = vmul.f32 %v3076, %v3076
  %v3109 = vmul.f32 %v3077, %v3077
  %v3110 = vmul.f32 %v3078, %v3078
  %v3111 = vmul.f32 %v3079, %v3079
  %v3112 = vmul.f32 %v3080, %v3080
  %v3113 = vmul.f32 %v3081, %v3081
  %v3114 = vmul.f32 %v3082, %v3082
  %v3115 = vmul.f32 %v3083, %v3083
  %v3116 = vmul.f32 %v3084, %v3084
  %v3117 = vmul.f32 %v3085, %v3085
  %v3118 = vmul.f32 %v3086, %v3086
  %v3119 = vmul.f32 %v3087, %v3087
  %v3120 = vmul.f32 %v3088, %v3088
  %v3121 = vmul.f32 %v3089, %v3089
  %v3122 = vmul.f32 %v3090, %v3090
  %v3123 = vmul.f32 %v3091, %v3091
  %v3124 = vmul.f32 %v3092, %v3092
  %v3125 = vmul.f32 %v3093, %v3093
  %v3126 = vmul.f32 %v3094, %v3094
  %v3127 = vadd.f32 %v3095, %v3097
  %v3128 = vadd.f32 %v3127, %v3099
  %v3129 = vadd.f32 %v3128, %v3101
  %v3130 = vadd.f32 %v3129, %v3103
  %v3131 = vadd.f32 %v3130, %v3105
  %v3132 = vadd.f32 %v3131, %v3107
  %v3133 = vadd.f32 %v3132, %v3109
  %v3134 = vadd.f32 %v3133, %v3111
  %v3135 = vadd.f32 %v3134, %v3113
  %v3136 = vadd.f32 %v3135, %v3115
  %v3137 = vadd.f32 %v3136, %v3117
  %v3138 = vadd.f32 %v3137, %v3119
  %v3139 = vadd.f32 %v3138, %v3121
  %v3140 = vadd.f32 %v3139, %v3123
  %v3141 = vadd.f32 %v3140, %v3125
  %v3142 = vrot.slane %v3141, 4
  %v3143 = vadd.f32 %v3141, %v3142
  %v3144 = vrot.slane %v3143, 2
  %v3145 = vadd.f32 %v3143, %v3144
  %v3146 = vrot.slane %v3145, 1
  %v3147 = vadd.f32 %v3145, %v3146
  %v3148 = vadd.f32 %v3096, %v3098
  %v3149 = vadd.f32 %v3148, %v3100
  %v3150 = vadd.f32 %v3149, %v3102
  %v3151 = vadd.f32 %v3150, %v3104
  %v3152 = vadd.f32 %v3151, %v3106
  %v3153 = vadd.f32 %v3152, %v3108
  %v3154 = vadd.f32 %v3153, %v3110
  %v3155 = vadd.f32 %v3154, %v3112
  %v3156 = vadd.f32 %v3155, %v3114
  %v3157 = vadd.f32 %v3156, %v3116
  %v3158 = vadd.f32 %v3157, %v3118
  %v3159 = vadd.f32 %v3158, %v3120
  %v3160 = vadd.f32 %v3159, %v3122
  %v3161 = vadd.f32 %v3160, %v3124
  %v3162 = vadd.f32 %v3161, %v3126
  %v3163 = vrot.slane %v3162, 4
  %v3164 = vadd.f32 %v3162, %v3163
  %v3165 = vrot.slane %v3164, 2
  %v3166 = vadd.f32 %v3164, %v3165
  %v3167 = vrot.slane %v3166, 1
  %v3168 = vadd.f32 %v3166, %v3167
  %3170 = vrot.lane.b32.xlu0 %v3147, 96
  %v3171 = vpop.permute.xlu0 %3170
  %v3173 = vadd.f32 %v3147, %v3171
  %3174 = vrot.lane.b32.xlu0 %v3147, 64
  %v3175 = vpop.permute.xlu0 %3174
  %v3177 = vadd.f32 %v3173, %v3175
  %3178 = vrot.lane.b32.xlu0 %v3147, 32
  %v3179 = vpop.permute.xlu0 %3178
  %v3181 = vadd.f32 %v3177, %v3179
  %v3182 = vadd.f32 %v3181, %v3168
  %3184 = vrot.lane.b32.xlu0 %v3168, 96
  %v3185 = vpop.permute.xlu0 %3184
  %v3187 = vadd.f32 %v3182, %v3185
  %3188 = vrot.lane.b32.xlu0 %v3168, 64
  %v3189 = vpop.permute.xlu0 %3188
  %v3191 = vadd.f32 %v3187, %v3189
  %3192 = vrot.lane.b32.xlu0 %v3168, 32
  %v3193 = vpop.permute.xlu0 %3192
  %v3195 = vadd.f32 %v3191, %v3193
  %v3196 = vmul.f32 %v3195, %v378
  %v3197 = vadd.f32 %v3196, 1e-05
  %v3198 = vrsqrt.pop %v3197
  %v3199 = vmul.f32 %v2941, %v3198
  %v3200 = vmul.f32 %v3044, %v3199
  %v3201 = vsub.f32 %v2942, %v3200
  %v3203 = vlaneseq
  %v3204 = vshrl.u32 %v3203, 7
  %v3205 = vsub.s32 0, %v3204
  %v3206 = vrot.slane %v3199, %v3205
  %3207 = vrot.lane.b32.xlu0 %v3206, 32
  %v3208 = vpop.permute.xlu0 %3207
  %3210 = vrot.lane.b32.xlu0 %v3206, 64
  %v3211 = vpop.permute.xlu0 %3210
  %3213 = vrot.lane.b32.xlu0 %v3206, 96
  %v3214 = vpop.permute.xlu0 %3213
  %v3216 = vsel %vm408, %v3199, %v3208
  %v3217 = vsel %vm311, %v3216, %v3211
  %v3218 = vsel %vm3057, %v3217, %v3214
  %v3219 = vlaneseq
  %v3220 = vshrl.u32 %v3219, 7
  %v3221 = vsub.s32 0, %v3220
  %v3222 = vrot.slane %v3218, %v3221
  %v3223 = vmul.f32 %v2863, %v3222
  %v3224 = vmul.f32 %v2865, %v3222
  %v3225 = vmul.f32 %v2867, %v3222
  %v3226 = vmul.f32 %v2869, %v3222
  %v3227 = vmul.f32 %v2873, %v3222
  %v3228 = vmul.f32 %v2875, %v3222
  %v3229 = vmul.f32 %v2877, %v3222
  %v3230 = vmul.f32 %v2879, %v3222
  %v3231 = vmul.f32 %v2883, %v3222
  %v3232 = vmul.f32 %v2885, %v3222
  %v3233 = vmul.f32 %v2887, %v3222
  %v3234 = vmul.f32 %v2889, %v3222
  %v3235 = vmul.f32 %v2893, %v3222
  %v3236 = vmul.f32 %v2895, %v3222
  %v3237 = vmul.f32 %v2897, %v3222
  %v3238 = vmul.f32 %v2899, %v3222
  %v3239 = vmul.f32 %v2903, %v3222
  %v3240 = vmul.f32 %v2905, %v3222
  %v3241 = vmul.f32 %v2907, %v3222
  %v3242 = vmul.f32 %v2909, %v3222
  %v3243 = vmul.f32 %v2913, %v3222
  %v3244 = vmul.f32 %v2915, %v3222
  %v3245 = vmul.f32 %v2917, %v3222
  %v3246 = vmul.f32 %v2919, %v3222
  %v3247 = vmul.f32 %v2923, %v3222
  %v3248 = vmul.f32 %v2925, %v3222
  %v3249 = vmul.f32 %v2927, %v3222
  %v3250 = vmul.f32 %v2929, %v3222
  %v3251 = vmul.f32 %v2933, %v3222
  %v3252 = vmul.f32 %v2935, %v3222
  %v3253 = vmul.f32 %v2937, %v3222
  %v3254 = vmul.f32 %v2939, %v3222
  %v3256 = vlaneseq
  %v3257 = vshrl.u32 %v3256, 7
  %v3258 = vsub.s32 0, %v3257
  %v3259 = vrot.slane %v3201, %v3258
  %3260 = vrot.lane.b32.xlu0 %v3259, 32
  %v3261 = vpop.permute.xlu0 %3260
  %3263 = vrot.lane.b32.xlu0 %v3259, 64
  %v3264 = vpop.permute.xlu0 %3263
  %3266 = vrot.lane.b32.xlu0 %v3259, 96
  %v3267 = vpop.permute.xlu0 %3266
  %v3269 = vsel %vm408, %v3201, %v3261
  %v3270 = vsel %vm311, %v3269, %v3264
  %v3271 = vsel %vm3057, %v3270, %v3267
  %v3272 = vlaneseq
  %v3273 = vshrl.u32 %v3272, 7
  %v3274 = vsub.s32 0, %v3273
  %v3275 = vrot.slane %v3271, %v3274
  %v3276 = vadd.f32 %v3223, %v3275
  %v3277 = vadd.f32 %v3224, %v3275
  %v3278 = vadd.f32 %v3225, %v3275
  %v3279 = vadd.f32 %v3226, %v3275
  %v3280 = vadd.f32 %v3227, %v3275
  %v3281 = vadd.f32 %v3228, %v3275
  %v3282 = vadd.f32 %v3229, %v3275
  %v3283 = vadd.f32 %v3230, %v3275
  %v3284 = vadd.f32 %v3231, %v3275
  %v3285 = vadd.f32 %v3232, %v3275
  %v3286 = vadd.f32 %v3233, %v3275
  %v3287 = vadd.f32 %v3234, %v3275
  %v3288 = vadd.f32 %v3235, %v3275
  %v3289 = vadd.f32 %v3236, %v3275
  %v3290 = vadd.f32 %v3237, %v3275
  %v3291 = vadd.f32 %v3238, %v3275
  %v3292 = vadd.f32 %v3239, %v3275
  %v3293 = vadd.f32 %v3240, %v3275
  %v3294 = vadd.f32 %v3241, %v3275
  %v3295 = vadd.f32 %v3242, %v3275
  %v3296 = vadd.f32 %v3243, %v3275
  %v3297 = vadd.f32 %v3244, %v3275
  %v3298 = vadd.f32 %v3245, %v3275
  %v3299 = vadd.f32 %v3246, %v3275
  %v3300 = vadd.f32 %v3247, %v3275
  %v3301 = vadd.f32 %v3248, %v3275
  %v3302 = vadd.f32 %v3249, %v3275
  %v3303 = vadd.f32 %v3250, %v3275
  %v3304 = vadd.f32 %v3251, %v3275
  %v3305 = vadd.f32 %v3252, %v3275
  %v3306 = vadd.f32 %v3253, %v3275
  %v3307 = vadd.f32 %v3254, %v3275
  %v3308 = vadd.f32 %v3276, %v2943
  %v3309 = vadd.f32 %v3277, %v2944
  %v3310 = vadd.f32 %v3278, %v2945
  %v3311 = vadd.f32 %v3279, %v2946
  %v3312 = vadd.f32 %v3280, %v2947
  %v3313 = vadd.f32 %v3281, %v2948
  %v3314 = vadd.f32 %v3282, %v2949
  %v3315 = vadd.f32 %v3283, %v2950
  %v3316 = vadd.f32 %v3284, %v2951
  %v3317 = vadd.f32 %v3285, %v2952
  %v3318 = vadd.f32 %v3286, %v2953
  %v3319 = vadd.f32 %v3287, %v2954
  %v3320 = vadd.f32 %v3288, %v2955
  %v3321 = vadd.f32 %v3289, %v2956
  %v3322 = vadd.f32 %v3290, %v2957
  %v3323 = vadd.f32 %v3291, %v2958
  %v3324 = vadd.f32 %v3292, %v2959
  %v3325 = vadd.f32 %v3293, %v2960
  %v3326 = vadd.f32 %v3294, %v2961
  %v3327 = vadd.f32 %v3295, %v2962
  %v3328 = vadd.f32 %v3296, %v2963
  %v3329 = vadd.f32 %v3297, %v2964
  %v3330 = vadd.f32 %v3298, %v2965
  %v3331 = vadd.f32 %v3299, %v2966
  %v3332 = vadd.f32 %v3300, %v2967
  %v3333 = vadd.f32 %v3301, %v2968
  %v3334 = vadd.f32 %v3302, %v2969
  %v3335 = vadd.f32 %v3303, %v2970
  %v3336 = vadd.f32 %v3304, %v2971
  %v3337 = vadd.f32 %v3305, %v2972
  %v3338 = vadd.f32 %v3306, %v2973
  %v3339 = vadd.f32 %v3307, %v2974
  %v3340 = vmax.f32 %v3308, 0.0
  %v3341 = vmax.f32 %v3309, 0.0
  %v3342 = vmax.f32 %v3310, 0.0
  %v3343 = vmax.f32 %v3311, 0.0
  %v3344 = vmax.f32 %v3312, 0.0
  %v3345 = vmax.f32 %v3313, 0.0
  %v3346 = vmax.f32 %v3314, 0.0
  %v3347 = vmax.f32 %v3315, 0.0
  %v3348 = vmax.f32 %v3316, 0.0
  %v3349 = vmax.f32 %v3317, 0.0
  %v3350 = vmax.f32 %v3318, 0.0
  %v3351 = vmax.f32 %v3319, 0.0
  %v3352 = vmax.f32 %v3320, 0.0
  %v3353 = vmax.f32 %v3321, 0.0
  %v3354 = vmax.f32 %v3322, 0.0
  %v3355 = vmax.f32 %v3323, 0.0
  %v3356 = vmax.f32 %v3324, 0.0
  %v3357 = vmax.f32 %v3325, 0.0
  %v3358 = vmax.f32 %v3326, 0.0
  %v3359 = vmax.f32 %v3327, 0.0
  %v3360 = vmax.f32 %v3328, 0.0
  %v3361 = vmax.f32 %v3329, 0.0
  %v3362 = vmax.f32 %v3330, 0.0
  %v3363 = vmax.f32 %v3331, 0.0
  %v3364 = vmax.f32 %v3332, 0.0
  %v3365 = vmax.f32 %v3333, 0.0
  %v3366 = vmax.f32 %v3334, 0.0
  %v3367 = vmax.f32 %v3335, 0.0
  %v3368 = vmax.f32 %v3336, 0.0
  %v3369 = vmax.f32 %v3337, 0.0
  %v3370 = vmax.f32 %v3338, 0.0
  %v3371 = vmax.f32 %v3339, 0.0
  %3372 = vst [vmem:[%s10] sm:$0xff] %v3340
  %3373 = vst [vmem:[%s10 + $0x8] sm:$0xff] %v3341
  %3374 = vst [vmem:[%s10 + $0x10] sm:$0xff] %v3342
  %3375 = vst [vmem:[%s10 + $0x18] sm:$0xff] %v3343
  %3376 = vst [vmem:[%s10 + $0x20] sm:$0xff] %v3344
  %3377 = vst [vmem:[%s10 + $0x28] sm:$0xff] %v3345
  %3378 = vst [vmem:[%s10 + $0x30] sm:$0xff] %v3346
  %3379 = vst [vmem:[%s10 + $0x38] sm:$0xff] %v3347
  %3380 = vst [vmem:[%s10 + $0x40] sm:$0xff] %v3348
  %3381 = vst [vmem:[%s10 + $0x48] sm:$0xff] %v3349
  %3382 = vst [vmem:[%s10 + $0x50] sm:$0xff] %v3350
  %3383 = vst [vmem:[%s10 + $0x58] sm:$0xff] %v3351
  %3384 = vst [vmem:[%s10 + $0x60] sm:$0xff] %v3352
  %3385 = vst [vmem:[%s10 + $0x68] sm:$0xff] %v3353
  %3386 = vst [vmem:[%s10 + $0x70] sm:$0xff] %v3354
  %3387 = vst [vmem:[%s10 + $0x78] sm:$0xff] %v3355
  %3388 = vst [vmem:[%s10 + $0x80] sm:$0xff] %v3356
  %3389 = vst [vmem:[%s10 + $0x88] sm:$0xff] %v3357
  %3390 = vst [vmem:[%s10 + $0x90] sm:$0xff] %v3358
  %3391 = vst [vmem:[%s10 + $0x98] sm:$0xff] %v3359
  %3392 = vst [vmem:[%s10 + $0xa0] sm:$0xff] %v3360
  %3393 = vst [vmem:[%s10 + $0xa8] sm:$0xff] %v3361
  %3394 = vst [vmem:[%s10 + $0xb0] sm:$0xff] %v3362
  %3395 = vst [vmem:[%s10 + $0xb8] sm:$0xff] %v3363
  %3396 = vst [vmem:[%s10 + $0xc0] sm:$0xff] %v3364
  %3397 = vst [vmem:[%s10 + $0xc8] sm:$0xff] %v3365
  %3398 = vst [vmem:[%s10 + $0xd0] sm:$0xff] %v3366
  %3399 = vst [vmem:[%s10 + $0xd8] sm:$0xff] %v3367
  %3400 = vst [vmem:[%s10 + $0xe0] sm:$0xff] %v3368
  %3401 = vst [vmem:[%s10 + $0xe8] sm:$0xff] %v3369
  %3402 = vst [vmem:[%s10 + $0xf0] sm:$0xff] %v3370
  %3403 = vst [vmem:[%s10 + $0xf8] sm:$0xff] %v3371
  // Predicated region
  $region42: #{bottleneck_forward.1} parent=0 // pred_check
    _
  $region43: #{bottleneck_forward.1} parent=0 // pred_check_branch
    %3405 = sbr.rel (0) target = $region45
  $region44: #{bottleneck_forward.1} parent=0 // pred_region
    _
  $region45: #{bottleneck_forward.1} parent=0 // pred_fallthru
    _
  // Predicated region
  $region46: #{bottleneck_forward.1} parent=0 // pred_check
    _
  $region47: #{bottleneck_forward.1} parent=0 // pred_check_branch
    %3407 = sbr.rel (0) target = $region49
  $region48: #{bottleneck_forward.1} parent=0 // pred_region
    _
  $region49: #{bottleneck_forward.1} parent=0 // pred_fallthru
    _

</llo_original>
